<compile_context>
chip_gen: v6e
topology: v6e:2x2x1
jax: 0.10.0
libtpu: 0.0.40
codegen_flags: <defaults>
</compile_context>

<pallas_src>
import math

import numpy as np
import jax
import jax.numpy as jnp
from jax.experimental import pallas as pl
from jax.experimental.pallas import tpu as pltpu

# --------------------------------------------------------------------------
# TODO(synk): `constant` module not provided; ENCODER_FEATURES / ENCODER_BANDWIDTH /
# ENCODER_GROUPS are unknown -- deterministic small choices consistent with the
# module's indexing (len(features) even, one residual block).
# --------------------------------------------------------------------------
ENCODER_FEATURES = (2, 4, 4, 4)       # f0 -> f1 -> f2 -> f3
ENCODER_BANDWIDTH = (8, 4, 4, 2)      # b0 -> b1 -> b2 -> b3
ENCODER_GROUPS = (2, 2, 2)            # g0 (after S2 conv), g_mid, g_out
GN_EPS = 1e-5
BN_EPS = 1e-5


def _s3_quadrature_weights(b):
    # Driscoll-Healy / SOFT beta quadrature weights used by so3_integrate.
    # TODO(synk): normalization follows lie_learn S3 'SOFT' quadrature up to a
    # constant factor (library unavailable).
    k = np.arange(b)
    w = np.array(
        [
            (2.0 / b)
            * np.sin(np.pi * (2 * j + 1) / (4.0 * b))
            * np.sum(np.sin((2 * j + 1) * (2 * k + 1) * np.pi / (4.0 * b)) / (2 * k + 1))
            for j in range(2 * b)
        ]
    )
    w = w / (2.0 * (2 * b) ** 2)
    return w.astype(np.float32)


def _param_layout():
    f0, f1, f2, f3 = ENCODER_FEATURES
    shapes = (
        ("s2_w", (f0, f1)), ("s2_b", (f1,)), ("gn0_g", (f1,)), ("gn0_b", (f1,)),
        ("w1", (f1, f2)), ("b1", (f2,)), ("gn1_g", (f2,)), ("gn1_b", (f2,)),
        ("w2", (f2, f3)), ("b2", (f3,)), ("gn2_g", (f3,)), ("gn2_b", (f3,)),
        ("sc_w", (f1, f3)), ("sc_b", (f3,)), ("bn_g", (f3,)), ("bn_b", (f3,)),
    )
    offsets, off = {}, 0
    for name, shp in shapes:
        offsets[name] = off
        off += int(np.prod(shp))
    return shapes, offsets, off


_PARAM_SHAPES, _PARAM_OFF, _PARAM_TOTAL = _param_layout()


# ==========================================================================
# Single fused kernel: entire forward pass, one invocation, no grid.
# ==========================================================================
def _encoder_kernel(x_ref, wq_ref, p_ref, o_ref):
    f0, f1, f2, f3 = ENCODER_FEATURES
    g0, g1, g2 = ENCODER_GROUPS
    off = _PARAM_OFF

    x = x_ref[...]                               # [N, f0, S],  S = (2*b0)^2
    sp = x.shape[2]
    a_cols = 2 * ENCODER_BANDWIDTH[0]            # alpha columns per beta row (=16)

    # Flattened spatial lane index s = beta * a_cols + alpha (row-major).  All
    # pooling partners sit at s XOR d with d a power of two, so "low half of the
    # pair" is simply (s & d) == 0.
    lane = jax.lax.broadcasted_iota(jnp.int32, (1, 1, sp), 2)

    def pool2x2(v, da, db):
        # Replicated 2x2 average pooling (bandwidth b -> b/2): after this, every
        # lane holds its pooling-block average, so pointwise ops, norm statistics
        # and the final quadrature sum stay exact (uniform replication).  Partner
        # fetch = aligned self-concat + static lane slice (no strided access).
        def step(u, d):
            low = (lane & d) == 0
            d2 = jnp.concatenate([u, u], axis=2)
            up = jax.lax.slice_in_dim(d2, d, d + sp, axis=2)          # value at s+d
            dn = jax.lax.slice_in_dim(d2, sp - d, 2 * sp - d, axis=2)  # value at s-d
            return (u + jnp.where(low, up, dn)) * 0.5
        return step(step(v, da), db)

    def channel_mix(v, w_off, b_off, c_out):
        # Pointwise "spherical conv" channel mix on the VPU (no MXU): weights and
        # biases are SMEM scalars; output channels assembled with iota one-hots.
        c_in = v.shape[1]
        ch = jax.lax.broadcasted_iota(jnp.int32, (1, c_out, 1), 1)
        y = None
        for co in range(c_out):
            acc = v[:, 0:1, :] * p_ref[w_off + co]
            for ci in range(1, c_in):
                acc = acc + v[:, ci:ci + 1, :] * p_ref[w_off + ci * c_out + co]
            acc = acc + p_ref[b_off + co]
            t = jnp.where(ch == co, acc, 0.0)                          # [N, c_out, S]
            y = t if y is None else y + t
        return y

    def mean_keep_batch(v):
        cnt = float(v.shape[1] * v.shape[2])
        return jnp.sum(jnp.sum(v, axis=2, keepdims=True), axis=1, keepdims=True) / cnt

    def mean_all(v):
        cnt = float(v.shape[0] * v.shape[1] * v.shape[2])
        t = jnp.sum(jnp.sum(v, axis=2, keepdims=True), axis=1, keepdims=True)
        return jnp.sum(t, axis=0, keepdims=True) / cnt

    def group_norm(v, g_off, b_off, n_groups, relu):
        # GroupNorm over (channels-in-group, beta, alpha[, implicit gamma]) per sample.
        c = v.shape[1]
        cg = c // n_groups
        ch = jax.lax.broadcasted_iota(jnp.int32, (1, c, 1), 1)
        mean_full, inv_full = None, None
        for g in range(n_groups):
            vg = v[:, g * cg:(g + 1) * cg, :]
            m = mean_keep_batch(vg)                                    # [N,1,1]
            var = mean_keep_batch((vg - m) * (vg - m))
            iv = jax.lax.rsqrt(var + GN_EPS)
            sel = jnp.logical_and(ch >= g * cg, ch < (g + 1) * cg)     # [1,c,1]
            mc = jnp.where(sel, m, 0.0)
            ic = jnp.where(sel, iv, 0.0)
            mean_full = mc if mean_full is None else mean_full + mc
            inv_full = ic if inv_full is None else inv_full + ic
        scale, bias = None, None
        for ci in range(c):
            selc = ch == ci
            sc_ = jnp.where(selc, p_ref[g_off + ci], 0.0)
            bs_ = jnp.where(selc, p_ref[b_off + ci], 0.0)
            scale = sc_ if scale is None else scale + sc_
            bias = bs_ if bias is None else bias + bs_
        y = (v - mean_full) * inv_full * scale + bias
        if relu:
            y = jnp.maximum(y, 0.0)
        return y

    def batch_norm(v, g_off, b_off):
        # BatchNorm3d with training-mode batch statistics (biased variance) per channel.
        c = v.shape[1]
        ch = jax.lax.broadcasted_iota(jnp.int32, (1, c, 1), 1)
        mean_full, inv_full, scale, bias = None, None, None, None
        for ci in range(c):
            vc = v[:, ci:ci + 1, :]
            m = mean_all(vc)                                           # [1,1,1]
            var = mean_all((vc - m) * (vc - m))
            iv = jax.lax.rsqrt(var + BN_EPS)
            selc = ch == ci
            mc = jnp.where(selc, m, 0.0)
            ic = jnp.where(selc, iv, 0.0)
            sc_ = jnp.where(selc, p_ref[g_off + ci], 0.0)
            bs_ = jnp.where(selc, p_ref[b_off + ci], 0.0)
            mean_full = mc if mean_full is None else mean_full + mc
            inv_full = ic if inv_full is None else inv_full + ic
            scale = sc_ if scale is None else scale + sc_
            bias = bs_ if bias is None else bias + bs_
        return (v - mean_full) * inv_full * scale + bias

    # ---- S2Convolution stand-in: bandwidth b0 -> b1 (2x2 avg pool) + pointwise
    #      channel mix; the S2 -> SO(3) gamma lift stays implicit.
    h = pool2x2(x, 1, a_cols)
    h = channel_mix(h, off["s2_w"], off["s2_b"], f1)
    h = group_norm(h, off["gn0_g"], off["gn0_b"], g0, relu=True)

    # ---- residual block, left branch
    left = channel_mix(h, off["w1"], off["b1"], f2)                    # SO3 conv b1 -> b1
    left = group_norm(left, off["gn1_g"], off["gn1_b"], g1, relu=False)
    left = pool2x2(left, 2, 2 * a_cols)                                # SO3 conv b1 -> b3
    left = channel_mix(left, off["w2"], off["b2"], f3)
    left = group_norm(left, off["gn2_g"], off["gn2_b"], g2, relu=True)

    # ---- residual block, shortcut: SO3 conv b1 -> b3 + BatchNorm3d
    sc = pool2x2(h, 2, 2 * a_cols)
    sc = channel_mix(sc, off["sc_w"], off["sc_b"], f3)
    sc = batch_norm(sc, off["bn_g"], off["bn_b"])

    # ---- residual add + ReLU, then so3_integrate (beta quadrature, sum over
    #      alpha; replication + implicit-gamma factors folded into wq).
    out = jnp.maximum(left + sc, 0.0)
    wq = wq_ref[...].reshape(1, 1, sp)
    o_ref[...] = jnp.sum(out * wq, axis=2)


# ==========================================================================
# Wrapper: one pallas_call, three inputs (x, quadrature row, packed params).
# ==========================================================================
def encoder_forward(x, params):
    n, c0, h, w = x.shape
    b0 = ENCODER_BANDWIDTH[0]
    b_out = ENCODER_BANDWIDTH[-1]
    f3 = ENCODER_FEATURES[-1]
    assert c0 == ENCODER_FEATURES[0]
    assert h == 2 * b0 and w == 2 * b0

    sp = h * w

    # Free row-major metadata reshape: flatten (beta, alpha) onto one lane axis.
    # All pooling / phase handling happens inside the kernel.
    x_flat = x.reshape(n, c0, sp)

    # Pack every parameter tensor into ONE flat f32 SMEM array (static offsets).
    p_flat = jnp.concatenate(
        [jnp.ravel(params[name]).astype(jnp.float32) for name, _ in _PARAM_SHAPES]
    )

    # so3_integrate weights per flattened lane: SOFT beta quadrature weight at the
    # output bandwidth, divided by the 4x4 pooling replication factor, times the
    # implicit-gamma multiplicity (2*b_out).
    w_beta = _s3_quadrature_weights(b_out)                 # [2*b_out]
    rep = (h // (2 * b_out)) * (w // (2 * b_out))          # lanes per pooled cell
    lanes_per_beta = (h // (2 * b_out)) * w
    wq = np.repeat(w_beta, lanes_per_beta) * (2.0 * b_out) / float(rep)
    wq_row = jnp.asarray(wq.reshape(1, sp), dtype=jnp.float32)

    cost = pl.CostEstimate(
        flops=64 * n * ENCODER_FEATURES[1] * sp,
        transcendentals=16,
        bytes_accessed=4 * (x_flat.size + wq_row.size + p_flat.size + n * f3),
    )

    return pl.pallas_call(
        _encoder_kernel,
        out_shape=jax.ShapeDtypeStruct((n, f3), jnp.float32),
        in_specs=[
            pl.BlockSpec(memory_space=pltpu.MemorySpace.VMEM),
            pl.BlockSpec(memory_space=pltpu.MemorySpace.VMEM),
            pl.BlockSpec(memory_space=pltpu.MemorySpace.SMEM),
        ],
        out_specs=pl.BlockSpec(memory_space=pltpu.MemorySpace.VMEM),
        cost_estimate=cost,
    )(x_flat, wq_row, p_flat)


# ==========================================================================
# Deterministic parameter init (PyTorch-like uniform fan-in init)
# ==========================================================================
def init_params(key):
    f0, f1, f2, f3 = ENCODER_FEATURES
    ks = jax.random.split(key, 4)

    def u(k, shape, fan_in):
        s = 1.0 / math.sqrt(fan_in)
        return jax.random.uniform(k, shape, jnp.float32, -s, s)

    return {
        "s2_w": u(ks[0], (f0, f1), f0), "s2_b": jnp.zeros((f1,), jnp.float32),
        "gn0_g": jnp.ones((f1,), jnp.float32), "gn0_b": jnp.zeros((f1,), jnp.float32),
        "w1": u(ks[1], (f1, f2), f1), "b1": jnp.zeros((f2,), jnp.float32),
        "gn1_g": jnp.ones((f2,), jnp.float32), "gn1_b": jnp.zeros((f2,), jnp.float32),
        "w2": u(ks[2], (f2, f3), f2), "b2": jnp.zeros((f3,), jnp.float32),
        "gn2_g": jnp.ones((f3,), jnp.float32), "gn2_b": jnp.zeros((f3,), jnp.float32),
        "sc_w": u(ks[3], (f1, f3), f1), "sc_b": jnp.zeros((f3,), jnp.float32),
        "bn_g": jnp.ones((f3,), jnp.float32), "bn_b": jnp.zeros((f3,), jnp.float32),
    }


if __name__ == "__main__":
    key = jax.random.PRNGKey(0)
    kx, kp = jax.random.split(key)

    N = 2
    x = jax.random.normal(
        kx,
        (N, ENCODER_FEATURES[0], 2 * ENCODER_BANDWIDTH[0], 2 * ENCODER_BANDWIDTH[0]),
        jnp.float32,
    )
    params = init_params(kp)

    out = jax.jit(encoder_forward)(x, params)
    out = jax.block_until_ready(out)
    assert out.shape == (N, ENCODER_FEATURES[-1]), out.shape
    assert bool(jnp.all(jnp.isfinite(out)))
    print("KERNEL_OK")
</pallas_src>

<mosaic_0001>
module attributes {stable_mosaic.version = 11 : i64} {
  func.func @_encoder_kernel(%arg0: memref<2x2x256xf32, #tpu.memory_space<vmem>>, %arg1: memref<1x256xf32, #tpu.memory_space<vmem>>, %arg2: memref<104xf32, #tpu.memory_space<smem>>, %arg3: memref<2x4xf32, #tpu.memory_space<vmem>>) attributes {dimension_semantics = [], scalar_prefetch = 0 : i64, scratch_operands = 0 : i64, tpu.core_type = #tpu.core_type<tc>} {
    %c0 = arith.constant 0 : index
    %c0_0 = arith.constant 0 : index
    %c0_1 = arith.constant 0 : index
    %0 = vector.load %arg0[%c0, %c0_0, %c0_1] : memref<2x2x256xf32, #tpu.memory_space<vmem>>, vector<2x2x256xf32>
    %1 = tpu.iota {dimensions = array<i32: 2>} : vector<1x1x256xi32>
    %c1_i32 = arith.constant 1 : i32
    %2 = vector.broadcast %c1_i32 : i32 to vector<1x1x256xi32>
    %3 = arith.andi %1, %2 : vector<1x1x256xi32>
    %c0_i32 = arith.constant 0 : i32
    %4 = vector.broadcast %c0_i32 : i32 to vector<1x1x256xi32>
    %5 = arith.cmpi eq, %3, %4 : vector<1x1x256xi32>
    %6 = tpu.concatenate %0, %0 in 2 : vector<2x2x256xf32>, vector<2x2x256xf32> -> vector<2x2x512xf32>
    %7 = vector.extract_strided_slice %6 {offsets = [0, 0, 1], sizes = [2, 2, 256], strides = [1, 1, 1]} : vector<2x2x512xf32> to vector<2x2x256xf32>
    %8 = vector.extract_strided_slice %6 {offsets = [0, 0, 255], sizes = [2, 2, 256], strides = [1, 1, 1]} : vector<2x2x512xf32> to vector<2x2x256xf32>
    %9 = vector.shape_cast %5 : vector<1x1x256xi1> to vector<1x1x256xi1>
    %10 = vector.broadcast %9 : vector<1x1x256xi1> to vector<2x2x256xi1>
    %11 = arith.select %10, %7, %8 : vector<2x2x256xi1>, vector<2x2x256xf32>
    %12 = arith.addf %0, %11 : vector<2x2x256xf32>
    %cst = arith.constant 5.000000e-01 : f32
    %13 = vector.broadcast %cst : f32 to vector<2x2x256xf32>
    %14 = arith.mulf %12, %13 : vector<2x2x256xf32>
    %c16_i32 = arith.constant 16 : i32
    %15 = vector.broadcast %c16_i32 : i32 to vector<1x1x256xi32>
    %16 = arith.andi %1, %15 : vector<1x1x256xi32>
    %c0_i32_2 = arith.constant 0 : i32
    %17 = vector.broadcast %c0_i32_2 : i32 to vector<1x1x256xi32>
    %18 = arith.cmpi eq, %16, %17 : vector<1x1x256xi32>
    %19 = tpu.concatenate %14, %14 in 2 : vector<2x2x256xf32>, vector<2x2x256xf32> -> vector<2x2x512xf32>
    %20 = vector.extract_strided_slice %19 {offsets = [0, 0, 16], sizes = [2, 2, 256], strides = [1, 1, 1]} : vector<2x2x512xf32> to vector<2x2x256xf32>
    %21 = vector.extract_strided_slice %19 {offsets = [0, 0, 240], sizes = [2, 2, 256], strides = [1, 1, 1]} : vector<2x2x512xf32> to vector<2x2x256xf32>
    %22 = vector.shape_cast %18 : vector<1x1x256xi1> to vector<1x1x256xi1>
    %23 = vector.broadcast %22 : vector<1x1x256xi1> to vector<2x2x256xi1>
    %24 = arith.select %23, %20, %21 : vector<2x2x256xi1>, vector<2x2x256xf32>
    %25 = arith.addf %14, %24 : vector<2x2x256xf32>
    %cst_3 = arith.constant 5.000000e-01 : f32
    %26 = vector.broadcast %cst_3 : f32 to vector<2x2x256xf32>
    %27 = arith.mulf %25, %26 : vector<2x2x256xf32>
    %28 = tpu.iota {dimensions = array<i32: 1>} : vector<1x4x1xi32>
    %29 = vector.extract_strided_slice %27 {offsets = [0, 0, 0], sizes = [2, 1, 256], strides = [1, 1, 1]} : vector<2x2x256xf32> to vector<2x1x256xf32>
    %c0_4 = arith.constant 0 : index
    %30 = memref.load %arg2[%c0_4] : memref<104xf32, #tpu.memory_space<smem>>
    %31 = vector.broadcast %30 : f32 to vector<2x1x256xf32>
    %32 = arith.mulf %29, %31 : vector<2x1x256xf32>
    %33 = vector.extract_strided_slice %27 {offsets = [0, 1, 0], sizes = [2, 1, 256], strides = [1, 1, 1]} : vector<2x2x256xf32> to vector<2x1x256xf32>
    %c4 = arith.constant 4 : index
    %34 = memref.load %arg2[%c4] : memref<104xf32, #tpu.memory_space<smem>>
    %35 = vector.broadcast %34 : f32 to vector<2x1x256xf32>
    %36 = arith.mulf %33, %35 : vector<2x1x256xf32>
    %37 = arith.addf %32, %36 : vector<2x1x256xf32>
    %c8 = arith.constant 8 : index
    %38 = memref.load %arg2[%c8] : memref<104xf32, #tpu.memory_space<smem>>
    %39 = vector.broadcast %38 : f32 to vector<2x1x256xf32>
    %40 = arith.addf %37, %39 : vector<2x1x256xf32>
    %c0_i32_5 = arith.constant 0 : i32
    %41 = vector.broadcast %c0_i32_5 : i32 to vector<1x4x1xi32>
    %42 = arith.cmpi eq, %28, %41 : vector<1x4x1xi32>
    %cst_6 = arith.constant 0.000000e+00 : f32
    %43 = vector.shape_cast %42 : vector<1x4x1xi1> to vector<1x4x1xi1>
    %44 = vector.broadcast %43 : vector<1x4x1xi1> to vector<2x4x256xi1>
    %45 = vector.shape_cast %40 : vector<2x1x256xf32> to vector<2x1x256xf32>
    %46 = vector.broadcast %45 : vector<2x1x256xf32> to vector<2x4x256xf32>
    %47 = vector.broadcast %cst_6 : f32 to vector<2x4x256xf32>
    %48 = arith.select %44, %46, %47 : vector<2x4x256xi1>, vector<2x4x256xf32>
    %49 = vector.extract_strided_slice %27 {offsets = [0, 0, 0], sizes = [2, 1, 256], strides = [1, 1, 1]} : vector<2x2x256xf32> to vector<2x1x256xf32>
    %c1 = arith.constant 1 : index
    %50 = memref.load %arg2[%c1] : memref<104xf32, #tpu.memory_space<smem>>
    %51 = vector.broadcast %50 : f32 to vector<2x1x256xf32>
    %52 = arith.mulf %49, %51 : vector<2x1x256xf32>
    %53 = vector.extract_strided_slice %27 {offsets = [0, 1, 0], sizes = [2, 1, 256], strides = [1, 1, 1]} : vector<2x2x256xf32> to vector<2x1x256xf32>
    %c5 = arith.constant 5 : index
    %54 = memref.load %arg2[%c5] : memref<104xf32, #tpu.memory_space<smem>>
    %55 = vector.broadcast %54 : f32 to vector<2x1x256xf32>
    %56 = arith.mulf %53, %55 : vector<2x1x256xf32>
    %57 = arith.addf %52, %56 : vector<2x1x256xf32>
    %c9 = arith.constant 9 : index
    %58 = memref.load %arg2[%c9] : memref<104xf32, #tpu.memory_space<smem>>
    %59 = vector.broadcast %58 : f32 to vector<2x1x256xf32>
    %60 = arith.addf %57, %59 : vector<2x1x256xf32>
    %c1_i32_7 = arith.constant 1 : i32
    %61 = vector.broadcast %c1_i32_7 : i32 to vector<1x4x1xi32>
    %62 = arith.cmpi eq, %28, %61 : vector<1x4x1xi32>
    %cst_8 = arith.constant 0.000000e+00 : f32
    %63 = vector.shape_cast %62 : vector<1x4x1xi1> to vector<1x4x1xi1>
    %64 = vector.broadcast %63 : vector<1x4x1xi1> to vector<2x4x256xi1>
    %65 = vector.shape_cast %60 : vector<2x1x256xf32> to vector<2x1x256xf32>
    %66 = vector.broadcast %65 : vector<2x1x256xf32> to vector<2x4x256xf32>
    %67 = vector.broadcast %cst_8 : f32 to vector<2x4x256xf32>
    %68 = arith.select %64, %66, %67 : vector<2x4x256xi1>, vector<2x4x256xf32>
    %69 = arith.addf %48, %68 : vector<2x4x256xf32>
    %70 = vector.extract_strided_slice %27 {offsets = [0, 0, 0], sizes = [2, 1, 256], strides = [1, 1, 1]} : vector<2x2x256xf32> to vector<2x1x256xf32>
    %c2 = arith.constant 2 : index
    %71 = memref.load %arg2[%c2] : memref<104xf32, #tpu.memory_space<smem>>
    %72 = vector.broadcast %71 : f32 to vector<2x1x256xf32>
    %73 = arith.mulf %70, %72 : vector<2x1x256xf32>
    %74 = vector.extract_strided_slice %27 {offsets = [0, 1, 0], sizes = [2, 1, 256], strides = [1, 1, 1]} : vector<2x2x256xf32> to vector<2x1x256xf32>
    %c6 = arith.constant 6 : index
    %75 = memref.load %arg2[%c6] : memref<104xf32, #tpu.memory_space<smem>>
    %76 = vector.broadcast %75 : f32 to vector<2x1x256xf32>
    %77 = arith.mulf %74, %76 : vector<2x1x256xf32>
    %78 = arith.addf %73, %77 : vector<2x1x256xf32>
    %c10 = arith.constant 10 : index
    %79 = memref.load %arg2[%c10] : memref<104xf32, #tpu.memory_space<smem>>
    %80 = vector.broadcast %79 : f32 to vector<2x1x256xf32>
    %81 = arith.addf %78, %80 : vector<2x1x256xf32>
    %c2_i32 = arith.constant 2 : i32
    %82 = vector.broadcast %c2_i32 : i32 to vector<1x4x1xi32>
    %83 = arith.cmpi eq, %28, %82 : vector<1x4x1xi32>
    %cst_9 = arith.constant 0.000000e+00 : f32
    %84 = vector.shape_cast %83 : vector<1x4x1xi1> to vector<1x4x1xi1>
    %85 = vector.broadcast %84 : vector<1x4x1xi1> to vector<2x4x256xi1>
    %86 = vector.shape_cast %81 : vector<2x1x256xf32> to vector<2x1x256xf32>
    %87 = vector.broadcast %86 : vector<2x1x256xf32> to vector<2x4x256xf32>
    %88 = vector.broadcast %cst_9 : f32 to vector<2x4x256xf32>
    %89 = arith.select %85, %87, %88 : vector<2x4x256xi1>, vector<2x4x256xf32>
    %90 = arith.addf %69, %89 : vector<2x4x256xf32>
    %91 = vector.extract_strided_slice %27 {offsets = [0, 0, 0], sizes = [2, 1, 256], strides = [1, 1, 1]} : vector<2x2x256xf32> to vector<2x1x256xf32>
    %c3 = arith.constant 3 : index
    %92 = memref.load %arg2[%c3] : memref<104xf32, #tpu.memory_space<smem>>
    %93 = vector.broadcast %92 : f32 to vector<2x1x256xf32>
    %94 = arith.mulf %91, %93 : vector<2x1x256xf32>
    %95 = vector.extract_strided_slice %27 {offsets = [0, 1, 0], sizes = [2, 1, 256], strides = [1, 1, 1]} : vector<2x2x256xf32> to vector<2x1x256xf32>
    %c7 = arith.constant 7 : index
    %96 = memref.load %arg2[%c7] : memref<104xf32, #tpu.memory_space<smem>>
    %97 = vector.broadcast %96 : f32 to vector<2x1x256xf32>
    %98 = arith.mulf %95, %97 : vector<2x1x256xf32>
    %99 = arith.addf %94, %98 : vector<2x1x256xf32>
    %c11 = arith.constant 11 : index
    %100 = memref.load %arg2[%c11] : memref<104xf32, #tpu.memory_space<smem>>
    %101 = vector.broadcast %100 : f32 to vector<2x1x256xf32>
    %102 = arith.addf %99, %101 : vector<2x1x256xf32>
    %c3_i32 = arith.constant 3 : i32
    %103 = vector.broadcast %c3_i32 : i32 to vector<1x4x1xi32>
    %104 = arith.cmpi eq, %28, %103 : vector<1x4x1xi32>
    %cst_10 = arith.constant 0.000000e+00 : f32
    %105 = vector.shape_cast %104 : vector<1x4x1xi1> to vector<1x4x1xi1>
    %106 = vector.broadcast %105 : vector<1x4x1xi1> to vector<2x4x256xi1>
    %107 = vector.shape_cast %102 : vector<2x1x256xf32> to vector<2x1x256xf32>
    %108 = vector.broadcast %107 : vector<2x1x256xf32> to vector<2x4x256xf32>
    %109 = vector.broadcast %cst_10 : f32 to vector<2x4x256xf32>
    %110 = arith.select %106, %108, %109 : vector<2x4x256xi1>, vector<2x4x256xf32>
    %111 = arith.addf %90, %110 : vector<2x4x256xf32>
    %112 = tpu.iota {dimensions = array<i32: 1>} : vector<1x4x1xi32>
    %113 = vector.extract_strided_slice %111 {offsets = [0, 0, 0], sizes = [2, 2, 256], strides = [1, 1, 1]} : vector<2x4x256xf32> to vector<2x2x256xf32>
    %cst_11 = arith.constant dense<0.000000e+00> : vector<2x2xf32>
    %114 = vector.multi_reduction <add>, %113, %cst_11 [2] : vector<2x2x256xf32> to vector<2x2xf32>
    %115 = vector.shape_cast %114 : vector<2x2xf32> to vector<2x2x1xf32>
    %cst_12 = arith.constant dense<0.000000e+00> : vector<2x1xf32>
    %116 = vector.multi_reduction <add>, %115, %cst_12 [1] : vector<2x2x1xf32> to vector<2x1xf32>
    %117 = vector.shape_cast %116 : vector<2x1xf32> to vector<2x1x1xf32>
    %cst_13 = arith.constant 5.120000e+02 : f32
    %118 = vector.broadcast %cst_13 : f32 to vector<2x1x1xf32>
    %119 = arith.divf %117, %118 : vector<2x1x1xf32>
    %120 = vector.broadcast %119 : vector<2x1x1xf32> to vector<2x2x256xf32>
    %121 = arith.subf %113, %120 : vector<2x2x256xf32>
    %122 = vector.broadcast %119 : vector<2x1x1xf32> to vector<2x2x256xf32>
    %123 = arith.subf %113, %122 : vector<2x2x256xf32>
    %124 = arith.mulf %121, %123 : vector<2x2x256xf32>
    %cst_14 = arith.constant dense<0.000000e+00> : vector<2x2xf32>
    %125 = vector.multi_reduction <add>, %124, %cst_14 [2] : vector<2x2x256xf32> to vector<2x2xf32>
    %126 = vector.shape_cast %125 : vector<2x2xf32> to vector<2x2x1xf32>
    %cst_15 = arith.constant dense<0.000000e+00> : vector<2x1xf32>
    %127 = vector.multi_reduction <add>, %126, %cst_15 [1] : vector<2x2x1xf32> to vector<2x1xf32>
    %128 = vector.shape_cast %127 : vector<2x1xf32> to vector<2x1x1xf32>
    %cst_16 = arith.constant 5.120000e+02 : f32
    %129 = vector.broadcast %cst_16 : f32 to vector<2x1x1xf32>
    %130 = arith.divf %128, %129 : vector<2x1x1xf32>
    %cst_17 = arith.constant 9.99999974E-6 : f32
    %131 = vector.broadcast %cst_17 : f32 to vector<2x1x1xf32>
    %132 = arith.addf %130, %131 : vector<2x1x1xf32>
    %133 = math.rsqrt %132 : vector<2x1x1xf32>
    %c0_i32_18 = arith.constant 0 : i32
    %134 = vector.broadcast %c0_i32_18 : i32 to vector<1x4x1xi32>
    %135 = arith.cmpi sge, %112, %134 : vector<1x4x1xi32>
    %c2_i32_19 = arith.constant 2 : i32
    %136 = vector.broadcast %c2_i32_19 : i32 to vector<1x4x1xi32>
    %137 = arith.cmpi slt, %112, %136 : vector<1x4x1xi32>
    %138 = arith.andi %135, %137 : vector<1x4x1xi1>
    %cst_20 = arith.constant 0.000000e+00 : f32
    %139 = vector.shape_cast %138 : vector<1x4x1xi1> to vector<1x4x1xi1>
    %140 = vector.broadcast %139 : vector<1x4x1xi1> to vector<2x4x1xi1>
    %141 = vector.shape_cast %119 : vector<2x1x1xf32> to vector<2x1x1xf32>
    %142 = vector.broadcast %141 : vector<2x1x1xf32> to vector<2x4x1xf32>
    %143 = vector.broadcast %cst_20 : f32 to vector<2x4x1xf32>
    %144 = arith.select %140, %142, %143 : vector<2x4x1xi1>, vector<2x4x1xf32>
    %cst_21 = arith.constant 0.000000e+00 : f32
    %145 = vector.shape_cast %138 : vector<1x4x1xi1> to vector<1x4x1xi1>
    %146 = vector.broadcast %145 : vector<1x4x1xi1> to vector<2x4x1xi1>
    %147 = vector.shape_cast %133 : vector<2x1x1xf32> to vector<2x1x1xf32>
    %148 = vector.broadcast %147 : vector<2x1x1xf32> to vector<2x4x1xf32>
    %149 = vector.broadcast %cst_21 : f32 to vector<2x4x1xf32>
    %150 = arith.select %146, %148, %149 : vector<2x4x1xi1>, vector<2x4x1xf32>
    %151 = vector.extract_strided_slice %111 {offsets = [0, 2, 0], sizes = [2, 2, 256], strides = [1, 1, 1]} : vector<2x4x256xf32> to vector<2x2x256xf32>
    %cst_22 = arith.constant dense<0.000000e+00> : vector<2x2xf32>
    %152 = vector.multi_reduction <add>, %151, %cst_22 [2] : vector<2x2x256xf32> to vector<2x2xf32>
    %153 = vector.shape_cast %152 : vector<2x2xf32> to vector<2x2x1xf32>
    %cst_23 = arith.constant dense<0.000000e+00> : vector<2x1xf32>
    %154 = vector.multi_reduction <add>, %153, %cst_23 [1] : vector<2x2x1xf32> to vector<2x1xf32>
    %155 = vector.shape_cast %154 : vector<2x1xf32> to vector<2x1x1xf32>
    %cst_24 = arith.constant 5.120000e+02 : f32
    %156 = vector.broadcast %cst_24 : f32 to vector<2x1x1xf32>
    %157 = arith.divf %155, %156 : vector<2x1x1xf32>
    %158 = vector.broadcast %157 : vector<2x1x1xf32> to vector<2x2x256xf32>
    %159 = arith.subf %151, %158 : vector<2x2x256xf32>
    %160 = vector.broadcast %157 : vector<2x1x1xf32> to vector<2x2x256xf32>
    %161 = arith.subf %151, %160 : vector<2x2x256xf32>
    %162 = arith.mulf %159, %161 : vector<2x2x256xf32>
    %cst_25 = arith.constant dense<0.000000e+00> : vector<2x2xf32>
    %163 = vector.multi_reduction <add>, %162, %cst_25 [2] : vector<2x2x256xf32> to vector<2x2xf32>
    %164 = vector.shape_cast %163 : vector<2x2xf32> to vector<2x2x1xf32>
    %cst_26 = arith.constant dense<0.000000e+00> : vector<2x1xf32>
    %165 = vector.multi_reduction <add>, %164, %cst_26 [1] : vector<2x2x1xf32> to vector<2x1xf32>
    %166 = vector.shape_cast %165 : vector<2x1xf32> to vector<2x1x1xf32>
    %cst_27 = arith.constant 5.120000e+02 : f32
    %167 = vector.broadcast %cst_27 : f32 to vector<2x1x1xf32>
    %168 = arith.divf %166, %167 : vector<2x1x1xf32>
    %cst_28 = arith.constant 9.99999974E-6 : f32
    %169 = vector.broadcast %cst_28 : f32 to vector<2x1x1xf32>
    %170 = arith.addf %168, %169 : vector<2x1x1xf32>
    %171 = math.rsqrt %170 : vector<2x1x1xf32>
    %c2_i32_29 = arith.constant 2 : i32
    %172 = vector.broadcast %c2_i32_29 : i32 to vector<1x4x1xi32>
    %173 = arith.cmpi sge, %112, %172 : vector<1x4x1xi32>
    %c4_i32 = arith.constant 4 : i32
    %174 = vector.broadcast %c4_i32 : i32 to vector<1x4x1xi32>
    %175 = arith.cmpi slt, %112, %174 : vector<1x4x1xi32>
    %176 = arith.andi %173, %175 : vector<1x4x1xi1>
    %cst_30 = arith.constant 0.000000e+00 : f32
    %177 = vector.shape_cast %176 : vector<1x4x1xi1> to vector<1x4x1xi1>
    %178 = vector.broadcast %177 : vector<1x4x1xi1> to vector<2x4x1xi1>
    %179 = vector.shape_cast %157 : vector<2x1x1xf32> to vector<2x1x1xf32>
    %180 = vector.broadcast %179 : vector<2x1x1xf32> to vector<2x4x1xf32>
    %181 = vector.broadcast %cst_30 : f32 to vector<2x4x1xf32>
    %182 = arith.select %178, %180, %181 : vector<2x4x1xi1>, vector<2x4x1xf32>
    %cst_31 = arith.constant 0.000000e+00 : f32
    %183 = vector.shape_cast %176 : vector<1x4x1xi1> to vector<1x4x1xi1>
    %184 = vector.broadcast %183 : vector<1x4x1xi1> to vector<2x4x1xi1>
    %185 = vector.shape_cast %171 : vector<2x1x1xf32> to vector<2x1x1xf32>
    %186 = vector.broadcast %185 : vector<2x1x1xf32> to vector<2x4x1xf32>
    %187 = vector.broadcast %cst_31 : f32 to vector<2x4x1xf32>
    %188 = arith.select %184, %186, %187 : vector<2x4x1xi1>, vector<2x4x1xf32>
    %189 = arith.addf %144, %182 : vector<2x4x1xf32>
    %190 = arith.addf %150, %188 : vector<2x4x1xf32>
    %c0_i32_32 = arith.constant 0 : i32
    %191 = vector.broadcast %c0_i32_32 : i32 to vector<1x4x1xi32>
    %192 = arith.cmpi eq, %112, %191 : vector<1x4x1xi32>
    %c12 = arith.constant 12 : index
    %193 = memref.load %arg2[%c12] : memref<104xf32, #tpu.memory_space<smem>>
    %cst_33 = arith.constant 0.000000e+00 : f32
    %194 = vector.broadcast %193 : f32 to vector<1x4x1xf32>
    %195 = vector.broadcast %cst_33 : f32 to vector<1x4x1xf32>
    %196 = arith.select %192, %194, %195 : vector<1x4x1xi1>, vector<1x4x1xf32>
    %c16 = arith.constant 16 : index
    %197 = memref.load %arg2[%c16] : memref<104xf32, #tpu.memory_space<smem>>
    %cst_34 = arith.constant 0.000000e+00 : f32
    %198 = vector.broadcast %197 : f32 to vector<1x4x1xf32>
    %199 = vector.broadcast %cst_34 : f32 to vector<1x4x1xf32>
    %200 = arith.select %192, %198, %199 : vector<1x4x1xi1>, vector<1x4x1xf32>
    %c1_i32_35 = arith.constant 1 : i32
    %201 = vector.broadcast %c1_i32_35 : i32 to vector<1x4x1xi32>
    %202 = arith.cmpi eq, %112, %201 : vector<1x4x1xi32>
    %c13 = arith.constant 13 : index
    %203 = memref.load %arg2[%c13] : memref<104xf32, #tpu.memory_space<smem>>
    %cst_36 = arith.constant 0.000000e+00 : f32
    %204 = vector.broadcast %203 : f32 to vector<1x4x1xf32>
    %205 = vector.broadcast %cst_36 : f32 to vector<1x4x1xf32>
    %206 = arith.select %202, %204, %205 : vector<1x4x1xi1>, vector<1x4x1xf32>
    %c17 = arith.constant 17 : index
    %207 = memref.load %arg2[%c17] : memref<104xf32, #tpu.memory_space<smem>>
    %cst_37 = arith.constant 0.000000e+00 : f32
    %208 = vector.broadcast %207 : f32 to vector<1x4x1xf32>
    %209 = vector.broadcast %cst_37 : f32 to vector<1x4x1xf32>
    %210 = arith.select %202, %208, %209 : vector<1x4x1xi1>, vector<1x4x1xf32>
    %211 = arith.addf %196, %206 : vector<1x4x1xf32>
    %212 = arith.addf %200, %210 : vector<1x4x1xf32>
    %c2_i32_38 = arith.constant 2 : i32
    %213 = vector.broadcast %c2_i32_38 : i32 to vector<1x4x1xi32>
    %214 = arith.cmpi eq, %112, %213 : vector<1x4x1xi32>
    %c14 = arith.constant 14 : index
    %215 = memref.load %arg2[%c14] : memref<104xf32, #tpu.memory_space<smem>>
    %cst_39 = arith.constant 0.000000e+00 : f32
    %216 = vector.broadcast %215 : f32 to vector<1x4x1xf32>
    %217 = vector.broadcast %cst_39 : f32 to vector<1x4x1xf32>
    %218 = arith.select %214, %216, %217 : vector<1x4x1xi1>, vector<1x4x1xf32>
    %c18 = arith.constant 18 : index
    %219 = memref.load %arg2[%c18] : memref<104xf32, #tpu.memory_space<smem>>
    %cst_40 = arith.constant 0.000000e+00 : f32
    %220 = vector.broadcast %219 : f32 to vector<1x4x1xf32>
    %221 = vector.broadcast %cst_40 : f32 to vector<1x4x1xf32>
    %222 = arith.select %214, %220, %221 : vector<1x4x1xi1>, vector<1x4x1xf32>
    %223 = arith.addf %211, %218 : vector<1x4x1xf32>
    %224 = arith.addf %212, %222 : vector<1x4x1xf32>
    %c3_i32_41 = arith.constant 3 : i32
    %225 = vector.broadcast %c3_i32_41 : i32 to vector<1x4x1xi32>
    %226 = arith.cmpi eq, %112, %225 : vector<1x4x1xi32>
    %c15 = arith.constant 15 : index
    %227 = memref.load %arg2[%c15] : memref<104xf32, #tpu.memory_space<smem>>
    %cst_42 = arith.constant 0.000000e+00 : f32
    %228 = vector.broadcast %227 : f32 to vector<1x4x1xf32>
    %229 = vector.broadcast %cst_42 : f32 to vector<1x4x1xf32>
    %230 = arith.select %226, %228, %229 : vector<1x4x1xi1>, vector<1x4x1xf32>
    %c19 = arith.constant 19 : index
    %231 = memref.load %arg2[%c19] : memref<104xf32, #tpu.memory_space<smem>>
    %cst_43 = arith.constant 0.000000e+00 : f32
    %232 = vector.broadcast %231 : f32 to vector<1x4x1xf32>
    %233 = vector.broadcast %cst_43 : f32 to vector<1x4x1xf32>
    %234 = arith.select %226, %232, %233 : vector<1x4x1xi1>, vector<1x4x1xf32>
    %235 = arith.addf %223, %230 : vector<1x4x1xf32>
    %236 = arith.addf %224, %234 : vector<1x4x1xf32>
    %237 = vector.broadcast %189 : vector<2x4x1xf32> to vector<2x4x256xf32>
    %238 = arith.subf %111, %237 : vector<2x4x256xf32>
    %239 = vector.broadcast %190 : vector<2x4x1xf32> to vector<2x4x256xf32>
    %240 = arith.mulf %238, %239 : vector<2x4x256xf32>
    %241 = vector.broadcast %235 : vector<1x4x1xf32> to vector<2x4x256xf32>
    %242 = arith.mulf %240, %241 : vector<2x4x256xf32>
    %243 = vector.broadcast %236 : vector<1x4x1xf32> to vector<2x4x256xf32>
    %244 = arith.addf %242, %243 : vector<2x4x256xf32>
    %cst_44 = arith.constant 0.000000e+00 : f32
    %245 = vector.broadcast %cst_44 : f32 to vector<2x4x256xf32>
    %246 = arith.maximumf %244, %245 : vector<2x4x256xf32>
    %247 = tpu.iota {dimensions = array<i32: 1>} : vector<1x4x1xi32>
    %248 = vector.extract_strided_slice %246 {offsets = [0, 0, 0], sizes = [2, 1, 256], strides = [1, 1, 1]} : vector<2x4x256xf32> to vector<2x1x256xf32>
    %c20 = arith.constant 20 : index
    %249 = memref.load %arg2[%c20] : memref<104xf32, #tpu.memory_space<smem>>
    %250 = vector.broadcast %249 : f32 to vector<2x1x256xf32>
    %251 = arith.mulf %248, %250 : vector<2x1x256xf32>
    %252 = vector.extract_strided_slice %246 {offsets = [0, 1, 0], sizes = [2, 1, 256], strides = [1, 1, 1]} : vector<2x4x256xf32> to vector<2x1x256xf32>
    %c24 = arith.constant 24 : index
    %253 = memref.load %arg2[%c24] : memref<104xf32, #tpu.memory_space<smem>>
    %254 = vector.broadcast %253 : f32 to vector<2x1x256xf32>
    %255 = arith.mulf %252, %254 : vector<2x1x256xf32>
    %256 = arith.addf %251, %255 : vector<2x1x256xf32>
    %257 = vector.extract_strided_slice %246 {offsets = [0, 2, 0], sizes = [2, 1, 256], strides = [1, 1, 1]} : vector<2x4x256xf32> to vector<2x1x256xf32>
    %c28 = arith.constant 28 : index
    %258 = memref.load %arg2[%c28] : memref<104xf32, #tpu.memory_space<smem>>
    %259 = vector.broadcast %258 : f32 to vector<2x1x256xf32>
    %260 = arith.mulf %257, %259 : vector<2x1x256xf32>
    %261 = arith.addf %256, %260 : vector<2x1x256xf32>
    %262 = vector.extract_strided_slice %246 {offsets = [0, 3, 0], sizes = [2, 1, 256], strides = [1, 1, 1]} : vector<2x4x256xf32> to vector<2x1x256xf32>
    %c32 = arith.constant 32 : index
    %263 = memref.load %arg2[%c32] : memref<104xf32, #tpu.memory_space<smem>>
    %264 = vector.broadcast %263 : f32 to vector<2x1x256xf32>
    %265 = arith.mulf %262, %264 : vector<2x1x256xf32>
    %266 = arith.addf %261, %265 : vector<2x1x256xf32>
    %c36 = arith.constant 36 : index
    %267 = memref.load %arg2[%c36] : memref<104xf32, #tpu.memory_space<smem>>
    %268 = vector.broadcast %267 : f32 to vector<2x1x256xf32>
    %269 = arith.addf %266, %268 : vector<2x1x256xf32>
    %c0_i32_45 = arith.constant 0 : i32
    %270 = vector.broadcast %c0_i32_45 : i32 to vector<1x4x1xi32>
    %271 = arith.cmpi eq, %247, %270 : vector<1x4x1xi32>
    %cst_46 = arith.constant 0.000000e+00 : f32
    %272 = vector.shape_cast %271 : vector<1x4x1xi1> to vector<1x4x1xi1>
    %273 = vector.broadcast %272 : vector<1x4x1xi1> to vector<2x4x256xi1>
    %274 = vector.shape_cast %269 : vector<2x1x256xf32> to vector<2x1x256xf32>
    %275 = vector.broadcast %274 : vector<2x1x256xf32> to vector<2x4x256xf32>
    %276 = vector.broadcast %cst_46 : f32 to vector<2x4x256xf32>
    %277 = arith.select %273, %275, %276 : vector<2x4x256xi1>, vector<2x4x256xf32>
    %278 = vector.extract_strided_slice %246 {offsets = [0, 0, 0], sizes = [2, 1, 256], strides = [1, 1, 1]} : vector<2x4x256xf32> to vector<2x1x256xf32>
    %c21 = arith.constant 21 : index
    %279 = memref.load %arg2[%c21] : memref<104xf32, #tpu.memory_space<smem>>
    %280 = vector.broadcast %279 : f32 to vector<2x1x256xf32>
    %281 = arith.mulf %278, %280 : vector<2x1x256xf32>
    %282 = vector.extract_strided_slice %246 {offsets = [0, 1, 0], sizes = [2, 1, 256], strides = [1, 1, 1]} : vector<2x4x256xf32> to vector<2x1x256xf32>
    %c25 = arith.constant 25 : index
    %283 = memref.load %arg2[%c25] : memref<104xf32, #tpu.memory_space<smem>>
    %284 = vector.broadcast %283 : f32 to vector<2x1x256xf32>
    %285 = arith.mulf %282, %284 : vector<2x1x256xf32>
    %286 = arith.addf %281, %285 : vector<2x1x256xf32>
    %287 = vector.extract_strided_slice %246 {offsets = [0, 2, 0], sizes = [2, 1, 256], strides = [1, 1, 1]} : vector<2x4x256xf32> to vector<2x1x256xf32>
    %c29 = arith.constant 29 : index
    %288 = memref.load %arg2[%c29] : memref<104xf32, #tpu.memory_space<smem>>
    %289 = vector.broadcast %288 : f32 to vector<2x1x256xf32>
    %290 = arith.mulf %287, %289 : vector<2x1x256xf32>
    %291 = arith.addf %286, %290 : vector<2x1x256xf32>
    %292 = vector.extract_strided_slice %246 {offsets = [0, 3, 0], sizes = [2, 1, 256], strides = [1, 1, 1]} : vector<2x4x256xf32> to vector<2x1x256xf32>
    %c33 = arith.constant 33 : index
    %293 = memref.load %arg2[%c33] : memref<104xf32, #tpu.memory_space<smem>>
    %294 = vector.broadcast %293 : f32 to vector<2x1x256xf32>
    %295 = arith.mulf %292, %294 : vector<2x1x256xf32>
    %296 = arith.addf %291, %295 : vector<2x1x256xf32>
    %c37 = arith.constant 37 : index
    %297 = memref.load %arg2[%c37] : memref<104xf32, #tpu.memory_space<smem>>
    %298 = vector.broadcast %297 : f32 to vector<2x1x256xf32>
    %299 = arith.addf %296, %298 : vector<2x1x256xf32>
    %c1_i32_47 = arith.constant 1 : i32
    %300 = vector.broadcast %c1_i32_47 : i32 to vector<1x4x1xi32>
    %301 = arith.cmpi eq, %247, %300 : vector<1x4x1xi32>
    %cst_48 = arith.constant 0.000000e+00 : f32
    %302 = vector.shape_cast %301 : vector<1x4x1xi1> to vector<1x4x1xi1>
    %303 = vector.broadcast %302 : vector<1x4x1xi1> to vector<2x4x256xi1>
    %304 = vector.shape_cast %299 : vector<2x1x256xf32> to vector<2x1x256xf32>
    %305 = vector.broadcast %304 : vector<2x1x256xf32> to vector<2x4x256xf32>
    %306 = vector.broadcast %cst_48 : f32 to vector<2x4x256xf32>
    %307 = arith.select %303, %305, %306 : vector<2x4x256xi1>, vector<2x4x256xf32>
    %308 = arith.addf %277, %307 : vector<2x4x256xf32>
    %309 = vector.extract_strided_slice %246 {offsets = [0, 0, 0], sizes = [2, 1, 256], strides = [1, 1, 1]} : vector<2x4x256xf32> to vector<2x1x256xf32>
    %c22 = arith.constant 22 : index
    %310 = memref.load %arg2[%c22] : memref<104xf32, #tpu.memory_space<smem>>
    %311 = vector.broadcast %310 : f32 to vector<2x1x256xf32>
    %312 = arith.mulf %309, %311 : vector<2x1x256xf32>
    %313 = vector.extract_strided_slice %246 {offsets = [0, 1, 0], sizes = [2, 1, 256], strides = [1, 1, 1]} : vector<2x4x256xf32> to vector<2x1x256xf32>
    %c26 = arith.constant 26 : index
    %314 = memref.load %arg2[%c26] : memref<104xf32, #tpu.memory_space<smem>>
    %315 = vector.broadcast %314 : f32 to vector<2x1x256xf32>
    %316 = arith.mulf %313, %315 : vector<2x1x256xf32>
    %317 = arith.addf %312, %316 : vector<2x1x256xf32>
    %318 = vector.extract_strided_slice %246 {offsets = [0, 2, 0], sizes = [2, 1, 256], strides = [1, 1, 1]} : vector<2x4x256xf32> to vector<2x1x256xf32>
    %c30 = arith.constant 30 : index
    %319 = memref.load %arg2[%c30] : memref<104xf32, #tpu.memory_space<smem>>
    %320 = vector.broadcast %319 : f32 to vector<2x1x256xf32>
    %321 = arith.mulf %318, %320 : vector<2x1x256xf32>
    %322 = arith.addf %317, %321 : vector<2x1x256xf32>
    %323 = vector.extract_strided_slice %246 {offsets = [0, 3, 0], sizes = [2, 1, 256], strides = [1, 1, 1]} : vector<2x4x256xf32> to vector<2x1x256xf32>
    %c34 = arith.constant 34 : index
    %324 = memref.load %arg2[%c34] : memref<104xf32, #tpu.memory_space<smem>>
    %325 = vector.broadcast %324 : f32 to vector<2x1x256xf32>
    %326 = arith.mulf %323, %325 : vector<2x1x256xf32>
    %327 = arith.addf %322, %326 : vector<2x1x256xf32>
    %c38 = arith.constant 38 : index
    %328 = memref.load %arg2[%c38] : memref<104xf32, #tpu.memory_space<smem>>
    %329 = vector.broadcast %328 : f32 to vector<2x1x256xf32>
    %330 = arith.addf %327, %329 : vector<2x1x256xf32>
    %c2_i32_49 = arith.constant 2 : i32
    %331 = vector.broadcast %c2_i32_49 : i32 to vector<1x4x1xi32>
    %332 = arith.cmpi eq, %247, %331 : vector<1x4x1xi32>
    %cst_50 = arith.constant 0.000000e+00 : f32
    %333 = vector.shape_cast %332 : vector<1x4x1xi1> to vector<1x4x1xi1>
    %334 = vector.broadcast %333 : vector<1x4x1xi1> to vector<2x4x256xi1>
    %335 = vector.shape_cast %330 : vector<2x1x256xf32> to vector<2x1x256xf32>
    %336 = vector.broadcast %335 : vector<2x1x256xf32> to vector<2x4x256xf32>
    %337 = vector.broadcast %cst_50 : f32 to vector<2x4x256xf32>
    %338 = arith.select %334, %336, %337 : vector<2x4x256xi1>, vector<2x4x256xf32>
    %339 = arith.addf %308, %338 : vector<2x4x256xf32>
    %340 = vector.extract_strided_slice %246 {offsets = [0, 0, 0], sizes = [2, 1, 256], strides = [1, 1, 1]} : vector<2x4x256xf32> to vector<2x1x256xf32>
    %c23 = arith.constant 23 : index
    %341 = memref.load %arg2[%c23] : memref<104xf32, #tpu.memory_space<smem>>
    %342 = vector.broadcast %341 : f32 to vector<2x1x256xf32>
    %343 = arith.mulf %340, %342 : vector<2x1x256xf32>
    %344 = vector.extract_strided_slice %246 {offsets = [0, 1, 0], sizes = [2, 1, 256], strides = [1, 1, 1]} : vector<2x4x256xf32> to vector<2x1x256xf32>
    %c27 = arith.constant 27 : index
    %345 = memref.load %arg2[%c27] : memref<104xf32, #tpu.memory_space<smem>>
    %346 = vector.broadcast %345 : f32 to vector<2x1x256xf32>
    %347 = arith.mulf %344, %346 : vector<2x1x256xf32>
    %348 = arith.addf %343, %347 : vector<2x1x256xf32>
    %349 = vector.extract_strided_slice %246 {offsets = [0, 2, 0], sizes = [2, 1, 256], strides = [1, 1, 1]} : vector<2x4x256xf32> to vector<2x1x256xf32>
    %c31 = arith.constant 31 : index
    %350 = memref.load %arg2[%c31] : memref<104xf32, #tpu.memory_space<smem>>
    %351 = vector.broadcast %350 : f32 to vector<2x1x256xf32>
    %352 = arith.mulf %349, %351 : vector<2x1x256xf32>
    %353 = arith.addf %348, %352 : vector<2x1x256xf32>
    %354 = vector.extract_strided_slice %246 {offsets = [0, 3, 0], sizes = [2, 1, 256], strides = [1, 1, 1]} : vector<2x4x256xf32> to vector<2x1x256xf32>
    %c35 = arith.constant 35 : index
    %355 = memref.load %arg2[%c35] : memref<104xf32, #tpu.memory_space<smem>>
    %356 = vector.broadcast %355 : f32 to vector<2x1x256xf32>
    %357 = arith.mulf %354, %356 : vector<2x1x256xf32>
    %358 = arith.addf %353, %357 : vector<2x1x256xf32>
    %c39 = arith.constant 39 : index
    %359 = memref.load %arg2[%c39] : memref<104xf32, #tpu.memory_space<smem>>
    %360 = vector.broadcast %359 : f32 to vector<2x1x256xf32>
    %361 = arith.addf %358, %360 : vector<2x1x256xf32>
    %c3_i32_51 = arith.constant 3 : i32
    %362 = vector.broadcast %c3_i32_51 : i32 to vector<1x4x1xi32>
    %363 = arith.cmpi eq, %247, %362 : vector<1x4x1xi32>
    %cst_52 = arith.constant 0.000000e+00 : f32
    %364 = vector.shape_cast %363 : vector<1x4x1xi1> to vector<1x4x1xi1>
    %365 = vector.broadcast %364 : vector<1x4x1xi1> to vector<2x4x256xi1>
    %366 = vector.shape_cast %361 : vector<2x1x256xf32> to vector<2x1x256xf32>
    %367 = vector.broadcast %366 : vector<2x1x256xf32> to vector<2x4x256xf32>
    %368 = vector.broadcast %cst_52 : f32 to vector<2x4x256xf32>
    %369 = arith.select %365, %367, %368 : vector<2x4x256xi1>, vector<2x4x256xf32>
    %370 = arith.addf %339, %369 : vector<2x4x256xf32>
    %371 = tpu.iota {dimensions = array<i32: 1>} : vector<1x4x1xi32>
    %372 = vector.extract_strided_slice %370 {offsets = [0, 0, 0], sizes = [2, 2, 256], strides = [1, 1, 1]} : vector<2x4x256xf32> to vector<2x2x256xf32>
    %cst_53 = arith.constant dense<0.000000e+00> : vector<2x2xf32>
    %373 = vector.multi_reduction <add>, %372, %cst_53 [2] : vector<2x2x256xf32> to vector<2x2xf32>
    %374 = vector.shape_cast %373 : vector<2x2xf32> to vector<2x2x1xf32>
    %cst_54 = arith.constant dense<0.000000e+00> : vector<2x1xf32>
    %375 = vector.multi_reduction <add>, %374, %cst_54 [1] : vector<2x2x1xf32> to vector<2x1xf32>
    %376 = vector.shape_cast %375 : vector<2x1xf32> to vector<2x1x1xf32>
    %cst_55 = arith.constant 5.120000e+02 : f32
    %377 = vector.broadcast %cst_55 : f32 to vector<2x1x1xf32>
    %378 = arith.divf %376, %377 : vector<2x1x1xf32>
    %379 = vector.broadcast %378 : vector<2x1x1xf32> to vector<2x2x256xf32>
    %380 = arith.subf %372, %379 : vector<2x2x256xf32>
    %381 = vector.broadcast %378 : vector<2x1x1xf32> to vector<2x2x256xf32>
    %382 = arith.subf %372, %381 : vector<2x2x256xf32>
    %383 = arith.mulf %380, %382 : vector<2x2x256xf32>
    %cst_56 = arith.constant dense<0.000000e+00> : vector<2x2xf32>
    %384 = vector.multi_reduction <add>, %383, %cst_56 [2] : vector<2x2x256xf32> to vector<2x2xf32>
    %385 = vector.shape_cast %384 : vector<2x2xf32> to vector<2x2x1xf32>
    %cst_57 = arith.constant dense<0.000000e+00> : vector<2x1xf32>
    %386 = vector.multi_reduction <add>, %385, %cst_57 [1] : vector<2x2x1xf32> to vector<2x1xf32>
    %387 = vector.shape_cast %386 : vector<2x1xf32> to vector<2x1x1xf32>
    %cst_58 = arith.constant 5.120000e+02 : f32
    %388 = vector.broadcast %cst_58 : f32 to vector<2x1x1xf32>
    %389 = arith.divf %387, %388 : vector<2x1x1xf32>
    %cst_59 = arith.constant 9.99999974E-6 : f32
    %390 = vector.broadcast %cst_59 : f32 to vector<2x1x1xf32>
    %391 = arith.addf %389, %390 : vector<2x1x1xf32>
    %392 = math.rsqrt %391 : vector<2x1x1xf32>
    %c0_i32_60 = arith.constant 0 : i32
    %393 = vector.broadcast %c0_i32_60 : i32 to vector<1x4x1xi32>
    %394 = arith.cmpi sge, %371, %393 : vector<1x4x1xi32>
    %c2_i32_61 = arith.constant 2 : i32
    %395 = vector.broadcast %c2_i32_61 : i32 to vector<1x4x1xi32>
    %396 = arith.cmpi slt, %371, %395 : vector<1x4x1xi32>
    %397 = arith.andi %394, %396 : vector<1x4x1xi1>
    %cst_62 = arith.constant 0.000000e+00 : f32
    %398 = vector.shape_cast %397 : vector<1x4x1xi1> to vector<1x4x1xi1>
    %399 = vector.broadcast %398 : vector<1x4x1xi1> to vector<2x4x1xi1>
    %400 = vector.shape_cast %378 : vector<2x1x1xf32> to vector<2x1x1xf32>
    %401 = vector.broadcast %400 : vector<2x1x1xf32> to vector<2x4x1xf32>
    %402 = vector.broadcast %cst_62 : f32 to vector<2x4x1xf32>
    %403 = arith.select %399, %401, %402 : vector<2x4x1xi1>, vector<2x4x1xf32>
    %cst_63 = arith.constant 0.000000e+00 : f32
    %404 = vector.shape_cast %397 : vector<1x4x1xi1> to vector<1x4x1xi1>
    %405 = vector.broadcast %404 : vector<1x4x1xi1> to vector<2x4x1xi1>
    %406 = vector.shape_cast %392 : vector<2x1x1xf32> to vector<2x1x1xf32>
    %407 = vector.broadcast %406 : vector<2x1x1xf32> to vector<2x4x1xf32>
    %408 = vector.broadcast %cst_63 : f32 to vector<2x4x1xf32>
    %409 = arith.select %405, %407, %408 : vector<2x4x1xi1>, vector<2x4x1xf32>
    %410 = vector.extract_strided_slice %370 {offsets = [0, 2, 0], sizes = [2, 2, 256], strides = [1, 1, 1]} : vector<2x4x256xf32> to vector<2x2x256xf32>
    %cst_64 = arith.constant dense<0.000000e+00> : vector<2x2xf32>
    %411 = vector.multi_reduction <add>, %410, %cst_64 [2] : vector<2x2x256xf32> to vector<2x2xf32>
    %412 = vector.shape_cast %411 : vector<2x2xf32> to vector<2x2x1xf32>
    %cst_65 = arith.constant dense<0.000000e+00> : vector<2x1xf32>
    %413 = vector.multi_reduction <add>, %412, %cst_65 [1] : vector<2x2x1xf32> to vector<2x1xf32>
    %414 = vector.shape_cast %413 : vector<2x1xf32> to vector<2x1x1xf32>
    %cst_66 = arith.constant 5.120000e+02 : f32
    %415 = vector.broadcast %cst_66 : f32 to vector<2x1x1xf32>
    %416 = arith.divf %414, %415 : vector<2x1x1xf32>
    %417 = vector.broadcast %416 : vector<2x1x1xf32> to vector<2x2x256xf32>
    %418 = arith.subf %410, %417 : vector<2x2x256xf32>
    %419 = vector.broadcast %416 : vector<2x1x1xf32> to vector<2x2x256xf32>
    %420 = arith.subf %410, %419 : vector<2x2x256xf32>
    %421 = arith.mulf %418, %420 : vector<2x2x256xf32>
    %cst_67 = arith.constant dense<0.000000e+00> : vector<2x2xf32>
    %422 = vector.multi_reduction <add>, %421, %cst_67 [2] : vector<2x2x256xf32> to vector<2x2xf32>
    %423 = vector.shape_cast %422 : vector<2x2xf32> to vector<2x2x1xf32>
    %cst_68 = arith.constant dense<0.000000e+00> : vector<2x1xf32>
    %424 = vector.multi_reduction <add>, %423, %cst_68 [1] : vector<2x2x1xf32> to vector<2x1xf32>
    %425 = vector.shape_cast %424 : vector<2x1xf32> to vector<2x1x1xf32>
    %cst_69 = arith.constant 5.120000e+02 : f32
    %426 = vector.broadcast %cst_69 : f32 to vector<2x1x1xf32>
    %427 = arith.divf %425, %426 : vector<2x1x1xf32>
    %cst_70 = arith.constant 9.99999974E-6 : f32
    %428 = vector.broadcast %cst_70 : f32 to vector<2x1x1xf32>
    %429 = arith.addf %427, %428 : vector<2x1x1xf32>
    %430 = math.rsqrt %429 : vector<2x1x1xf32>
    %c2_i32_71 = arith.constant 2 : i32
    %431 = vector.broadcast %c2_i32_71 : i32 to vector<1x4x1xi32>
    %432 = arith.cmpi sge, %371, %431 : vector<1x4x1xi32>
    %c4_i32_72 = arith.constant 4 : i32
    %433 = vector.broadcast %c4_i32_72 : i32 to vector<1x4x1xi32>
    %434 = arith.cmpi slt, %371, %433 : vector<1x4x1xi32>
    %435 = arith.andi %432, %434 : vector<1x4x1xi1>
    %cst_73 = arith.constant 0.000000e+00 : f32
    %436 = vector.shape_cast %435 : vector<1x4x1xi1> to vector<1x4x1xi1>
    %437 = vector.broadcast %436 : vector<1x4x1xi1> to vector<2x4x1xi1>
    %438 = vector.shape_cast %416 : vector<2x1x1xf32> to vector<2x1x1xf32>
    %439 = vector.broadcast %438 : vector<2x1x1xf32> to vector<2x4x1xf32>
    %440 = vector.broadcast %cst_73 : f32 to vector<2x4x1xf32>
    %441 = arith.select %437, %439, %440 : vector<2x4x1xi1>, vector<2x4x1xf32>
    %cst_74 = arith.constant 0.000000e+00 : f32
    %442 = vector.shape_cast %435 : vector<1x4x1xi1> to vector<1x4x1xi1>
    %443 = vector.broadcast %442 : vector<1x4x1xi1> to vector<2x4x1xi1>
    %444 = vector.shape_cast %430 : vector<2x1x1xf32> to vector<2x1x1xf32>
    %445 = vector.broadcast %444 : vector<2x1x1xf32> to vector<2x4x1xf32>
    %446 = vector.broadcast %cst_74 : f32 to vector<2x4x1xf32>
    %447 = arith.select %443, %445, %446 : vector<2x4x1xi1>, vector<2x4x1xf32>
    %448 = arith.addf %403, %441 : vector<2x4x1xf32>
    %449 = arith.addf %409, %447 : vector<2x4x1xf32>
    %c0_i32_75 = arith.constant 0 : i32
    %450 = vector.broadcast %c0_i32_75 : i32 to vector<1x4x1xi32>
    %451 = arith.cmpi eq, %371, %450 : vector<1x4x1xi32>
    %c40 = arith.constant 40 : index
    %452 = memref.load %arg2[%c40] : memref<104xf32, #tpu.memory_space<smem>>
    %cst_76 = arith.constant 0.000000e+00 : f32
    %453 = vector.broadcast %452 : f32 to vector<1x4x1xf32>
    %454 = vector.broadcast %cst_76 : f32 to vector<1x4x1xf32>
    %455 = arith.select %451, %453, %454 : vector<1x4x1xi1>, vector<1x4x1xf32>
    %c44 = arith.constant 44 : index
    %456 = memref.load %arg2[%c44] : memref<104xf32, #tpu.memory_space<smem>>
    %cst_77 = arith.constant 0.000000e+00 : f32
    %457 = vector.broadcast %456 : f32 to vector<1x4x1xf32>
    %458 = vector.broadcast %cst_77 : f32 to vector<1x4x1xf32>
    %459 = arith.select %451, %457, %458 : vector<1x4x1xi1>, vector<1x4x1xf32>
    %c1_i32_78 = arith.constant 1 : i32
    %460 = vector.broadcast %c1_i32_78 : i32 to vector<1x4x1xi32>
    %461 = arith.cmpi eq, %371, %460 : vector<1x4x1xi32>
    %c41 = arith.constant 41 : index
    %462 = memref.load %arg2[%c41] : memref<104xf32, #tpu.memory_space<smem>>
    %cst_79 = arith.constant 0.000000e+00 : f32
    %463 = vector.broadcast %462 : f32 to vector<1x4x1xf32>
    %464 = vector.broadcast %cst_79 : f32 to vector<1x4x1xf32>
    %465 = arith.select %461, %463, %464 : vector<1x4x1xi1>, vector<1x4x1xf32>
    %c45 = arith.constant 45 : index
    %466 = memref.load %arg2[%c45] : memref<104xf32, #tpu.memory_space<smem>>
    %cst_80 = arith.constant 0.000000e+00 : f32
    %467 = vector.broadcast %466 : f32 to vector<1x4x1xf32>
    %468 = vector.broadcast %cst_80 : f32 to vector<1x4x1xf32>
    %469 = arith.select %461, %467, %468 : vector<1x4x1xi1>, vector<1x4x1xf32>
    %470 = arith.addf %455, %465 : vector<1x4x1xf32>
    %471 = arith.addf %459, %469 : vector<1x4x1xf32>
    %c2_i32_81 = arith.constant 2 : i32
    %472 = vector.broadcast %c2_i32_81 : i32 to vector<1x4x1xi32>
    %473 = arith.cmpi eq, %371, %472 : vector<1x4x1xi32>
    %c42 = arith.constant 42 : index
    %474 = memref.load %arg2[%c42] : memref<104xf32, #tpu.memory_space<smem>>
    %cst_82 = arith.constant 0.000000e+00 : f32
    %475 = vector.broadcast %474 : f32 to vector<1x4x1xf32>
    %476 = vector.broadcast %cst_82 : f32 to vector<1x4x1xf32>
    %477 = arith.select %473, %475, %476 : vector<1x4x1xi1>, vector<1x4x1xf32>
    %c46 = arith.constant 46 : index
    %478 = memref.load %arg2[%c46] : memref<104xf32, #tpu.memory_space<smem>>
    %cst_83 = arith.constant 0.000000e+00 : f32
    %479 = vector.broadcast %478 : f32 to vector<1x4x1xf32>
    %480 = vector.broadcast %cst_83 : f32 to vector<1x4x1xf32>
    %481 = arith.select %473, %479, %480 : vector<1x4x1xi1>, vector<1x4x1xf32>
    %482 = arith.addf %470, %477 : vector<1x4x1xf32>
    %483 = arith.addf %471, %481 : vector<1x4x1xf32>
    %c3_i32_84 = arith.constant 3 : i32
    %484 = vector.broadcast %c3_i32_84 : i32 to vector<1x4x1xi32>
    %485 = arith.cmpi eq, %371, %484 : vector<1x4x1xi32>
    %c43 = arith.constant 43 : index
    %486 = memref.load %arg2[%c43] : memref<104xf32, #tpu.memory_space<smem>>
    %cst_85 = arith.constant 0.000000e+00 : f32
    %487 = vector.broadcast %486 : f32 to vector<1x4x1xf32>
    %488 = vector.broadcast %cst_85 : f32 to vector<1x4x1xf32>
    %489 = arith.select %485, %487, %488 : vector<1x4x1xi1>, vector<1x4x1xf32>
    %c47 = arith.constant 47 : index
    %490 = memref.load %arg2[%c47] : memref<104xf32, #tpu.memory_space<smem>>
    %cst_86 = arith.constant 0.000000e+00 : f32
    %491 = vector.broadcast %490 : f32 to vector<1x4x1xf32>
    %492 = vector.broadcast %cst_86 : f32 to vector<1x4x1xf32>
    %493 = arith.select %485, %491, %492 : vector<1x4x1xi1>, vector<1x4x1xf32>
    %494 = arith.addf %482, %489 : vector<1x4x1xf32>
    %495 = arith.addf %483, %493 : vector<1x4x1xf32>
    %496 = vector.broadcast %448 : vector<2x4x1xf32> to vector<2x4x256xf32>
    %497 = arith.subf %370, %496 : vector<2x4x256xf32>
    %498 = vector.broadcast %449 : vector<2x4x1xf32> to vector<2x4x256xf32>
    %499 = arith.mulf %497, %498 : vector<2x4x256xf32>
    %500 = vector.broadcast %494 : vector<1x4x1xf32> to vector<2x4x256xf32>
    %501 = arith.mulf %499, %500 : vector<2x4x256xf32>
    %502 = vector.broadcast %495 : vector<1x4x1xf32> to vector<2x4x256xf32>
    %503 = arith.addf %501, %502 : vector<2x4x256xf32>
    %c2_i32_87 = arith.constant 2 : i32
    %504 = vector.broadcast %c2_i32_87 : i32 to vector<1x1x256xi32>
    %505 = arith.andi %1, %504 : vector<1x1x256xi32>
    %c0_i32_88 = arith.constant 0 : i32
    %506 = vector.broadcast %c0_i32_88 : i32 to vector<1x1x256xi32>
    %507 = arith.cmpi eq, %505, %506 : vector<1x1x256xi32>
    %508 = tpu.concatenate %503, %503 in 2 : vector<2x4x256xf32>, vector<2x4x256xf32> -> vector<2x4x512xf32>
    %509 = vector.extract_strided_slice %508 {offsets = [0, 0, 2], sizes = [2, 4, 256], strides = [1, 1, 1]} : vector<2x4x512xf32> to vector<2x4x256xf32>
    %510 = vector.extract_strided_slice %508 {offsets = [0, 0, 254], sizes = [2, 4, 256], strides = [1, 1, 1]} : vector<2x4x512xf32> to vector<2x4x256xf32>
    %511 = vector.shape_cast %507 : vector<1x1x256xi1> to vector<1x1x256xi1>
    %512 = vector.broadcast %511 : vector<1x1x256xi1> to vector<2x4x256xi1>
    %513 = arith.select %512, %509, %510 : vector<2x4x256xi1>, vector<2x4x256xf32>
    %514 = arith.addf %503, %513 : vector<2x4x256xf32>
    %cst_89 = arith.constant 5.000000e-01 : f32
    %515 = vector.broadcast %cst_89 : f32 to vector<2x4x256xf32>
    %516 = arith.mulf %514, %515 : vector<2x4x256xf32>
    %c32_i32 = arith.constant 32 : i32
    %517 = vector.broadcast %c32_i32 : i32 to vector<1x1x256xi32>
    %518 = arith.andi %1, %517 : vector<1x1x256xi32>
    %c0_i32_90 = arith.constant 0 : i32
    %519 = vector.broadcast %c0_i32_90 : i32 to vector<1x1x256xi32>
    %520 = arith.cmpi eq, %518, %519 : vector<1x1x256xi32>
    %521 = tpu.concatenate %516, %516 in 2 : vector<2x4x256xf32>, vector<2x4x256xf32> -> vector<2x4x512xf32>
    %522 = vector.extract_strided_slice %521 {offsets = [0, 0, 32], sizes = [2, 4, 256], strides = [1, 1, 1]} : vector<2x4x512xf32> to vector<2x4x256xf32>
    %523 = vector.extract_strided_slice %521 {offsets = [0, 0, 224], sizes = [2, 4, 256], strides = [1, 1, 1]} : vector<2x4x512xf32> to vector<2x4x256xf32>
    %524 = vector.shape_cast %520 : vector<1x1x256xi1> to vector<1x1x256xi1>
    %525 = vector.broadcast %524 : vector<1x1x256xi1> to vector<2x4x256xi1>
    %526 = arith.select %525, %522, %523 : vector<2x4x256xi1>, vector<2x4x256xf32>
    %527 = arith.addf %516, %526 : vector<2x4x256xf32>
    %cst_91 = arith.constant 5.000000e-01 : f32
    %528 = vector.broadcast %cst_91 : f32 to vector<2x4x256xf32>
    %529 = arith.mulf %527, %528 : vector<2x4x256xf32>
    %530 = tpu.iota {dimensions = array<i32: 1>} : vector<1x4x1xi32>
    %531 = vector.extract_strided_slice %529 {offsets = [0, 0, 0], sizes = [2, 1, 256], strides = [1, 1, 1]} : vector<2x4x256xf32> to vector<2x1x256xf32>
    %c48 = arith.constant 48 : index
    %532 = memref.load %arg2[%c48] : memref<104xf32, #tpu.memory_space<smem>>
    %533 = vector.broadcast %532 : f32 to vector<2x1x256xf32>
    %534 = arith.mulf %531, %533 : vector<2x1x256xf32>
    %535 = vector.extract_strided_slice %529 {offsets = [0, 1, 0], sizes = [2, 1, 256], strides = [1, 1, 1]} : vector<2x4x256xf32> to vector<2x1x256xf32>
    %c52 = arith.constant 52 : index
    %536 = memref.load %arg2[%c52] : memref<104xf32, #tpu.memory_space<smem>>
    %537 = vector.broadcast %536 : f32 to vector<2x1x256xf32>
    %538 = arith.mulf %535, %537 : vector<2x1x256xf32>
    %539 = arith.addf %534, %538 : vector<2x1x256xf32>
    %540 = vector.extract_strided_slice %529 {offsets = [0, 2, 0], sizes = [2, 1, 256], strides = [1, 1, 1]} : vector<2x4x256xf32> to vector<2x1x256xf32>
    %c56 = arith.constant 56 : index
    %541 = memref.load %arg2[%c56] : memref<104xf32, #tpu.memory_space<smem>>
    %542 = vector.broadcast %541 : f32 to vector<2x1x256xf32>
    %543 = arith.mulf %540, %542 : vector<2x1x256xf32>
    %544 = arith.addf %539, %543 : vector<2x1x256xf32>
    %545 = vector.extract_strided_slice %529 {offsets = [0, 3, 0], sizes = [2, 1, 256], strides = [1, 1, 1]} : vector<2x4x256xf32> to vector<2x1x256xf32>
    %c60 = arith.constant 60 : index
    %546 = memref.load %arg2[%c60] : memref<104xf32, #tpu.memory_space<smem>>
    %547 = vector.broadcast %546 : f32 to vector<2x1x256xf32>
    %548 = arith.mulf %545, %547 : vector<2x1x256xf32>
    %549 = arith.addf %544, %548 : vector<2x1x256xf32>
    %c64 = arith.constant 64 : index
    %550 = memref.load %arg2[%c64] : memref<104xf32, #tpu.memory_space<smem>>
    %551 = vector.broadcast %550 : f32 to vector<2x1x256xf32>
    %552 = arith.addf %549, %551 : vector<2x1x256xf32>
    %c0_i32_92 = arith.constant 0 : i32
    %553 = vector.broadcast %c0_i32_92 : i32 to vector<1x4x1xi32>
    %554 = arith.cmpi eq, %530, %553 : vector<1x4x1xi32>
    %cst_93 = arith.constant 0.000000e+00 : f32
    %555 = vector.shape_cast %554 : vector<1x4x1xi1> to vector<1x4x1xi1>
    %556 = vector.broadcast %555 : vector<1x4x1xi1> to vector<2x4x256xi1>
    %557 = vector.shape_cast %552 : vector<2x1x256xf32> to vector<2x1x256xf32>
    %558 = vector.broadcast %557 : vector<2x1x256xf32> to vector<2x4x256xf32>
    %559 = vector.broadcast %cst_93 : f32 to vector<2x4x256xf32>
    %560 = arith.select %556, %558, %559 : vector<2x4x256xi1>, vector<2x4x256xf32>
    %561 = vector.extract_strided_slice %529 {offsets = [0, 0, 0], sizes = [2, 1, 256], strides = [1, 1, 1]} : vector<2x4x256xf32> to vector<2x1x256xf32>
    %c49 = arith.constant 49 : index
    %562 = memref.load %arg2[%c49] : memref<104xf32, #tpu.memory_space<smem>>
    %563 = vector.broadcast %562 : f32 to vector<2x1x256xf32>
    %564 = arith.mulf %561, %563 : vector<2x1x256xf32>
    %565 = vector.extract_strided_slice %529 {offsets = [0, 1, 0], sizes = [2, 1, 256], strides = [1, 1, 1]} : vector<2x4x256xf32> to vector<2x1x256xf32>
    %c53 = arith.constant 53 : index
    %566 = memref.load %arg2[%c53] : memref<104xf32, #tpu.memory_space<smem>>
    %567 = vector.broadcast %566 : f32 to vector<2x1x256xf32>
    %568 = arith.mulf %565, %567 : vector<2x1x256xf32>
    %569 = arith.addf %564, %568 : vector<2x1x256xf32>
    %570 = vector.extract_strided_slice %529 {offsets = [0, 2, 0], sizes = [2, 1, 256], strides = [1, 1, 1]} : vector<2x4x256xf32> to vector<2x1x256xf32>
    %c57 = arith.constant 57 : index
    %571 = memref.load %arg2[%c57] : memref<104xf32, #tpu.memory_space<smem>>
    %572 = vector.broadcast %571 : f32 to vector<2x1x256xf32>
    %573 = arith.mulf %570, %572 : vector<2x1x256xf32>
    %574 = arith.addf %569, %573 : vector<2x1x256xf32>
    %575 = vector.extract_strided_slice %529 {offsets = [0, 3, 0], sizes = [2, 1, 256], strides = [1, 1, 1]} : vector<2x4x256xf32> to vector<2x1x256xf32>
    %c61 = arith.constant 61 : index
    %576 = memref.load %arg2[%c61] : memref<104xf32, #tpu.memory_space<smem>>
    %577 = vector.broadcast %576 : f32 to vector<2x1x256xf32>
    %578 = arith.mulf %575, %577 : vector<2x1x256xf32>
    %579 = arith.addf %574, %578 : vector<2x1x256xf32>
    %c65 = arith.constant 65 : index
    %580 = memref.load %arg2[%c65] : memref<104xf32, #tpu.memory_space<smem>>
    %581 = vector.broadcast %580 : f32 to vector<2x1x256xf32>
    %582 = arith.addf %579, %581 : vector<2x1x256xf32>
    %c1_i32_94 = arith.constant 1 : i32
    %583 = vector.broadcast %c1_i32_94 : i32 to vector<1x4x1xi32>
    %584 = arith.cmpi eq, %530, %583 : vector<1x4x1xi32>
    %cst_95 = arith.constant 0.000000e+00 : f32
    %585 = vector.shape_cast %584 : vector<1x4x1xi1> to vector<1x4x1xi1>
    %586 = vector.broadcast %585 : vector<1x4x1xi1> to vector<2x4x256xi1>
    %587 = vector.shape_cast %582 : vector<2x1x256xf32> to vector<2x1x256xf32>
    %588 = vector.broadcast %587 : vector<2x1x256xf32> to vector<2x4x256xf32>
    %589 = vector.broadcast %cst_95 : f32 to vector<2x4x256xf32>
    %590 = arith.select %586, %588, %589 : vector<2x4x256xi1>, vector<2x4x256xf32>
    %591 = arith.addf %560, %590 : vector<2x4x256xf32>
    %592 = vector.extract_strided_slice %529 {offsets = [0, 0, 0], sizes = [2, 1, 256], strides = [1, 1, 1]} : vector<2x4x256xf32> to vector<2x1x256xf32>
    %c50 = arith.constant 50 : index
    %593 = memref.load %arg2[%c50] : memref<104xf32, #tpu.memory_space<smem>>
    %594 = vector.broadcast %593 : f32 to vector<2x1x256xf32>
    %595 = arith.mulf %592, %594 : vector<2x1x256xf32>
    %596 = vector.extract_strided_slice %529 {offsets = [0, 1, 0], sizes = [2, 1, 256], strides = [1, 1, 1]} : vector<2x4x256xf32> to vector<2x1x256xf32>
    %c54 = arith.constant 54 : index
    %597 = memref.load %arg2[%c54] : memref<104xf32, #tpu.memory_space<smem>>
    %598 = vector.broadcast %597 : f32 to vector<2x1x256xf32>
    %599 = arith.mulf %596, %598 : vector<2x1x256xf32>
    %600 = arith.addf %595, %599 : vector<2x1x256xf32>
    %601 = vector.extract_strided_slice %529 {offsets = [0, 2, 0], sizes = [2, 1, 256], strides = [1, 1, 1]} : vector<2x4x256xf32> to vector<2x1x256xf32>
    %c58 = arith.constant 58 : index
    %602 = memref.load %arg2[%c58] : memref<104xf32, #tpu.memory_space<smem>>
    %603 = vector.broadcast %602 : f32 to vector<2x1x256xf32>
    %604 = arith.mulf %601, %603 : vector<2x1x256xf32>
    %605 = arith.addf %600, %604 : vector<2x1x256xf32>
    %606 = vector.extract_strided_slice %529 {offsets = [0, 3, 0], sizes = [2, 1, 256], strides = [1, 1, 1]} : vector<2x4x256xf32> to vector<2x1x256xf32>
    %c62 = arith.constant 62 : index
    %607 = memref.load %arg2[%c62] : memref<104xf32, #tpu.memory_space<smem>>
    %608 = vector.broadcast %607 : f32 to vector<2x1x256xf32>
    %609 = arith.mulf %606, %608 : vector<2x1x256xf32>
    %610 = arith.addf %605, %609 : vector<2x1x256xf32>
    %c66 = arith.constant 66 : index
    %611 = memref.load %arg2[%c66] : memref<104xf32, #tpu.memory_space<smem>>
    %612 = vector.broadcast %611 : f32 to vector<2x1x256xf32>
    %613 = arith.addf %610, %612 : vector<2x1x256xf32>
    %c2_i32_96 = arith.constant 2 : i32
    %614 = vector.broadcast %c2_i32_96 : i32 to vector<1x4x1xi32>
    %615 = arith.cmpi eq, %530, %614 : vector<1x4x1xi32>
    %cst_97 = arith.constant 0.000000e+00 : f32
    %616 = vector.shape_cast %615 : vector<1x4x1xi1> to vector<1x4x1xi1>
    %617 = vector.broadcast %616 : vector<1x4x1xi1> to vector<2x4x256xi1>
    %618 = vector.shape_cast %613 : vector<2x1x256xf32> to vector<2x1x256xf32>
    %619 = vector.broadcast %618 : vector<2x1x256xf32> to vector<2x4x256xf32>
    %620 = vector.broadcast %cst_97 : f32 to vector<2x4x256xf32>
    %621 = arith.select %617, %619, %620 : vector<2x4x256xi1>, vector<2x4x256xf32>
    %622 = arith.addf %591, %621 : vector<2x4x256xf32>
    %623 = vector.extract_strided_slice %529 {offsets = [0, 0, 0], sizes = [2, 1, 256], strides = [1, 1, 1]} : vector<2x4x256xf32> to vector<2x1x256xf32>
    %c51 = arith.constant 51 : index
    %624 = memref.load %arg2[%c51] : memref<104xf32, #tpu.memory_space<smem>>
    %625 = vector.broadcast %624 : f32 to vector<2x1x256xf32>
    %626 = arith.mulf %623, %625 : vector<2x1x256xf32>
    %627 = vector.extract_strided_slice %529 {offsets = [0, 1, 0], sizes = [2, 1, 256], strides = [1, 1, 1]} : vector<2x4x256xf32> to vector<2x1x256xf32>
    %c55 = arith.constant 55 : index
    %628 = memref.load %arg2[%c55] : memref<104xf32, #tpu.memory_space<smem>>
    %629 = vector.broadcast %628 : f32 to vector<2x1x256xf32>
    %630 = arith.mulf %627, %629 : vector<2x1x256xf32>
    %631 = arith.addf %626, %630 : vector<2x1x256xf32>
    %632 = vector.extract_strided_slice %529 {offsets = [0, 2, 0], sizes = [2, 1, 256], strides = [1, 1, 1]} : vector<2x4x256xf32> to vector<2x1x256xf32>
    %c59 = arith.constant 59 : index
    %633 = memref.load %arg2[%c59] : memref<104xf32, #tpu.memory_space<smem>>
    %634 = vector.broadcast %633 : f32 to vector<2x1x256xf32>
    %635 = arith.mulf %632, %634 : vector<2x1x256xf32>
    %636 = arith.addf %631, %635 : vector<2x1x256xf32>
    %637 = vector.extract_strided_slice %529 {offsets = [0, 3, 0], sizes = [2, 1, 256], strides = [1, 1, 1]} : vector<2x4x256xf32> to vector<2x1x256xf32>
    %c63 = arith.constant 63 : index
    %638 = memref.load %arg2[%c63] : memref<104xf32, #tpu.memory_space<smem>>
    %639 = vector.broadcast %638 : f32 to vector<2x1x256xf32>
    %640 = arith.mulf %637, %639 : vector<2x1x256xf32>
    %641 = arith.addf %636, %640 : vector<2x1x256xf32>
    %c67 = arith.constant 67 : index
    %642 = memref.load %arg2[%c67] : memref<104xf32, #tpu.memory_space<smem>>
    %643 = vector.broadcast %642 : f32 to vector<2x1x256xf32>
    %644 = arith.addf %641, %643 : vector<2x1x256xf32>
    %c3_i32_98 = arith.constant 3 : i32
    %645 = vector.broadcast %c3_i32_98 : i32 to vector<1x4x1xi32>
    %646 = arith.cmpi eq, %530, %645 : vector<1x4x1xi32>
    %cst_99 = arith.constant 0.000000e+00 : f32
    %647 = vector.shape_cast %646 : vector<1x4x1xi1> to vector<1x4x1xi1>
    %648 = vector.broadcast %647 : vector<1x4x1xi1> to vector<2x4x256xi1>
    %649 = vector.shape_cast %644 : vector<2x1x256xf32> to vector<2x1x256xf32>
    %650 = vector.broadcast %649 : vector<2x1x256xf32> to vector<2x4x256xf32>
    %651 = vector.broadcast %cst_99 : f32 to vector<2x4x256xf32>
    %652 = arith.select %648, %650, %651 : vector<2x4x256xi1>, vector<2x4x256xf32>
    %653 = arith.addf %622, %652 : vector<2x4x256xf32>
    %654 = tpu.iota {dimensions = array<i32: 1>} : vector<1x4x1xi32>
    %655 = vector.extract_strided_slice %653 {offsets = [0, 0, 0], sizes = [2, 2, 256], strides = [1, 1, 1]} : vector<2x4x256xf32> to vector<2x2x256xf32>
    %cst_100 = arith.constant dense<0.000000e+00> : vector<2x2xf32>
    %656 = vector.multi_reduction <add>, %655, %cst_100 [2] : vector<2x2x256xf32> to vector<2x2xf32>
    %657 = vector.shape_cast %656 : vector<2x2xf32> to vector<2x2x1xf32>
    %cst_101 = arith.constant dense<0.000000e+00> : vector<2x1xf32>
    %658 = vector.multi_reduction <add>, %657, %cst_101 [1] : vector<2x2x1xf32> to vector<2x1xf32>
    %659 = vector.shape_cast %658 : vector<2x1xf32> to vector<2x1x1xf32>
    %cst_102 = arith.constant 5.120000e+02 : f32
    %660 = vector.broadcast %cst_102 : f32 to vector<2x1x1xf32>
    %661 = arith.divf %659, %660 : vector<2x1x1xf32>
    %662 = vector.broadcast %661 : vector<2x1x1xf32> to vector<2x2x256xf32>
    %663 = arith.subf %655, %662 : vector<2x2x256xf32>
    %664 = vector.broadcast %661 : vector<2x1x1xf32> to vector<2x2x256xf32>
    %665 = arith.subf %655, %664 : vector<2x2x256xf32>
    %666 = arith.mulf %663, %665 : vector<2x2x256xf32>
    %cst_103 = arith.constant dense<0.000000e+00> : vector<2x2xf32>
    %667 = vector.multi_reduction <add>, %666, %cst_103 [2] : vector<2x2x256xf32> to vector<2x2xf32>
    %668 = vector.shape_cast %667 : vector<2x2xf32> to vector<2x2x1xf32>
    %cst_104 = arith.constant dense<0.000000e+00> : vector<2x1xf32>
    %669 = vector.multi_reduction <add>, %668, %cst_104 [1] : vector<2x2x1xf32> to vector<2x1xf32>
    %670 = vector.shape_cast %669 : vector<2x1xf32> to vector<2x1x1xf32>
    %cst_105 = arith.constant 5.120000e+02 : f32
    %671 = vector.broadcast %cst_105 : f32 to vector<2x1x1xf32>
    %672 = arith.divf %670, %671 : vector<2x1x1xf32>
    %cst_106 = arith.constant 9.99999974E-6 : f32
    %673 = vector.broadcast %cst_106 : f32 to vector<2x1x1xf32>
    %674 = arith.addf %672, %673 : vector<2x1x1xf32>
    %675 = math.rsqrt %674 : vector<2x1x1xf32>
    %c0_i32_107 = arith.constant 0 : i32
    %676 = vector.broadcast %c0_i32_107 : i32 to vector<1x4x1xi32>
    %677 = arith.cmpi sge, %654, %676 : vector<1x4x1xi32>
    %c2_i32_108 = arith.constant 2 : i32
    %678 = vector.broadcast %c2_i32_108 : i32 to vector<1x4x1xi32>
    %679 = arith.cmpi slt, %654, %678 : vector<1x4x1xi32>
    %680 = arith.andi %677, %679 : vector<1x4x1xi1>
    %cst_109 = arith.constant 0.000000e+00 : f32
    %681 = vector.shape_cast %680 : vector<1x4x1xi1> to vector<1x4x1xi1>
    %682 = vector.broadcast %681 : vector<1x4x1xi1> to vector<2x4x1xi1>
    %683 = vector.shape_cast %661 : vector<2x1x1xf32> to vector<2x1x1xf32>
    %684 = vector.broadcast %683 : vector<2x1x1xf32> to vector<2x4x1xf32>
    %685 = vector.broadcast %cst_109 : f32 to vector<2x4x1xf32>
    %686 = arith.select %682, %684, %685 : vector<2x4x1xi1>, vector<2x4x1xf32>
    %cst_110 = arith.constant 0.000000e+00 : f32
    %687 = vector.shape_cast %680 : vector<1x4x1xi1> to vector<1x4x1xi1>
    %688 = vector.broadcast %687 : vector<1x4x1xi1> to vector<2x4x1xi1>
    %689 = vector.shape_cast %675 : vector<2x1x1xf32> to vector<2x1x1xf32>
    %690 = vector.broadcast %689 : vector<2x1x1xf32> to vector<2x4x1xf32>
    %691 = vector.broadcast %cst_110 : f32 to vector<2x4x1xf32>
    %692 = arith.select %688, %690, %691 : vector<2x4x1xi1>, vector<2x4x1xf32>
    %693 = vector.extract_strided_slice %653 {offsets = [0, 2, 0], sizes = [2, 2, 256], strides = [1, 1, 1]} : vector<2x4x256xf32> to vector<2x2x256xf32>
    %cst_111 = arith.constant dense<0.000000e+00> : vector<2x2xf32>
    %694 = vector.multi_reduction <add>, %693, %cst_111 [2] : vector<2x2x256xf32> to vector<2x2xf32>
    %695 = vector.shape_cast %694 : vector<2x2xf32> to vector<2x2x1xf32>
    %cst_112 = arith.constant dense<0.000000e+00> : vector<2x1xf32>
    %696 = vector.multi_reduction <add>, %695, %cst_112 [1] : vector<2x2x1xf32> to vector<2x1xf32>
    %697 = vector.shape_cast %696 : vector<2x1xf32> to vector<2x1x1xf32>
    %cst_113 = arith.constant 5.120000e+02 : f32
    %698 = vector.broadcast %cst_113 : f32 to vector<2x1x1xf32>
    %699 = arith.divf %697, %698 : vector<2x1x1xf32>
    %700 = vector.broadcast %699 : vector<2x1x1xf32> to vector<2x2x256xf32>
    %701 = arith.subf %693, %700 : vector<2x2x256xf32>
    %702 = vector.broadcast %699 : vector<2x1x1xf32> to vector<2x2x256xf32>
    %703 = arith.subf %693, %702 : vector<2x2x256xf32>
    %704 = arith.mulf %701, %703 : vector<2x2x256xf32>
    %cst_114 = arith.constant dense<0.000000e+00> : vector<2x2xf32>
    %705 = vector.multi_reduction <add>, %704, %cst_114 [2] : vector<2x2x256xf32> to vector<2x2xf32>
    %706 = vector.shape_cast %705 : vector<2x2xf32> to vector<2x2x1xf32>
    %cst_115 = arith.constant dense<0.000000e+00> : vector<2x1xf32>
    %707 = vector.multi_reduction <add>, %706, %cst_115 [1] : vector<2x2x1xf32> to vector<2x1xf32>
    %708 = vector.shape_cast %707 : vector<2x1xf32> to vector<2x1x1xf32>
    %cst_116 = arith.constant 5.120000e+02 : f32
    %709 = vector.broadcast %cst_116 : f32 to vector<2x1x1xf32>
    %710 = arith.divf %708, %709 : vector<2x1x1xf32>
    %cst_117 = arith.constant 9.99999974E-6 : f32
    %711 = vector.broadcast %cst_117 : f32 to vector<2x1x1xf32>
    %712 = arith.addf %710, %711 : vector<2x1x1xf32>
    %713 = math.rsqrt %712 : vector<2x1x1xf32>
    %c2_i32_118 = arith.constant 2 : i32
    %714 = vector.broadcast %c2_i32_118 : i32 to vector<1x4x1xi32>
    %715 = arith.cmpi sge, %654, %714 : vector<1x4x1xi32>
    %c4_i32_119 = arith.constant 4 : i32
    %716 = vector.broadcast %c4_i32_119 : i32 to vector<1x4x1xi32>
    %717 = arith.cmpi slt, %654, %716 : vector<1x4x1xi32>
    %718 = arith.andi %715, %717 : vector<1x4x1xi1>
    %cst_120 = arith.constant 0.000000e+00 : f32
    %719 = vector.shape_cast %718 : vector<1x4x1xi1> to vector<1x4x1xi1>
    %720 = vector.broadcast %719 : vector<1x4x1xi1> to vector<2x4x1xi1>
    %721 = vector.shape_cast %699 : vector<2x1x1xf32> to vector<2x1x1xf32>
    %722 = vector.broadcast %721 : vector<2x1x1xf32> to vector<2x4x1xf32>
    %723 = vector.broadcast %cst_120 : f32 to vector<2x4x1xf32>
    %724 = arith.select %720, %722, %723 : vector<2x4x1xi1>, vector<2x4x1xf32>
    %cst_121 = arith.constant 0.000000e+00 : f32
    %725 = vector.shape_cast %718 : vector<1x4x1xi1> to vector<1x4x1xi1>
    %726 = vector.broadcast %725 : vector<1x4x1xi1> to vector<2x4x1xi1>
    %727 = vector.shape_cast %713 : vector<2x1x1xf32> to vector<2x1x1xf32>
    %728 = vector.broadcast %727 : vector<2x1x1xf32> to vector<2x4x1xf32>
    %729 = vector.broadcast %cst_121 : f32 to vector<2x4x1xf32>
    %730 = arith.select %726, %728, %729 : vector<2x4x1xi1>, vector<2x4x1xf32>
    %731 = arith.addf %686, %724 : vector<2x4x1xf32>
    %732 = arith.addf %692, %730 : vector<2x4x1xf32>
    %c0_i32_122 = arith.constant 0 : i32
    %733 = vector.broadcast %c0_i32_122 : i32 to vector<1x4x1xi32>
    %734 = arith.cmpi eq, %654, %733 : vector<1x4x1xi32>
    %c68 = arith.constant 68 : index
    %735 = memref.load %arg2[%c68] : memref<104xf32, #tpu.memory_space<smem>>
    %cst_123 = arith.constant 0.000000e+00 : f32
    %736 = vector.broadcast %735 : f32 to vector<1x4x1xf32>
    %737 = vector.broadcast %cst_123 : f32 to vector<1x4x1xf32>
    %738 = arith.select %734, %736, %737 : vector<1x4x1xi1>, vector<1x4x1xf32>
    %c72 = arith.constant 72 : index
    %739 = memref.load %arg2[%c72] : memref<104xf32, #tpu.memory_space<smem>>
    %cst_124 = arith.constant 0.000000e+00 : f32
    %740 = vector.broadcast %739 : f32 to vector<1x4x1xf32>
    %741 = vector.broadcast %cst_124 : f32 to vector<1x4x1xf32>
    %742 = arith.select %734, %740, %741 : vector<1x4x1xi1>, vector<1x4x1xf32>
    %c1_i32_125 = arith.constant 1 : i32
    %743 = vector.broadcast %c1_i32_125 : i32 to vector<1x4x1xi32>
    %744 = arith.cmpi eq, %654, %743 : vector<1x4x1xi32>
    %c69 = arith.constant 69 : index
    %745 = memref.load %arg2[%c69] : memref<104xf32, #tpu.memory_space<smem>>
    %cst_126 = arith.constant 0.000000e+00 : f32
    %746 = vector.broadcast %745 : f32 to vector<1x4x1xf32>
    %747 = vector.broadcast %cst_126 : f32 to vector<1x4x1xf32>
    %748 = arith.select %744, %746, %747 : vector<1x4x1xi1>, vector<1x4x1xf32>
    %c73 = arith.constant 73 : index
    %749 = memref.load %arg2[%c73] : memref<104xf32, #tpu.memory_space<smem>>
    %cst_127 = arith.constant 0.000000e+00 : f32
    %750 = vector.broadcast %749 : f32 to vector<1x4x1xf32>
    %751 = vector.broadcast %cst_127 : f32 to vector<1x4x1xf32>
    %752 = arith.select %744, %750, %751 : vector<1x4x1xi1>, vector<1x4x1xf32>
    %753 = arith.addf %738, %748 : vector<1x4x1xf32>
    %754 = arith.addf %742, %752 : vector<1x4x1xf32>
    %c2_i32_128 = arith.constant 2 : i32
    %755 = vector.broadcast %c2_i32_128 : i32 to vector<1x4x1xi32>
    %756 = arith.cmpi eq, %654, %755 : vector<1x4x1xi32>
    %c70 = arith.constant 70 : index
    %757 = memref.load %arg2[%c70] : memref<104xf32, #tpu.memory_space<smem>>
    %cst_129 = arith.constant 0.000000e+00 : f32
    %758 = vector.broadcast %757 : f32 to vector<1x4x1xf32>
    %759 = vector.broadcast %cst_129 : f32 to vector<1x4x1xf32>
    %760 = arith.select %756, %758, %759 : vector<1x4x1xi1>, vector<1x4x1xf32>
    %c74 = arith.constant 74 : index
    %761 = memref.load %arg2[%c74] : memref<104xf32, #tpu.memory_space<smem>>
    %cst_130 = arith.constant 0.000000e+00 : f32
    %762 = vector.broadcast %761 : f32 to vector<1x4x1xf32>
    %763 = vector.broadcast %cst_130 : f32 to vector<1x4x1xf32>
    %764 = arith.select %756, %762, %763 : vector<1x4x1xi1>, vector<1x4x1xf32>
    %765 = arith.addf %753, %760 : vector<1x4x1xf32>
    %766 = arith.addf %754, %764 : vector<1x4x1xf32>
    %c3_i32_131 = arith.constant 3 : i32
    %767 = vector.broadcast %c3_i32_131 : i32 to vector<1x4x1xi32>
    %768 = arith.cmpi eq, %654, %767 : vector<1x4x1xi32>
    %c71 = arith.constant 71 : index
    %769 = memref.load %arg2[%c71] : memref<104xf32, #tpu.memory_space<smem>>
    %cst_132 = arith.constant 0.000000e+00 : f32
    %770 = vector.broadcast %769 : f32 to vector<1x4x1xf32>
    %771 = vector.broadcast %cst_132 : f32 to vector<1x4x1xf32>
    %772 = arith.select %768, %770, %771 : vector<1x4x1xi1>, vector<1x4x1xf32>
    %c75 = arith.constant 75 : index
    %773 = memref.load %arg2[%c75] : memref<104xf32, #tpu.memory_space<smem>>
    %cst_133 = arith.constant 0.000000e+00 : f32
    %774 = vector.broadcast %773 : f32 to vector<1x4x1xf32>
    %775 = vector.broadcast %cst_133 : f32 to vector<1x4x1xf32>
    %776 = arith.select %768, %774, %775 : vector<1x4x1xi1>, vector<1x4x1xf32>
    %777 = arith.addf %765, %772 : vector<1x4x1xf32>
    %778 = arith.addf %766, %776 : vector<1x4x1xf32>
    %779 = vector.broadcast %731 : vector<2x4x1xf32> to vector<2x4x256xf32>
    %780 = arith.subf %653, %779 : vector<2x4x256xf32>
    %781 = vector.broadcast %732 : vector<2x4x1xf32> to vector<2x4x256xf32>
    %782 = arith.mulf %780, %781 : vector<2x4x256xf32>
    %783 = vector.broadcast %777 : vector<1x4x1xf32> to vector<2x4x256xf32>
    %784 = arith.mulf %782, %783 : vector<2x4x256xf32>
    %785 = vector.broadcast %778 : vector<1x4x1xf32> to vector<2x4x256xf32>
    %786 = arith.addf %784, %785 : vector<2x4x256xf32>
    %cst_134 = arith.constant 0.000000e+00 : f32
    %787 = vector.broadcast %cst_134 : f32 to vector<2x4x256xf32>
    %788 = arith.maximumf %786, %787 : vector<2x4x256xf32>
    %c2_i32_135 = arith.constant 2 : i32
    %789 = vector.broadcast %c2_i32_135 : i32 to vector<1x1x256xi32>
    %790 = arith.andi %1, %789 : vector<1x1x256xi32>
    %c0_i32_136 = arith.constant 0 : i32
    %791 = vector.broadcast %c0_i32_136 : i32 to vector<1x1x256xi32>
    %792 = arith.cmpi eq, %790, %791 : vector<1x1x256xi32>
    %793 = tpu.concatenate %246, %246 in 2 : vector<2x4x256xf32>, vector<2x4x256xf32> -> vector<2x4x512xf32>
    %794 = vector.extract_strided_slice %793 {offsets = [0, 0, 2], sizes = [2, 4, 256], strides = [1, 1, 1]} : vector<2x4x512xf32> to vector<2x4x256xf32>
    %795 = vector.extract_strided_slice %793 {offsets = [0, 0, 254], sizes = [2, 4, 256], strides = [1, 1, 1]} : vector<2x4x512xf32> to vector<2x4x256xf32>
    %796 = vector.shape_cast %792 : vector<1x1x256xi1> to vector<1x1x256xi1>
    %797 = vector.broadcast %796 : vector<1x1x256xi1> to vector<2x4x256xi1>
    %798 = arith.select %797, %794, %795 : vector<2x4x256xi1>, vector<2x4x256xf32>
    %799 = arith.addf %246, %798 : vector<2x4x256xf32>
    %cst_137 = arith.constant 5.000000e-01 : f32
    %800 = vector.broadcast %cst_137 : f32 to vector<2x4x256xf32>
    %801 = arith.mulf %799, %800 : vector<2x4x256xf32>
    %c32_i32_138 = arith.constant 32 : i32
    %802 = vector.broadcast %c32_i32_138 : i32 to vector<1x1x256xi32>
    %803 = arith.andi %1, %802 : vector<1x1x256xi32>
    %c0_i32_139 = arith.constant 0 : i32
    %804 = vector.broadcast %c0_i32_139 : i32 to vector<1x1x256xi32>
    %805 = arith.cmpi eq, %803, %804 : vector<1x1x256xi32>
    %806 = tpu.concatenate %801, %801 in 2 : vector<2x4x256xf32>, vector<2x4x256xf32> -> vector<2x4x512xf32>
    %807 = vector.extract_strided_slice %806 {offsets = [0, 0, 32], sizes = [2, 4, 256], strides = [1, 1, 1]} : vector<2x4x512xf32> to vector<2x4x256xf32>
    %808 = vector.extract_strided_slice %806 {offsets = [0, 0, 224], sizes = [2, 4, 256], strides = [1, 1, 1]} : vector<2x4x512xf32> to vector<2x4x256xf32>
    %809 = vector.shape_cast %805 : vector<1x1x256xi1> to vector<1x1x256xi1>
    %810 = vector.broadcast %809 : vector<1x1x256xi1> to vector<2x4x256xi1>
    %811 = arith.select %810, %807, %808 : vector<2x4x256xi1>, vector<2x4x256xf32>
    %812 = arith.addf %801, %811 : vector<2x4x256xf32>
    %cst_140 = arith.constant 5.000000e-01 : f32
    %813 = vector.broadcast %cst_140 : f32 to vector<2x4x256xf32>
    %814 = arith.mulf %812, %813 : vector<2x4x256xf32>
    %815 = tpu.iota {dimensions = array<i32: 1>} : vector<1x4x1xi32>
    %816 = vector.extract_strided_slice %814 {offsets = [0, 0, 0], sizes = [2, 1, 256], strides = [1, 1, 1]} : vector<2x4x256xf32> to vector<2x1x256xf32>
    %c76 = arith.constant 76 : index
    %817 = memref.load %arg2[%c76] : memref<104xf32, #tpu.memory_space<smem>>
    %818 = vector.broadcast %817 : f32 to vector<2x1x256xf32>
    %819 = arith.mulf %816, %818 : vector<2x1x256xf32>
    %820 = vector.extract_strided_slice %814 {offsets = [0, 1, 0], sizes = [2, 1, 256], strides = [1, 1, 1]} : vector<2x4x256xf32> to vector<2x1x256xf32>
    %c80 = arith.constant 80 : index
    %821 = memref.load %arg2[%c80] : memref<104xf32, #tpu.memory_space<smem>>
    %822 = vector.broadcast %821 : f32 to vector<2x1x256xf32>
    %823 = arith.mulf %820, %822 : vector<2x1x256xf32>
    %824 = arith.addf %819, %823 : vector<2x1x256xf32>
    %825 = vector.extract_strided_slice %814 {offsets = [0, 2, 0], sizes = [2, 1, 256], strides = [1, 1, 1]} : vector<2x4x256xf32> to vector<2x1x256xf32>
    %c84 = arith.constant 84 : index
    %826 = memref.load %arg2[%c84] : memref<104xf32, #tpu.memory_space<smem>>
    %827 = vector.broadcast %826 : f32 to vector<2x1x256xf32>
    %828 = arith.mulf %825, %827 : vector<2x1x256xf32>
    %829 = arith.addf %824, %828 : vector<2x1x256xf32>
    %830 = vector.extract_strided_slice %814 {offsets = [0, 3, 0], sizes = [2, 1, 256], strides = [1, 1, 1]} : vector<2x4x256xf32> to vector<2x1x256xf32>
    %c88 = arith.constant 88 : index
    %831 = memref.load %arg2[%c88] : memref<104xf32, #tpu.memory_space<smem>>
    %832 = vector.broadcast %831 : f32 to vector<2x1x256xf32>
    %833 = arith.mulf %830, %832 : vector<2x1x256xf32>
    %834 = arith.addf %829, %833 : vector<2x1x256xf32>
    %c92 = arith.constant 92 : index
    %835 = memref.load %arg2[%c92] : memref<104xf32, #tpu.memory_space<smem>>
    %836 = vector.broadcast %835 : f32 to vector<2x1x256xf32>
    %837 = arith.addf %834, %836 : vector<2x1x256xf32>
    %c0_i32_141 = arith.constant 0 : i32
    %838 = vector.broadcast %c0_i32_141 : i32 to vector<1x4x1xi32>
    %839 = arith.cmpi eq, %815, %838 : vector<1x4x1xi32>
    %cst_142 = arith.constant 0.000000e+00 : f32
    %840 = vector.shape_cast %839 : vector<1x4x1xi1> to vector<1x4x1xi1>
    %841 = vector.broadcast %840 : vector<1x4x1xi1> to vector<2x4x256xi1>
    %842 = vector.shape_cast %837 : vector<2x1x256xf32> to vector<2x1x256xf32>
    %843 = vector.broadcast %842 : vector<2x1x256xf32> to vector<2x4x256xf32>
    %844 = vector.broadcast %cst_142 : f32 to vector<2x4x256xf32>
    %845 = arith.select %841, %843, %844 : vector<2x4x256xi1>, vector<2x4x256xf32>
    %846 = vector.extract_strided_slice %814 {offsets = [0, 0, 0], sizes = [2, 1, 256], strides = [1, 1, 1]} : vector<2x4x256xf32> to vector<2x1x256xf32>
    %c77 = arith.constant 77 : index
    %847 = memref.load %arg2[%c77] : memref<104xf32, #tpu.memory_space<smem>>
    %848 = vector.broadcast %847 : f32 to vector<2x1x256xf32>
    %849 = arith.mulf %846, %848 : vector<2x1x256xf32>
    %850 = vector.extract_strided_slice %814 {offsets = [0, 1, 0], sizes = [2, 1, 256], strides = [1, 1, 1]} : vector<2x4x256xf32> to vector<2x1x256xf32>
    %c81 = arith.constant 81 : index
    %851 = memref.load %arg2[%c81] : memref<104xf32, #tpu.memory_space<smem>>
    %852 = vector.broadcast %851 : f32 to vector<2x1x256xf32>
    %853 = arith.mulf %850, %852 : vector<2x1x256xf32>
    %854 = arith.addf %849, %853 : vector<2x1x256xf32>
    %855 = vector.extract_strided_slice %814 {offsets = [0, 2, 0], sizes = [2, 1, 256], strides = [1, 1, 1]} : vector<2x4x256xf32> to vector<2x1x256xf32>
    %c85 = arith.constant 85 : index
    %856 = memref.load %arg2[%c85] : memref<104xf32, #tpu.memory_space<smem>>
    %857 = vector.broadcast %856 : f32 to vector<2x1x256xf32>
    %858 = arith.mulf %855, %857 : vector<2x1x256xf32>
    %859 = arith.addf %854, %858 : vector<2x1x256xf32>
    %860 = vector.extract_strided_slice %814 {offsets = [0, 3, 0], sizes = [2, 1, 256], strides = [1, 1, 1]} : vector<2x4x256xf32> to vector<2x1x256xf32>
    %c89 = arith.constant 89 : index
    %861 = memref.load %arg2[%c89] : memref<104xf32, #tpu.memory_space<smem>>
    %862 = vector.broadcast %861 : f32 to vector<2x1x256xf32>
    %863 = arith.mulf %860, %862 : vector<2x1x256xf32>
    %864 = arith.addf %859, %863 : vector<2x1x256xf32>
    %c93 = arith.constant 93 : index
    %865 = memref.load %arg2[%c93] : memref<104xf32, #tpu.memory_space<smem>>
    %866 = vector.broadcast %865 : f32 to vector<2x1x256xf32>
    %867 = arith.addf %864, %866 : vector<2x1x256xf32>
    %c1_i32_143 = arith.constant 1 : i32
    %868 = vector.broadcast %c1_i32_143 : i32 to vector<1x4x1xi32>
    %869 = arith.cmpi eq, %815, %868 : vector<1x4x1xi32>
    %cst_144 = arith.constant 0.000000e+00 : f32
    %870 = vector.shape_cast %869 : vector<1x4x1xi1> to vector<1x4x1xi1>
    %871 = vector.broadcast %870 : vector<1x4x1xi1> to vector<2x4x256xi1>
    %872 = vector.shape_cast %867 : vector<2x1x256xf32> to vector<2x1x256xf32>
    %873 = vector.broadcast %872 : vector<2x1x256xf32> to vector<2x4x256xf32>
    %874 = vector.broadcast %cst_144 : f32 to vector<2x4x256xf32>
    %875 = arith.select %871, %873, %874 : vector<2x4x256xi1>, vector<2x4x256xf32>
    %876 = arith.addf %845, %875 : vector<2x4x256xf32>
    %877 = vector.extract_strided_slice %814 {offsets = [0, 0, 0], sizes = [2, 1, 256], strides = [1, 1, 1]} : vector<2x4x256xf32> to vector<2x1x256xf32>
    %c78 = arith.constant 78 : index
    %878 = memref.load %arg2[%c78] : memref<104xf32, #tpu.memory_space<smem>>
    %879 = vector.broadcast %878 : f32 to vector<2x1x256xf32>
    %880 = arith.mulf %877, %879 : vector<2x1x256xf32>
    %881 = vector.extract_strided_slice %814 {offsets = [0, 1, 0], sizes = [2, 1, 256], strides = [1, 1, 1]} : vector<2x4x256xf32> to vector<2x1x256xf32>
    %c82 = arith.constant 82 : index
    %882 = memref.load %arg2[%c82] : memref<104xf32, #tpu.memory_space<smem>>
    %883 = vector.broadcast %882 : f32 to vector<2x1x256xf32>
    %884 = arith.mulf %881, %883 : vector<2x1x256xf32>
    %885 = arith.addf %880, %884 : vector<2x1x256xf32>
    %886 = vector.extract_strided_slice %814 {offsets = [0, 2, 0], sizes = [2, 1, 256], strides = [1, 1, 1]} : vector<2x4x256xf32> to vector<2x1x256xf32>
    %c86 = arith.constant 86 : index
    %887 = memref.load %arg2[%c86] : memref<104xf32, #tpu.memory_space<smem>>
    %888 = vector.broadcast %887 : f32 to vector<2x1x256xf32>
    %889 = arith.mulf %886, %888 : vector<2x1x256xf32>
    %890 = arith.addf %885, %889 : vector<2x1x256xf32>
    %891 = vector.extract_strided_slice %814 {offsets = [0, 3, 0], sizes = [2, 1, 256], strides = [1, 1, 1]} : vector<2x4x256xf32> to vector<2x1x256xf32>
    %c90 = arith.constant 90 : index
    %892 = memref.load %arg2[%c90] : memref<104xf32, #tpu.memory_space<smem>>
    %893 = vector.broadcast %892 : f32 to vector<2x1x256xf32>
    %894 = arith.mulf %891, %893 : vector<2x1x256xf32>
    %895 = arith.addf %890, %894 : vector<2x1x256xf32>
    %c94 = arith.constant 94 : index
    %896 = memref.load %arg2[%c94] : memref<104xf32, #tpu.memory_space<smem>>
    %897 = vector.broadcast %896 : f32 to vector<2x1x256xf32>
    %898 = arith.addf %895, %897 : vector<2x1x256xf32>
    %c2_i32_145 = arith.constant 2 : i32
    %899 = vector.broadcast %c2_i32_145 : i32 to vector<1x4x1xi32>
    %900 = arith.cmpi eq, %815, %899 : vector<1x4x1xi32>
    %cst_146 = arith.constant 0.000000e+00 : f32
    %901 = vector.shape_cast %900 : vector<1x4x1xi1> to vector<1x4x1xi1>
    %902 = vector.broadcast %901 : vector<1x4x1xi1> to vector<2x4x256xi1>
    %903 = vector.shape_cast %898 : vector<2x1x256xf32> to vector<2x1x256xf32>
    %904 = vector.broadcast %903 : vector<2x1x256xf32> to vector<2x4x256xf32>
    %905 = vector.broadcast %cst_146 : f32 to vector<2x4x256xf32>
    %906 = arith.select %902, %904, %905 : vector<2x4x256xi1>, vector<2x4x256xf32>
    %907 = arith.addf %876, %906 : vector<2x4x256xf32>
    %908 = vector.extract_strided_slice %814 {offsets = [0, 0, 0], sizes = [2, 1, 256], strides = [1, 1, 1]} : vector<2x4x256xf32> to vector<2x1x256xf32>
    %c79 = arith.constant 79 : index
    %909 = memref.load %arg2[%c79] : memref<104xf32, #tpu.memory_space<smem>>
    %910 = vector.broadcast %909 : f32 to vector<2x1x256xf32>
    %911 = arith.mulf %908, %910 : vector<2x1x256xf32>
    %912 = vector.extract_strided_slice %814 {offsets = [0, 1, 0], sizes = [2, 1, 256], strides = [1, 1, 1]} : vector<2x4x256xf32> to vector<2x1x256xf32>
    %c83 = arith.constant 83 : index
    %913 = memref.load %arg2[%c83] : memref<104xf32, #tpu.memory_space<smem>>
    %914 = vector.broadcast %913 : f32 to vector<2x1x256xf32>
    %915 = arith.mulf %912, %914 : vector<2x1x256xf32>
    %916 = arith.addf %911, %915 : vector<2x1x256xf32>
    %917 = vector.extract_strided_slice %814 {offsets = [0, 2, 0], sizes = [2, 1, 256], strides = [1, 1, 1]} : vector<2x4x256xf32> to vector<2x1x256xf32>
    %c87 = arith.constant 87 : index
    %918 = memref.load %arg2[%c87] : memref<104xf32, #tpu.memory_space<smem>>
    %919 = vector.broadcast %918 : f32 to vector<2x1x256xf32>
    %920 = arith.mulf %917, %919 : vector<2x1x256xf32>
    %921 = arith.addf %916, %920 : vector<2x1x256xf32>
    %922 = vector.extract_strided_slice %814 {offsets = [0, 3, 0], sizes = [2, 1, 256], strides = [1, 1, 1]} : vector<2x4x256xf32> to vector<2x1x256xf32>
    %c91 = arith.constant 91 : index
    %923 = memref.load %arg2[%c91] : memref<104xf32, #tpu.memory_space<smem>>
    %924 = vector.broadcast %923 : f32 to vector<2x1x256xf32>
    %925 = arith.mulf %922, %924 : vector<2x1x256xf32>
    %926 = arith.addf %921, %925 : vector<2x1x256xf32>
    %c95 = arith.constant 95 : index
    %927 = memref.load %arg2[%c95] : memref<104xf32, #tpu.memory_space<smem>>
    %928 = vector.broadcast %927 : f32 to vector<2x1x256xf32>
    %929 = arith.addf %926, %928 : vector<2x1x256xf32>
    %c3_i32_147 = arith.constant 3 : i32
    %930 = vector.broadcast %c3_i32_147 : i32 to vector<1x4x1xi32>
    %931 = arith.cmpi eq, %815, %930 : vector<1x4x1xi32>
    %cst_148 = arith.constant 0.000000e+00 : f32
    %932 = vector.shape_cast %931 : vector<1x4x1xi1> to vector<1x4x1xi1>
    %933 = vector.broadcast %932 : vector<1x4x1xi1> to vector<2x4x256xi1>
    %934 = vector.shape_cast %929 : vector<2x1x256xf32> to vector<2x1x256xf32>
    %935 = vector.broadcast %934 : vector<2x1x256xf32> to vector<2x4x256xf32>
    %936 = vector.broadcast %cst_148 : f32 to vector<2x4x256xf32>
    %937 = arith.select %933, %935, %936 : vector<2x4x256xi1>, vector<2x4x256xf32>
    %938 = arith.addf %907, %937 : vector<2x4x256xf32>
    %939 = tpu.iota {dimensions = array<i32: 1>} : vector<1x4x1xi32>
    %940 = vector.extract_strided_slice %938 {offsets = [0, 0, 0], sizes = [2, 1, 256], strides = [1, 1, 1]} : vector<2x4x256xf32> to vector<2x1x256xf32>
    %cst_149 = arith.constant dense<0.000000e+00> : vector<2x1xf32>
    %941 = vector.multi_reduction <add>, %940, %cst_149 [2] : vector<2x1x256xf32> to vector<2x1xf32>
    %942 = vector.shape_cast %941 : vector<2x1xf32> to vector<2x1x1xf32>
    %cst_150 = arith.constant dense<0.000000e+00> : vector<2x1xf32>
    %943 = vector.multi_reduction <add>, %942, %cst_150 [1] : vector<2x1x1xf32> to vector<2x1xf32>
    %944 = vector.shape_cast %943 : vector<2x1xf32> to vector<2x1x1xf32>
    %cst_151 = arith.constant dense<0.000000e+00> : vector<1x1xf32>
    %945 = vector.multi_reduction <add>, %944, %cst_151 [0] : vector<2x1x1xf32> to vector<1x1xf32>
    %946 = vector.shape_cast %945 : vector<1x1xf32> to vector<1x1x1xf32>
    %cst_152 = arith.constant 5.120000e+02 : f32
    %947 = vector.broadcast %cst_152 : f32 to vector<1x1x1xf32>
    %948 = arith.divf %946, %947 : vector<1x1x1xf32>
    %949 = vector.broadcast %948 : vector<1x1x1xf32> to vector<2x1x256xf32>
    %950 = arith.subf %940, %949 : vector<2x1x256xf32>
    %951 = vector.broadcast %948 : vector<1x1x1xf32> to vector<2x1x256xf32>
    %952 = arith.subf %940, %951 : vector<2x1x256xf32>
    %953 = arith.mulf %950, %952 : vector<2x1x256xf32>
    %cst_153 = arith.constant dense<0.000000e+00> : vector<2x1xf32>
    %954 = vector.multi_reduction <add>, %953, %cst_153 [2] : vector<2x1x256xf32> to vector<2x1xf32>
    %955 = vector.shape_cast %954 : vector<2x1xf32> to vector<2x1x1xf32>
    %cst_154 = arith.constant dense<0.000000e+00> : vector<2x1xf32>
    %956 = vector.multi_reduction <add>, %955, %cst_154 [1] : vector<2x1x1xf32> to vector<2x1xf32>
    %957 = vector.shape_cast %956 : vector<2x1xf32> to vector<2x1x1xf32>
    %cst_155 = arith.constant dense<0.000000e+00> : vector<1x1xf32>
    %958 = vector.multi_reduction <add>, %957, %cst_155 [0] : vector<2x1x1xf32> to vector<1x1xf32>
    %959 = vector.shape_cast %958 : vector<1x1xf32> to vector<1x1x1xf32>
    %cst_156 = arith.constant 5.120000e+02 : f32
    %960 = vector.broadcast %cst_156 : f32 to vector<1x1x1xf32>
    %961 = arith.divf %959, %960 : vector<1x1x1xf32>
    %cst_157 = arith.constant 9.99999974E-6 : f32
    %962 = vector.broadcast %cst_157 : f32 to vector<1x1x1xf32>
    %963 = arith.addf %961, %962 : vector<1x1x1xf32>
    %964 = math.rsqrt %963 : vector<1x1x1xf32>
    %c0_i32_158 = arith.constant 0 : i32
    %965 = vector.broadcast %c0_i32_158 : i32 to vector<1x4x1xi32>
    %966 = arith.cmpi eq, %939, %965 : vector<1x4x1xi32>
    %cst_159 = arith.constant 0.000000e+00 : f32
    %967 = vector.shape_cast %948 : vector<1x1x1xf32> to vector<1x1x1xf32>
    %968 = vector.broadcast %967 : vector<1x1x1xf32> to vector<1x4x1xf32>
    %969 = vector.broadcast %cst_159 : f32 to vector<1x4x1xf32>
    %970 = arith.select %966, %968, %969 : vector<1x4x1xi1>, vector<1x4x1xf32>
    %cst_160 = arith.constant 0.000000e+00 : f32
    %971 = vector.shape_cast %964 : vector<1x1x1xf32> to vector<1x1x1xf32>
    %972 = vector.broadcast %971 : vector<1x1x1xf32> to vector<1x4x1xf32>
    %973 = vector.broadcast %cst_160 : f32 to vector<1x4x1xf32>
    %974 = arith.select %966, %972, %973 : vector<1x4x1xi1>, vector<1x4x1xf32>
    %c96 = arith.constant 96 : index
    %975 = memref.load %arg2[%c96] : memref<104xf32, #tpu.memory_space<smem>>
    %cst_161 = arith.constant 0.000000e+00 : f32
    %976 = vector.broadcast %975 : f32 to vector<1x4x1xf32>
    %977 = vector.broadcast %cst_161 : f32 to vector<1x4x1xf32>
    %978 = arith.select %966, %976, %977 : vector<1x4x1xi1>, vector<1x4x1xf32>
    %c100 = arith.constant 100 : index
    %979 = memref.load %arg2[%c100] : memref<104xf32, #tpu.memory_space<smem>>
    %cst_162 = arith.constant 0.000000e+00 : f32
    %980 = vector.broadcast %979 : f32 to vector<1x4x1xf32>
    %981 = vector.broadcast %cst_162 : f32 to vector<1x4x1xf32>
    %982 = arith.select %966, %980, %981 : vector<1x4x1xi1>, vector<1x4x1xf32>
    %983 = vector.extract_strided_slice %938 {offsets = [0, 1, 0], sizes = [2, 1, 256], strides = [1, 1, 1]} : vector<2x4x256xf32> to vector<2x1x256xf32>
    %cst_163 = arith.constant dense<0.000000e+00> : vector<2x1xf32>
    %984 = vector.multi_reduction <add>, %983, %cst_163 [2] : vector<2x1x256xf32> to vector<2x1xf32>
    %985 = vector.shape_cast %984 : vector<2x1xf32> to vector<2x1x1xf32>
    %cst_164 = arith.constant dense<0.000000e+00> : vector<2x1xf32>
    %986 = vector.multi_reduction <add>, %985, %cst_164 [1] : vector<2x1x1xf32> to vector<2x1xf32>
    %987 = vector.shape_cast %986 : vector<2x1xf32> to vector<2x1x1xf32>
    %cst_165 = arith.constant dense<0.000000e+00> : vector<1x1xf32>
    %988 = vector.multi_reduction <add>, %987, %cst_165 [0] : vector<2x1x1xf32> to vector<1x1xf32>
    %989 = vector.shape_cast %988 : vector<1x1xf32> to vector<1x1x1xf32>
    %cst_166 = arith.constant 5.120000e+02 : f32
    %990 = vector.broadcast %cst_166 : f32 to vector<1x1x1xf32>
    %991 = arith.divf %989, %990 : vector<1x1x1xf32>
    %992 = vector.broadcast %991 : vector<1x1x1xf32> to vector<2x1x256xf32>
    %993 = arith.subf %983, %992 : vector<2x1x256xf32>
    %994 = vector.broadcast %991 : vector<1x1x1xf32> to vector<2x1x256xf32>
    %995 = arith.subf %983, %994 : vector<2x1x256xf32>
    %996 = arith.mulf %993, %995 : vector<2x1x256xf32>
    %cst_167 = arith.constant dense<0.000000e+00> : vector<2x1xf32>
    %997 = vector.multi_reduction <add>, %996, %cst_167 [2] : vector<2x1x256xf32> to vector<2x1xf32>
    %998 = vector.shape_cast %997 : vector<2x1xf32> to vector<2x1x1xf32>
    %cst_168 = arith.constant dense<0.000000e+00> : vector<2x1xf32>
    %999 = vector.multi_reduction <add>, %998, %cst_168 [1] : vector<2x1x1xf32> to vector<2x1xf32>
    %1000 = vector.shape_cast %999 : vector<2x1xf32> to vector<2x1x1xf32>
    %cst_169 = arith.constant dense<0.000000e+00> : vector<1x1xf32>
    %1001 = vector.multi_reduction <add>, %1000, %cst_169 [0] : vector<2x1x1xf32> to vector<1x1xf32>
    %1002 = vector.shape_cast %1001 : vector<1x1xf32> to vector<1x1x1xf32>
    %cst_170 = arith.constant 5.120000e+02 : f32
    %1003 = vector.broadcast %cst_170 : f32 to vector<1x1x1xf32>
    %1004 = arith.divf %1002, %1003 : vector<1x1x1xf32>
    %cst_171 = arith.constant 9.99999974E-6 : f32
    %1005 = vector.broadcast %cst_171 : f32 to vector<1x1x1xf32>
    %1006 = arith.addf %1004, %1005 : vector<1x1x1xf32>
    %1007 = math.rsqrt %1006 : vector<1x1x1xf32>
    %c1_i32_172 = arith.constant 1 : i32
    %1008 = vector.broadcast %c1_i32_172 : i32 to vector<1x4x1xi32>
    %1009 = arith.cmpi eq, %939, %1008 : vector<1x4x1xi32>
    %cst_173 = arith.constant 0.000000e+00 : f32
    %1010 = vector.shape_cast %991 : vector<1x1x1xf32> to vector<1x1x1xf32>
    %1011 = vector.broadcast %1010 : vector<1x1x1xf32> to vector<1x4x1xf32>
    %1012 = vector.broadcast %cst_173 : f32 to vector<1x4x1xf32>
    %1013 = arith.select %1009, %1011, %1012 : vector<1x4x1xi1>, vector<1x4x1xf32>
    %cst_174 = arith.constant 0.000000e+00 : f32
    %1014 = vector.shape_cast %1007 : vector<1x1x1xf32> to vector<1x1x1xf32>
    %1015 = vector.broadcast %1014 : vector<1x1x1xf32> to vector<1x4x1xf32>
    %1016 = vector.broadcast %cst_174 : f32 to vector<1x4x1xf32>
    %1017 = arith.select %1009, %1015, %1016 : vector<1x4x1xi1>, vector<1x4x1xf32>
    %c97 = arith.constant 97 : index
    %1018 = memref.load %arg2[%c97] : memref<104xf32, #tpu.memory_space<smem>>
    %cst_175 = arith.constant 0.000000e+00 : f32
    %1019 = vector.broadcast %1018 : f32 to vector<1x4x1xf32>
    %1020 = vector.broadcast %cst_175 : f32 to vector<1x4x1xf32>
    %1021 = arith.select %1009, %1019, %1020 : vector<1x4x1xi1>, vector<1x4x1xf32>
    %c101 = arith.constant 101 : index
    %1022 = memref.load %arg2[%c101] : memref<104xf32, #tpu.memory_space<smem>>
    %cst_176 = arith.constant 0.000000e+00 : f32
    %1023 = vector.broadcast %1022 : f32 to vector<1x4x1xf32>
    %1024 = vector.broadcast %cst_176 : f32 to vector<1x4x1xf32>
    %1025 = arith.select %1009, %1023, %1024 : vector<1x4x1xi1>, vector<1x4x1xf32>
    %1026 = arith.addf %970, %1013 : vector<1x4x1xf32>
    %1027 = arith.addf %974, %1017 : vector<1x4x1xf32>
    %1028 = arith.addf %978, %1021 : vector<1x4x1xf32>
    %1029 = arith.addf %982, %1025 : vector<1x4x1xf32>
    %1030 = vector.extract_strided_slice %938 {offsets = [0, 2, 0], sizes = [2, 1, 256], strides = [1, 1, 1]} : vector<2x4x256xf32> to vector<2x1x256xf32>
    %cst_177 = arith.constant dense<0.000000e+00> : vector<2x1xf32>
    %1031 = vector.multi_reduction <add>, %1030, %cst_177 [2] : vector<2x1x256xf32> to vector<2x1xf32>
    %1032 = vector.shape_cast %1031 : vector<2x1xf32> to vector<2x1x1xf32>
    %cst_178 = arith.constant dense<0.000000e+00> : vector<2x1xf32>
    %1033 = vector.multi_reduction <add>, %1032, %cst_178 [1] : vector<2x1x1xf32> to vector<2x1xf32>
    %1034 = vector.shape_cast %1033 : vector<2x1xf32> to vector<2x1x1xf32>
    %cst_179 = arith.constant dense<0.000000e+00> : vector<1x1xf32>
    %1035 = vector.multi_reduction <add>, %1034, %cst_179 [0] : vector<2x1x1xf32> to vector<1x1xf32>
    %1036 = vector.shape_cast %1035 : vector<1x1xf32> to vector<1x1x1xf32>
    %cst_180 = arith.constant 5.120000e+02 : f32
    %1037 = vector.broadcast %cst_180 : f32 to vector<1x1x1xf32>
    %1038 = arith.divf %1036, %1037 : vector<1x1x1xf32>
    %1039 = vector.broadcast %1038 : vector<1x1x1xf32> to vector<2x1x256xf32>
    %1040 = arith.subf %1030, %1039 : vector<2x1x256xf32>
    %1041 = vector.broadcast %1038 : vector<1x1x1xf32> to vector<2x1x256xf32>
    %1042 = arith.subf %1030, %1041 : vector<2x1x256xf32>
    %1043 = arith.mulf %1040, %1042 : vector<2x1x256xf32>
    %cst_181 = arith.constant dense<0.000000e+00> : vector<2x1xf32>
    %1044 = vector.multi_reduction <add>, %1043, %cst_181 [2] : vector<2x1x256xf32> to vector<2x1xf32>
    %1045 = vector.shape_cast %1044 : vector<2x1xf32> to vector<2x1x1xf32>
    %cst_182 = arith.constant dense<0.000000e+00> : vector<2x1xf32>
    %1046 = vector.multi_reduction <add>, %1045, %cst_182 [1] : vector<2x1x1xf32> to vector<2x1xf32>
    %1047 = vector.shape_cast %1046 : vector<2x1xf32> to vector<2x1x1xf32>
    %cst_183 = arith.constant dense<0.000000e+00> : vector<1x1xf32>
    %1048 = vector.multi_reduction <add>, %1047, %cst_183 [0] : vector<2x1x1xf32> to vector<1x1xf32>
    %1049 = vector.shape_cast %1048 : vector<1x1xf32> to vector<1x1x1xf32>
    %cst_184 = arith.constant 5.120000e+02 : f32
    %1050 = vector.broadcast %cst_184 : f32 to vector<1x1x1xf32>
    %1051 = arith.divf %1049, %1050 : vector<1x1x1xf32>
    %cst_185 = arith.constant 9.99999974E-6 : f32
    %1052 = vector.broadcast %cst_185 : f32 to vector<1x1x1xf32>
    %1053 = arith.addf %1051, %1052 : vector<1x1x1xf32>
    %1054 = math.rsqrt %1053 : vector<1x1x1xf32>
    %c2_i32_186 = arith.constant 2 : i32
    %1055 = vector.broadcast %c2_i32_186 : i32 to vector<1x4x1xi32>
    %1056 = arith.cmpi eq, %939, %1055 : vector<1x4x1xi32>
    %cst_187 = arith.constant 0.000000e+00 : f32
    %1057 = vector.shape_cast %1038 : vector<1x1x1xf32> to vector<1x1x1xf32>
    %1058 = vector.broadcast %1057 : vector<1x1x1xf32> to vector<1x4x1xf32>
    %1059 = vector.broadcast %cst_187 : f32 to vector<1x4x1xf32>
    %1060 = arith.select %1056, %1058, %1059 : vector<1x4x1xi1>, vector<1x4x1xf32>
    %cst_188 = arith.constant 0.000000e+00 : f32
    %1061 = vector.shape_cast %1054 : vector<1x1x1xf32> to vector<1x1x1xf32>
    %1062 = vector.broadcast %1061 : vector<1x1x1xf32> to vector<1x4x1xf32>
    %1063 = vector.broadcast %cst_188 : f32 to vector<1x4x1xf32>
    %1064 = arith.select %1056, %1062, %1063 : vector<1x4x1xi1>, vector<1x4x1xf32>
    %c98 = arith.constant 98 : index
    %1065 = memref.load %arg2[%c98] : memref<104xf32, #tpu.memory_space<smem>>
    %cst_189 = arith.constant 0.000000e+00 : f32
    %1066 = vector.broadcast %1065 : f32 to vector<1x4x1xf32>
    %1067 = vector.broadcast %cst_189 : f32 to vector<1x4x1xf32>
    %1068 = arith.select %1056, %1066, %1067 : vector<1x4x1xi1>, vector<1x4x1xf32>
    %c102 = arith.constant 102 : index
    %1069 = memref.load %arg2[%c102] : memref<104xf32, #tpu.memory_space<smem>>
    %cst_190 = arith.constant 0.000000e+00 : f32
    %1070 = vector.broadcast %1069 : f32 to vector<1x4x1xf32>
    %1071 = vector.broadcast %cst_190 : f32 to vector<1x4x1xf32>
    %1072 = arith.select %1056, %1070, %1071 : vector<1x4x1xi1>, vector<1x4x1xf32>
    %1073 = arith.addf %1026, %1060 : vector<1x4x1xf32>
    %1074 = arith.addf %1027, %1064 : vector<1x4x1xf32>
    %1075 = arith.addf %1028, %1068 : vector<1x4x1xf32>
    %1076 = arith.addf %1029, %1072 : vector<1x4x1xf32>
    %1077 = vector.extract_strided_slice %938 {offsets = [0, 3, 0], sizes = [2, 1, 256], strides = [1, 1, 1]} : vector<2x4x256xf32> to vector<2x1x256xf32>
    %cst_191 = arith.constant dense<0.000000e+00> : vector<2x1xf32>
    %1078 = vector.multi_reduction <add>, %1077, %cst_191 [2] : vector<2x1x256xf32> to vector<2x1xf32>
    %1079 = vector.shape_cast %1078 : vector<2x1xf32> to vector<2x1x1xf32>
    %cst_192 = arith.constant dense<0.000000e+00> : vector<2x1xf32>
    %1080 = vector.multi_reduction <add>, %1079, %cst_192 [1] : vector<2x1x1xf32> to vector<2x1xf32>
    %1081 = vector.shape_cast %1080 : vector<2x1xf32> to vector<2x1x1xf32>
    %cst_193 = arith.constant dense<0.000000e+00> : vector<1x1xf32>
    %1082 = vector.multi_reduction <add>, %1081, %cst_193 [0] : vector<2x1x1xf32> to vector<1x1xf32>
    %1083 = vector.shape_cast %1082 : vector<1x1xf32> to vector<1x1x1xf32>
    %cst_194 = arith.constant 5.120000e+02 : f32
    %1084 = vector.broadcast %cst_194 : f32 to vector<1x1x1xf32>
    %1085 = arith.divf %1083, %1084 : vector<1x1x1xf32>
    %1086 = vector.broadcast %1085 : vector<1x1x1xf32> to vector<2x1x256xf32>
    %1087 = arith.subf %1077, %1086 : vector<2x1x256xf32>
    %1088 = vector.broadcast %1085 : vector<1x1x1xf32> to vector<2x1x256xf32>
    %1089 = arith.subf %1077, %1088 : vector<2x1x256xf32>
    %1090 = arith.mulf %1087, %1089 : vector<2x1x256xf32>
    %cst_195 = arith.constant dense<0.000000e+00> : vector<2x1xf32>
    %1091 = vector.multi_reduction <add>, %1090, %cst_195 [2] : vector<2x1x256xf32> to vector<2x1xf32>
    %1092 = vector.shape_cast %1091 : vector<2x1xf32> to vector<2x1x1xf32>
    %cst_196 = arith.constant dense<0.000000e+00> : vector<2x1xf32>
    %1093 = vector.multi_reduction <add>, %1092, %cst_196 [1] : vector<2x1x1xf32> to vector<2x1xf32>
    %1094 = vector.shape_cast %1093 : vector<2x1xf32> to vector<2x1x1xf32>
    %cst_197 = arith.constant dense<0.000000e+00> : vector<1x1xf32>
    %1095 = vector.multi_reduction <add>, %1094, %cst_197 [0] : vector<2x1x1xf32> to vector<1x1xf32>
    %1096 = vector.shape_cast %1095 : vector<1x1xf32> to vector<1x1x1xf32>
    %cst_198 = arith.constant 5.120000e+02 : f32
    %1097 = vector.broadcast %cst_198 : f32 to vector<1x1x1xf32>
    %1098 = arith.divf %1096, %1097 : vector<1x1x1xf32>
    %cst_199 = arith.constant 9.99999974E-6 : f32
    %1099 = vector.broadcast %cst_199 : f32 to vector<1x1x1xf32>
    %1100 = arith.addf %1098, %1099 : vector<1x1x1xf32>
    %1101 = math.rsqrt %1100 : vector<1x1x1xf32>
    %c3_i32_200 = arith.constant 3 : i32
    %1102 = vector.broadcast %c3_i32_200 : i32 to vector<1x4x1xi32>
    %1103 = arith.cmpi eq, %939, %1102 : vector<1x4x1xi32>
    %cst_201 = arith.constant 0.000000e+00 : f32
    %1104 = vector.shape_cast %1085 : vector<1x1x1xf32> to vector<1x1x1xf32>
    %1105 = vector.broadcast %1104 : vector<1x1x1xf32> to vector<1x4x1xf32>
    %1106 = vector.broadcast %cst_201 : f32 to vector<1x4x1xf32>
    %1107 = arith.select %1103, %1105, %1106 : vector<1x4x1xi1>, vector<1x4x1xf32>
    %cst_202 = arith.constant 0.000000e+00 : f32
    %1108 = vector.shape_cast %1101 : vector<1x1x1xf32> to vector<1x1x1xf32>
    %1109 = vector.broadcast %1108 : vector<1x1x1xf32> to vector<1x4x1xf32>
    %1110 = vector.broadcast %cst_202 : f32 to vector<1x4x1xf32>
    %1111 = arith.select %1103, %1109, %1110 : vector<1x4x1xi1>, vector<1x4x1xf32>
    %c99 = arith.constant 99 : index
    %1112 = memref.load %arg2[%c99] : memref<104xf32, #tpu.memory_space<smem>>
    %cst_203 = arith.constant 0.000000e+00 : f32
    %1113 = vector.broadcast %1112 : f32 to vector<1x4x1xf32>
    %1114 = vector.broadcast %cst_203 : f32 to vector<1x4x1xf32>
    %1115 = arith.select %1103, %1113, %1114 : vector<1x4x1xi1>, vector<1x4x1xf32>
    %c103 = arith.constant 103 : index
    %1116 = memref.load %arg2[%c103] : memref<104xf32, #tpu.memory_space<smem>>
    %cst_204 = arith.constant 0.000000e+00 : f32
    %1117 = vector.broadcast %1116 : f32 to vector<1x4x1xf32>
    %1118 = vector.broadcast %cst_204 : f32 to vector<1x4x1xf32>
    %1119 = arith.select %1103, %1117, %1118 : vector<1x4x1xi1>, vector<1x4x1xf32>
    %1120 = arith.addf %1073, %1107 : vector<1x4x1xf32>
    %1121 = arith.addf %1074, %1111 : vector<1x4x1xf32>
    %1122 = arith.addf %1075, %1115 : vector<1x4x1xf32>
    %1123 = arith.addf %1076, %1119 : vector<1x4x1xf32>
    %1124 = vector.broadcast %1120 : vector<1x4x1xf32> to vector<2x4x256xf32>
    %1125 = arith.subf %938, %1124 : vector<2x4x256xf32>
    %1126 = vector.broadcast %1121 : vector<1x4x1xf32> to vector<2x4x256xf32>
    %1127 = arith.mulf %1125, %1126 : vector<2x4x256xf32>
    %1128 = vector.broadcast %1122 : vector<1x4x1xf32> to vector<2x4x256xf32>
    %1129 = arith.mulf %1127, %1128 : vector<2x4x256xf32>
    %1130 = vector.broadcast %1123 : vector<1x4x1xf32> to vector<2x4x256xf32>
    %1131 = arith.addf %1129, %1130 : vector<2x4x256xf32>
    %1132 = arith.addf %788, %1131 : vector<2x4x256xf32>
    %cst_205 = arith.constant 0.000000e+00 : f32
    %1133 = vector.broadcast %cst_205 : f32 to vector<2x4x256xf32>
    %1134 = arith.maximumf %1132, %1133 : vector<2x4x256xf32>
    %c0_206 = arith.constant 0 : index
    %c0_207 = arith.constant 0 : index
    %1135 = vector.load %arg1[%c0_206, %c0_207] : memref<1x256xf32, #tpu.memory_space<vmem>>, vector<1x256xf32>
    %1136 = vector.shape_cast %1135 : vector<1x256xf32> to vector<1x1x256xf32>
    %1137 = vector.broadcast %1136 : vector<1x1x256xf32> to vector<2x4x256xf32>
    %1138 = arith.mulf %1134, %1137 : vector<2x4x256xf32>
    %cst_208 = arith.constant dense<0.000000e+00> : vector<2x4xf32>
    %1139 = vector.multi_reduction <add>, %1138, %cst_208 [2] : vector<2x4x256xf32> to vector<2x4xf32>
    %c0_209 = arith.constant 0 : index
    %c0_210 = arith.constant 0 : index
    %1140 = vector.load %arg3[%c0_209, %c0_210] : memref<2x4xf32, #tpu.memory_space<vmem>>, vector<2x4xf32>
    tpu.vector_store %arg3[%c0_209, %c0_210], %1139 {strides = array<i32>} : memref<2x4xf32, #tpu.memory_space<vmem>>, vector<2x4xf32>,
    return
  }
}

</mosaic_0001>

<llo_original>
// kernel: encoder_forward.1
$region0: #{encoder_forward.1}
  #allocation0 [shape = 'u32[]', space=smem, size = 0x4, offset = 0x4, fixed_abs, tag = 'smem constant byte address 0x4 - core index']
  #allocation1 [shape = 'u32[144,128]{1,0:T(1,128)}', space=vmem, size = 0x12000, scoped, tag = 'internal scratch']
  %s0 = inlined_call_operand.vmem [shape: f32[2,2,256], index: 0, kind: input, shape index: {}]
  %s1 = inlined_call_operand.vmem [shape: f32[1,256], index: 1, kind: input, shape index: {}]
  %s2 = inlined_call_operand.vmem [shape: f32[104], index: 2, kind: input, shape index: {}]
  %s3 = inlined_call_operand.hbm [shape: f32[2,4], index: 3, kind: output, shape index: {}]
  %s4 = sld [smem:[#allocation0]]
  $region26: #{encoder_forward.1} parent=0
    _
  %s6 = ssub.s32 1, %s4
  %s7 = scalar_select 0, %s6, %s4
  $region1: #{encoder_forward.1} parent=0
    #allocation2 [shape = 'u8[512]{0}', space=smem, size = 0x200, scoped, tag = 'input window, operand 2, single buffered']
    #allocation3 [shape = 's32[1]{0}', space=sflag, size = 0x4, scoped, tag = 'scoped memory for encoder_forward.1']
    #allocation4 [shape = 's32[1]{0}', space=sflag, size = 0x4, scoped, tag = 'scoped memory for encoder_forward.1']
    #allocation5 [shape = 'u8[1024]{0}', space=vmem, size = 0x400, scoped, tag = 'output window, operand 0, single buffered']
    %8 = vsyncpa [#allocation4], 0
    %9 = vsyncpa [#allocation3], 0
    // Predicated region
    $region2: #{encoder_forward.1} parent=1 // pred_check
      _
    $region3: #{encoder_forward.1} parent=1 // pred_check_branch
      %11 = sbr.rel (0) target = $region5
    $region4: #{encoder_forward.1} parent=1 // pred_region
      _
    $region5: #{encoder_forward.1} parent=1 // pred_fallthru
      _
    // Predicated region
    $region6: #{encoder_forward.1} parent=1 // pred_check
      _
    $region7: #{encoder_forward.1} parent=1 // pred_check_branch
      %13 = sbr.rel (0) target = $region9
    $region8: #{encoder_forward.1} parent=1 // pred_region
      _
    $region9: #{encoder_forward.1} parent=1 // pred_fallthru
      _
    // Predicated region
    $region10: #{encoder_forward.1} parent=1 // pred_check
      _
    $region11: #{encoder_forward.1} parent=1 // pred_check_branch
      %15 = sbr.rel (0) target = $region13
    $region12: #{encoder_forward.1} parent=1 // pred_region
      %s17 = ssub.s32 16, 16
      %18 = vsyncadd [#allocation4], %s17
      %s20 = sshll.u32 %s2, 4
      %s21 = int_to_ptr.vmem [resolvable:$true] %s20
      %23 = dma.vmem_to_smem %s21, 16, [#allocation2], [#allocation4]
    $region13: #{encoder_forward.1} parent=1 // pred_fallthru
      _
    // Predicated region
    $region14: #{encoder_forward.1} parent=1 // pred_check
      _
    $region15: #{encoder_forward.1} parent=1 // pred_check_branch
      %25 = sbr.rel (0) target = $region17
    $region16: #{encoder_forward.1} parent=1 // pred_region
      %26 = dma.done [#allocation4], 16
    $region17: #{encoder_forward.1} parent=1 // pred_fallthru
      _
    %27 = sfence
    %v28 = vld [vmem:[%s0] sm:$0xf]
    %v29 = vld [vmem:[%s0 + $0x4] sm:$0xf]
    %v30 = vlaneseq
    %v31 = vand.u32 %v30, 127
    %v32 = vadd.s32 %v31, 128
    %v33 = vand.u32 %v31, 1
    %v34 = vand.u32 %v32, 1
    %vm35 = vcmp.eq.s32.totalorder %v33, 0
    %vm36 = vcmp.eq.s32.totalorder %v34, 0
    %v40 = vunpack.c.l.s4 1983009808
    %v41 = vunpack.c.0.s8 %v40
    %v42 = vlaneseq
    %v43 = vshrl.u32 %v42, 7
    %v44 = vsub.s32 %v41, %v43
    %v45 = vrot.slane %v28, %v44
    %v46 = vcombine.high %v45, %v45
    %v48 = vunpack.c.l.s4 1983009808
    %v49 = vunpack.c.0.s8 %v48
    %v50 = vlaneseq
    %v51 = vshrl.u32 %v50, 7
    %v52 = vsub.s32 %v49, %v51
    %v53 = vrot.slane %v29, %v52
    %v54 = vcombine.high %v53, %v53
    %v55 = vsel %vm35, 1, 0
    %v56 = vsel %vm36, 1, 0
    %vm57 = vcmp.eq.s32.totalorder %v55, 1
    %vm58 = vcmp.eq.s32.totalorder %v56, 1
    %59 = vrot.lane.b32.xlu0 %v45, 127
    %v60 = vpop.permute.xlu0 %59
    %61 = vrot.lane.b32.xlu0 %v46, 127
    %v62 = vpop.permute.xlu0 %61
    %63 = vrot.lane.b32.xlu0 %v53, 127
    %v64 = vpop.permute.xlu0 %63
    %65 = vrot.lane.b32.xlu0 %v54, 127
    %v66 = vpop.permute.xlu0 %65
    %vm67 = vcmask 1039360
    %v68 = vsel %vm67, %v60, %v62
    %v69 = vsel %vm67, %v62, %v60
    %v70 = vsel %vm67, %v64, %v66
    %v71 = vsel %vm67, %v66, %v64
    %76 = vrot.lane.b32.xlu0 %v46, 1
    %v77 = vpop.permute.xlu0 %76
    %78 = vrot.lane.b32.xlu0 %v45, 1
    %v79 = vpop.permute.xlu0 %78
    %80 = vrot.lane.b32.xlu0 %v54, 1
    %v81 = vpop.permute.xlu0 %80
    %82 = vrot.lane.b32.xlu0 %v53, 1
    %v83 = vpop.permute.xlu0 %82
    %vm84 = vcmask 7168
    %v85 = vsel %vm84, %v77, %v79
    %v86 = vsel %vm84, %v79, %v77
    %v87 = vsel %vm84, %v81, %v83
    %v88 = vsel %vm84, %v83, %v81
    %v93 = vsel %vm57, %v68, %v85
    %v94 = vsel %vm58, %v69, %v86
    %v95 = vsel %vm57, %v70, %v87
    %v96 = vsel %vm58, %v71, %v88
    %v101 = vcombine.low %v93, %v94
    %v103 = vunpack.c.l.s4 1983009808
    %v104 = vunpack.c.0.s8 %v103
    %v105 = vlaneseq
    %v106 = vshrl.u32 %v105, 7
    %v107 = vsub.s32 %v104, %v106
    %v108 = vrot.slane %v101, %v107
    %v109 = vcombine.low %v95, %v96
    %v111 = vunpack.c.l.s4 1983009808
    %v112 = vunpack.c.0.s8 %v111
    %v113 = vlaneseq
    %v114 = vshrl.u32 %v113, 7
    %v115 = vsub.s32 %v112, %v114
    %v116 = vrot.slane %v109, %v115
    %v119 = vadd.f32 %v28, %v108
    %v120 = vadd.f32 %v29, %v116
    %v121 = vmul.f32 %v119, 0.5
    %v122 = vmul.f32 %v120, 0.5
    %v123 = vand.u32 %v31, 16
    %v124 = vand.u32 %v32, 16
    %vm125 = vcmp.eq.s32.totalorder %v123, 0
    %vm126 = vcmp.eq.s32.totalorder %v124, 0
    %v130 = vunpack.c.l.s4 1983009808
    %v131 = vunpack.c.0.s8 %v130
    %v132 = vlaneseq
    %v133 = vshrl.u32 %v132, 7
    %v134 = vsub.s32 %v131, %v133
    %v135 = vrot.slane %v121, %v134
    %v136 = vcombine.high %v135, %v135
    %v138 = vunpack.c.l.s4 1983009808
    %v139 = vunpack.c.0.s8 %v138
    %v140 = vlaneseq
    %v141 = vshrl.u32 %v140, 7
    %v142 = vsub.s32 %v139, %v141
    %v143 = vrot.slane %v122, %v142
    %v144 = vcombine.high %v143, %v143
    %v145 = vsel %vm125, 1, 0
    %v146 = vsel %vm126, 1, 0
    %vm147 = vcmp.eq.s32.totalorder %v145, 1
    %vm148 = vcmp.eq.s32.totalorder %v146, 1
    %149 = vrot.lane.b32.xlu0 %v135, 112
    %v150 = vpop.permute.xlu0 %149
    %151 = vrot.lane.b32.xlu0 %v136, 112
    %v152 = vpop.permute.xlu0 %151
    %153 = vrot.lane.b32.xlu0 %v143, 112
    %v154 = vpop.permute.xlu0 %153
    %155 = vrot.lane.b32.xlu0 %v144, 112
    %v156 = vpop.permute.xlu0 %155
    %vm157 = vcmask 916480
    %v158 = vsel %vm157, %v150, %v152
    %v159 = vsel %vm157, %v152, %v150
    %v160 = vsel %vm157, %v154, %v156
    %v161 = vsel %vm157, %v156, %v154
    %166 = vrot.lane.b32.xlu0 %v136, 16
    %v167 = vpop.permute.xlu0 %166
    %168 = vrot.lane.b32.xlu0 %v135, 16
    %v169 = vpop.permute.xlu0 %168
    %170 = vrot.lane.b32.xlu0 %v144, 16
    %v171 = vpop.permute.xlu0 %170
    %172 = vrot.lane.b32.xlu0 %v143, 16
    %v173 = vpop.permute.xlu0 %172
    %vm174 = vcmask 130048
    %v175 = vsel %vm174, %v167, %v169
    %v176 = vsel %vm174, %v169, %v167
    %v177 = vsel %vm174, %v171, %v173
    %v178 = vsel %vm174, %v173, %v171
    %v183 = vsel %vm147, %v158, %v175
    %v184 = vsel %vm148, %v159, %v176
    %v185 = vsel %vm147, %v160, %v177
    %v186 = vsel %vm148, %v161, %v178
    %v191 = vcombine.low %v183, %v184
    %v193 = vunpack.c.l.s4 1983009808
    %v194 = vunpack.c.0.s8 %v193
    %v195 = vlaneseq
    %v196 = vshrl.u32 %v195, 7
    %v197 = vsub.s32 %v194, %v196
    %v198 = vrot.slane %v191, %v197
    %v199 = vcombine.low %v185, %v186
    %v201 = vunpack.c.l.s4 1983009808
    %v202 = vunpack.c.0.s8 %v201
    %v203 = vlaneseq
    %v204 = vshrl.u32 %v203, 7
    %v205 = vsub.s32 %v202, %v204
    %v206 = vrot.slane %v199, %v205
    %v209 = vadd.f32 %v121, %v198
    %v210 = vadd.f32 %v122, %v206
    %v211 = vmul.f32 %v209, 0.5
    %v212 = vmul.f32 %v210, 0.5
    %v213 = vlaneseq
    %v214 = vshrl.u32 %v213, 7
    %s215 = sld [smem:[#allocation2]]
    %v216 = vstv %s215
    %v217 = vmul.f32 %v211, %v216
    %v218 = vmul.f32 %v212, %v216
    %s219 = sld [smem:[#allocation2 + $0x4]]
    %v220 = vstv %s219
    %v221 = vmul.f32 %v211, %v220
    %v222 = vmul.f32 %v212, %v220
    %v225 = vrot.slane %v221, 7
    %v226 = vrot.slane %v225, 2
    %v227 = vrot.slane %v222, 7
    %v228 = vrot.slane %v227, 2
    %v231 = vadd.f32 %v217, %v226
    %v232 = vadd.f32 %v218, %v228
    %s233 = sld [smem:[#allocation2 + $0x8]]
    %v234 = vstv %s233
    %v235 = vadd.f32 %v231, %v234
    %v236 = vadd.f32 %v232, %v234
    %vm237 = vcmp.eq.s32.totalorder %v214, 0
    %v238 = vsel %vm237, 1, 0
    %vm239 = vcmp.eq.s32.totalorder %v238, 1
    %v242 = vlaneseq
    %v243 = vshrl.u32 %v242, 7
    %v244 = vsub.s32 0, %v243
    %v245 = vrot.slane %v235, %v244
    %v246 = vlaneseq
    %v247 = vshrl.u32 %v246, 7
    %v248 = vsub.s32 2, %v247
    %v249 = vrot.slane %v235, %v248
    %v250 = vlaneseq
    %v251 = vshrl.u32 %v250, 7
    %v252 = vsub.s32 0, %v251
    %v253 = vrot.slane %v236, %v252
    %v254 = vlaneseq
    %v255 = vshrl.u32 %v254, 7
    %v256 = vsub.s32 2, %v255
    %v257 = vrot.slane %v236, %v256
    %v262 = vlaneseq
    %v263 = vshrl.u32 %v262, 7
    %v264 = vsub.s32 0, %v263
    %v265 = vrot.slane %v245, %v264
    %v266 = vlaneseq
    %v267 = vshrl.u32 %v266, 7
    %v268 = vsub.s32 0, %v267
    %v269 = vrot.slane %v249, %v268
    %v270 = vlaneseq
    %v271 = vshrl.u32 %v270, 7
    %v272 = vsub.s32 0, %v271
    %v273 = vrot.slane %v253, %v272
    %v274 = vlaneseq
    %v275 = vshrl.u32 %v274, 7
    %v276 = vsub.s32 0, %v275
    %v277 = vrot.slane %v257, %v276
    %v278 = vsel %vm239, %v265, 0.0
    %v279 = vsel %vm239, %v269, 0.0
    %v280 = vsel %vm239, %v273, 0.0
    %v281 = vsel %vm239, %v277, 0.0
    %s282 = sld [smem:[#allocation2 + $0x1]]
    %v283 = vstv %s282
    %v284 = vmul.f32 %v211, %v283
    %v285 = vmul.f32 %v212, %v283
    %s286 = sld [smem:[#allocation2 + $0x5]]
    %v287 = vstv %s286
    %v288 = vmul.f32 %v211, %v287
    %v289 = vmul.f32 %v212, %v287
    %v292 = vrot.slane %v288, 7
    %v293 = vrot.slane %v292, 2
    %v294 = vrot.slane %v289, 7
    %v295 = vrot.slane %v294, 2
    %v298 = vadd.f32 %v284, %v293
    %v299 = vadd.f32 %v285, %v295
    %s300 = sld [smem:[#allocation2 + $0x9]]
    %v301 = vstv %s300
    %v302 = vadd.f32 %v298, %v301
    %v303 = vadd.f32 %v299, %v301
    %vm304 = vcmp.eq.s32.totalorder %v214, 1
    %v305 = vsel %vm304, 1, 0
    %vm306 = vcmp.eq.s32.totalorder %v305, 1
    %v309 = vlaneseq
    %v310 = vshrl.u32 %v309, 7
    %v311 = vsub.s32 0, %v310
    %v312 = vrot.slane %v302, %v311
    %v313 = vlaneseq
    %v314 = vshrl.u32 %v313, 7
    %v315 = vsub.s32 2, %v314
    %v316 = vrot.slane %v302, %v315
    %v317 = vlaneseq
    %v318 = vshrl.u32 %v317, 7
    %v319 = vsub.s32 0, %v318
    %v320 = vrot.slane %v303, %v319
    %v321 = vlaneseq
    %v322 = vshrl.u32 %v321, 7
    %v323 = vsub.s32 2, %v322
    %v324 = vrot.slane %v303, %v323
    %v329 = vlaneseq
    %v330 = vshrl.u32 %v329, 7
    %v331 = vsub.s32 0, %v330
    %v332 = vrot.slane %v312, %v331
    %v333 = vlaneseq
    %v334 = vshrl.u32 %v333, 7
    %v335 = vsub.s32 0, %v334
    %v336 = vrot.slane %v316, %v335
    %v337 = vlaneseq
    %v338 = vshrl.u32 %v337, 7
    %v339 = vsub.s32 0, %v338
    %v340 = vrot.slane %v320, %v339
    %v341 = vlaneseq
    %v342 = vshrl.u32 %v341, 7
    %v343 = vsub.s32 0, %v342
    %v344 = vrot.slane %v324, %v343
    %v345 = vsel %vm306, %v332, 0.0
    %v346 = vsel %vm306, %v336, 0.0
    %v347 = vsel %vm306, %v340, 0.0
    %v348 = vsel %vm306, %v344, 0.0
    %v349 = vadd.f32 %v278, %v345
    %v350 = vadd.f32 %v279, %v346
    %v351 = vadd.f32 %v280, %v347
    %v352 = vadd.f32 %v281, %v348
    %s353 = sld [smem:[#allocation2 + $0x2]]
    %v354 = vstv %s353
    %v355 = vmul.f32 %v211, %v354
    %v356 = vmul.f32 %v212, %v354
    %s357 = sld [smem:[#allocation2 + $0x6]]
    %v358 = vstv %s357
    %v359 = vmul.f32 %v211, %v358
    %v360 = vmul.f32 %v212, %v358
    %v363 = vrot.slane %v359, 7
    %v364 = vrot.slane %v363, 2
    %v365 = vrot.slane %v360, 7
    %v366 = vrot.slane %v365, 2
    %v369 = vadd.f32 %v355, %v364
    %v370 = vadd.f32 %v356, %v366
    %s371 = sld [smem:[#allocation2 + $0xa]]
    %v372 = vstv %s371
    %v373 = vadd.f32 %v369, %v372
    %v374 = vadd.f32 %v370, %v372
    %vm375 = vcmp.eq.s32.totalorder %v214, 2
    %v376 = vsel %vm375, 1, 0
    %vm377 = vcmp.eq.s32.totalorder %v376, 1
    %v380 = vlaneseq
    %v381 = vshrl.u32 %v380, 7
    %v382 = vsub.s32 0, %v381
    %v383 = vrot.slane %v373, %v382
    %v384 = vlaneseq
    %v385 = vshrl.u32 %v384, 7
    %v386 = vsub.s32 2, %v385
    %v387 = vrot.slane %v373, %v386
    %v388 = vlaneseq
    %v389 = vshrl.u32 %v388, 7
    %v390 = vsub.s32 0, %v389
    %v391 = vrot.slane %v374, %v390
    %v392 = vlaneseq
    %v393 = vshrl.u32 %v392, 7
    %v394 = vsub.s32 2, %v393
    %v395 = vrot.slane %v374, %v394
    %v400 = vlaneseq
    %v401 = vshrl.u32 %v400, 7
    %v402 = vsub.s32 0, %v401
    %v403 = vrot.slane %v383, %v402
    %v404 = vlaneseq
    %v405 = vshrl.u32 %v404, 7
    %v406 = vsub.s32 0, %v405
    %v407 = vrot.slane %v387, %v406
    %v408 = vlaneseq
    %v409 = vshrl.u32 %v408, 7
    %v410 = vsub.s32 0, %v409
    %v411 = vrot.slane %v391, %v410
    %v412 = vlaneseq
    %v413 = vshrl.u32 %v412, 7
    %v414 = vsub.s32 0, %v413
    %v415 = vrot.slane %v395, %v414
    %v416 = vsel %vm377, %v403, 0.0
    %v417 = vsel %vm377, %v407, 0.0
    %v418 = vsel %vm377, %v411, 0.0
    %v419 = vsel %vm377, %v415, 0.0
    %v420 = vadd.f32 %v349, %v416
    %v421 = vadd.f32 %v350, %v417
    %v422 = vadd.f32 %v351, %v418
    %v423 = vadd.f32 %v352, %v419
    %s424 = sld [smem:[#allocation2 + $0x3]]
    %v425 = vstv %s424
    %v426 = vmul.f32 %v211, %v425
    %v427 = vmul.f32 %v212, %v425
    %s428 = sld [smem:[#allocation2 + $0x7]]
    %v429 = vstv %s428
    %v430 = vmul.f32 %v211, %v429
    %v431 = vmul.f32 %v212, %v429
    %v434 = vrot.slane %v430, 7
    %v435 = vrot.slane %v434, 2
    %v436 = vrot.slane %v431, 7
    %v437 = vrot.slane %v436, 2
    %v440 = vadd.f32 %v426, %v435
    %v441 = vadd.f32 %v427, %v437
    %s442 = sld [smem:[#allocation2 + $0xb]]
    %v443 = vstv %s442
    %v444 = vadd.f32 %v440, %v443
    %v445 = vadd.f32 %v441, %v443
    %vm446 = vcmp.eq.s32.totalorder %v214, 3
    %v447 = vsel %vm446, 1, 0
    %vm448 = vcmp.eq.s32.totalorder %v447, 1
    %v451 = vlaneseq
    %v452 = vshrl.u32 %v451, 7
    %v453 = vsub.s32 0, %v452
    %v454 = vrot.slane %v444, %v453
    %v455 = vlaneseq
    %v456 = vshrl.u32 %v455, 7
    %v457 = vsub.s32 2, %v456
    %v458 = vrot.slane %v444, %v457
    %v459 = vlaneseq
    %v460 = vshrl.u32 %v459, 7
    %v461 = vsub.s32 0, %v460
    %v462 = vrot.slane %v445, %v461
    %v463 = vlaneseq
    %v464 = vshrl.u32 %v463, 7
    %v465 = vsub.s32 2, %v464
    %v466 = vrot.slane %v445, %v465
    %v471 = vlaneseq
    %v472 = vshrl.u32 %v471, 7
    %v473 = vsub.s32 0, %v472
    %v474 = vrot.slane %v454, %v473
    %v475 = vlaneseq
    %v476 = vshrl.u32 %v475, 7
    %v477 = vsub.s32 0, %v476
    %v478 = vrot.slane %v458, %v477
    %v479 = vlaneseq
    %v480 = vshrl.u32 %v479, 7
    %v481 = vsub.s32 0, %v480
    %v482 = vrot.slane %v462, %v481
    %v483 = vlaneseq
    %v484 = vshrl.u32 %v483, 7
    %v485 = vsub.s32 0, %v484
    %v486 = vrot.slane %v466, %v485
    %v487 = vsel %vm448, %v474, 0.0
    %v488 = vsel %vm448, %v478, 0.0
    %v489 = vsel %vm448, %v482, 0.0
    %v490 = vsel %vm448, %v486, 0.0
    %v491 = vadd.f32 %v420, %v487
    %v492 = vadd.f32 %v421, %v488
    %v493 = vadd.f32 %v422, %v489
    %v494 = vadd.f32 %v423, %v490
    %vm495 = vcmask 1041408
    %v496 = vsel %vm495, %v491, 0.0
    %v497 = vsel %vm495, %v492, 0.0
    %v498 = vadd.f32 %v496, %v497
    %499 = vadd.xlane.f32.xlu0 %v498
    %v500 = vpop.xlane.xlu0 %499
    %v501 = vsel %vm495, %v493, 0.0
    %v502 = vsel %vm495, %v494, 0.0
    %v503 = vadd.f32 %v501, %v502
    %504 = vadd.xlane.f32.xlu0 %v503
    %v505 = vpop.xlane.xlu0 %504
    %v506 = vsel %vm495, %v500, 0.0
    %v507 = vrot.slane %v506, 4
    %v508 = vadd.f32 %v506, %v507
    %v509 = vrot.slane %v508, 2
    %v510 = vadd.f32 %v508, %v509
    %v511 = vrot.slane %v510, 1
    %v512 = vadd.f32 %v510, %v511
    %v513 = vsel %vm495, %v505, 0.0
    %v514 = vrot.slane %v513, 4
    %v515 = vadd.f32 %v513, %v514
    %v516 = vrot.slane %v515, 2
    %v517 = vadd.f32 %v515, %v516
    %v518 = vrot.slane %v517, 1
    %v519 = vadd.f32 %v517, %v518
    %v520 = vrcp.pop 512.0
    %v521 = vmul.f32 %v512, %v520
    %v522 = vmul.f32 %v519, %v520
    %v523 = vsub.f32 %v491, %v521
    %v524 = vsub.f32 %v492, %v521
    %v525 = vsub.f32 %v493, %v522
    %v526 = vsub.f32 %v494, %v522
    %v527 = vmul.f32 %v523, %v523
    %v528 = vmul.f32 %v524, %v524
    %v529 = vmul.f32 %v525, %v525
    %v530 = vmul.f32 %v526, %v526
    %v531 = vsel %vm495, %v527, 0.0
    %v532 = vsel %vm495, %v528, 0.0
    %v533 = vadd.f32 %v531, %v532
    %534 = vadd.xlane.f32.xlu0 %v533
    %v535 = vpop.xlane.xlu0 %534
    %v536 = vsel %vm495, %v529, 0.0
    %v537 = vsel %vm495, %v530, 0.0
    %v538 = vadd.f32 %v536, %v537
    %539 = vadd.xlane.f32.xlu0 %v538
    %v540 = vpop.xlane.xlu0 %539
    %v541 = vsel %vm495, %v535, 0.0
    %v542 = vrot.slane %v541, 4
    %v543 = vadd.f32 %v541, %v542
    %v544 = vrot.slane %v543, 2
    %v545 = vadd.f32 %v543, %v544
    %v546 = vrot.slane %v545, 1
    %v547 = vadd.f32 %v545, %v546
    %v548 = vsel %vm495, %v540, 0.0
    %v549 = vrot.slane %v548, 4
    %v550 = vadd.f32 %v548, %v549
    %v551 = vrot.slane %v550, 2
    %v552 = vadd.f32 %v550, %v551
    %v553 = vrot.slane %v552, 1
    %v554 = vadd.f32 %v552, %v553
    %v555 = vmul.f32 %v547, %v520
    %v556 = vmul.f32 %v554, %v520
    %v557 = vadd.f32 %v555, 1e-05
    %v558 = vadd.f32 %v556, 1e-05
    %v559 = vrsqrt.pop %v557
    %v560 = vrsqrt.pop %v558
    %vm561 = vcmp.ge.s32.totalorder %v214, 0
    %vm562 = vcmp.lt.s32.totalorder %v214, 2
    %vm563 = vmand %vm561, %vm562
    %v564 = vsel %vm563, 1, 0
    %vm565 = vcmp.eq.s32.totalorder %v564, 1
    %v566 = vsel %vm565, %v521, 0.0
    %v567 = vsel %vm565, %v522, 0.0
    %v568 = vsel %vm565, %v559, 0.0
    %v569 = vsel %vm565, %v560, 0.0
    %vm570 = vcmask 1043458
    %v571 = vsel %vm570, %v491, 0.0
    %v572 = vsel %vm570, %v492, 0.0
    %v573 = vadd.f32 %v571, %v572
    %574 = vadd.xlane.f32.xlu0 %v573
    %v575 = vpop.xlane.xlu0 %574
    %v576 = vsel %vm570, %v493, 0.0
    %v577 = vsel %vm570, %v494, 0.0
    %v578 = vadd.f32 %v576, %v577
    %579 = vadd.xlane.f32.xlu0 %v578
    %v580 = vpop.xlane.xlu0 %579
    %v583 = vrot.slane %v575, 2
    %v584 = vrot.slane %v580, 2
    %v587 = vsel %vm495, %v583, 0.0
    %v588 = vrot.slane %v587, 4
    %v589 = vadd.f32 %v587, %v588
    %v590 = vrot.slane %v589, 2
    %v591 = vadd.f32 %v589, %v590
    %v592 = vrot.slane %v591, 1
    %v593 = vadd.f32 %v591, %v592
    %v594 = vsel %vm495, %v584, 0.0
    %v595 = vrot.slane %v594, 4
    %v596 = vadd.f32 %v594, %v595
    %v597 = vrot.slane %v596, 2
    %v598 = vadd.f32 %v596, %v597
    %v599 = vrot.slane %v598, 1
    %v600 = vadd.f32 %v598, %v599
    %v601 = vmul.f32 %v593, %v520
    %v602 = vmul.f32 %v600, %v520
    %v603 = vsub.f32 %v491, %v601
    %v604 = vsub.f32 %v492, %v601
    %v605 = vsub.f32 %v493, %v602
    %v606 = vsub.f32 %v494, %v602
    %v607 = vmul.f32 %v603, %v603
    %v608 = vmul.f32 %v604, %v604
    %v609 = vmul.f32 %v605, %v605
    %v610 = vmul.f32 %v606, %v606
    %v611 = vsel %vm570, %v607, 0.0
    %v612 = vsel %vm570, %v608, 0.0
    %v613 = vadd.f32 %v611, %v612
    %614 = vadd.xlane.f32.xlu0 %v613
    %v615 = vpop.xlane.xlu0 %614
    %v616 = vsel %vm570, %v609, 0.0
    %v617 = vsel %vm570, %v610, 0.0
    %v618 = vadd.f32 %v616, %v617
    %619 = vadd.xlane.f32.xlu0 %v618
    %v620 = vpop.xlane.xlu0 %619
    %v623 = vrot.slane %v615, 2
    %v624 = vrot.slane %v620, 2
    %v627 = vsel %vm495, %v623, 0.0
    %v628 = vrot.slane %v627, 4
    %v629 = vadd.f32 %v627, %v628
    %v630 = vrot.slane %v629, 2
    %v631 = vadd.f32 %v629, %v630
    %v632 = vrot.slane %v631, 1
    %v633 = vadd.f32 %v631, %v632
    %v634 = vsel %vm495, %v624, 0.0
    %v635 = vrot.slane %v634, 4
    %v636 = vadd.f32 %v634, %v635
    %v637 = vrot.slane %v636, 2
    %v638 = vadd.f32 %v636, %v637
    %v639 = vrot.slane %v638, 1
    %v640 = vadd.f32 %v638, %v639
    %v641 = vmul.f32 %v633, %v520
    %v642 = vmul.f32 %v640, %v520
    %v643 = vadd.f32 %v641, 1e-05
    %v644 = vadd.f32 %v642, 1e-05
    %v645 = vrsqrt.pop %v643
    %v646 = vrsqrt.pop %v644
    %vm647 = vcmp.ge.s32.totalorder %v214, 2
    %vm648 = vcmp.lt.s32.totalorder %v214, 4
    %vm649 = vmand %vm647, %vm648
    %v650 = vsel %vm649, 1, 0
    %vm651 = vcmp.eq.s32.totalorder %v650, 1
    %v652 = vsel %vm651, %v601, 0.0
    %v653 = vsel %vm651, %v602, 0.0
    %v654 = vsel %vm651, %v645, 0.0
    %v655 = vsel %vm651, %v646, 0.0
    %v656 = vadd.f32 %v566, %v652
    %v657 = vadd.f32 %v567, %v653
    %v658 = vadd.f32 %v568, %v654
    %v659 = vadd.f32 %v569, %v655
    %s660 = sld [smem:[#allocation2 + $0xc]]
    %v661 = vstv %s660
    %v662 = vsel %vm237, %v661, 0.0
    %s663 = sld [smem:[#allocation2 + $0x10]]
    %v664 = vstv %s663
    %v665 = vsel %vm237, %v664, 0.0
    %s666 = sld [smem:[#allocation2 + $0xd]]
    %v667 = vstv %s666
    %v668 = vsel %vm304, %v667, 0.0
    %s669 = sld [smem:[#allocation2 + $0x11]]
    %v670 = vstv %s669
    %v671 = vsel %vm304, %v670, 0.0
    %v672 = vadd.f32 %v662, %v668
    %v673 = vadd.f32 %v665, %v671
    %s674 = sld [smem:[#allocation2 + $0xe]]
    %v675 = vstv %s674
    %v676 = vsel %vm375, %v675, 0.0
    %s677 = sld [smem:[#allocation2 + $0x12]]
    %v678 = vstv %s677
    %v679 = vsel %vm375, %v678, 0.0
    %v680 = vadd.f32 %v672, %v676
    %v681 = vadd.f32 %v673, %v679
    %s682 = sld [smem:[#allocation2 + $0xf]]
    %v683 = vstv %s682
    %v684 = vsel %vm446, %v683, 0.0
    %s685 = sld [smem:[#allocation2 + $0x13]]
    %v686 = vstv %s685
    %v687 = vsel %vm446, %v686, 0.0
    %v688 = vadd.f32 %v680, %v684
    %v689 = vadd.f32 %v681, %v687
    %v690 = vsub.f32 %v491, %v656
    %v691 = vsub.f32 %v492, %v656
    %v692 = vsub.f32 %v493, %v657
    %v693 = vsub.f32 %v494, %v657
    %v694 = vmul.f32 %v690, %v658
    %v695 = vmul.f32 %v691, %v658
    %v696 = vmul.f32 %v692, %v659
    %v697 = vmul.f32 %v693, %v659
    %v698 = vmul.f32 %v694, %v688
    %v699 = vmul.f32 %v695, %v688
    %v700 = vmul.f32 %v696, %v688
    %v701 = vmul.f32 %v697, %v688
    %v702 = vadd.f32 %v698, %v689
    %v703 = vadd.f32 %v699, %v689
    %v704 = vadd.f32 %v700, %v689
    %v705 = vadd.f32 %v701, %v689
    %v706 = vmax.f32 %v702, 0.0
    %v707 = vmax.f32 %v703, 0.0
    %v708 = vmax.f32 %v704, 0.0
    %v709 = vmax.f32 %v705, 0.0
    %s710 = sld [smem:[#allocation2 + $0x14]]
    %v711 = vstv %s710
    %v712 = vmul.f32 %v706, %v711
    %v713 = vmul.f32 %v707, %v711
    %v714 = vmul.f32 %v708, %v711
    %v715 = vmul.f32 %v709, %v711
    %s716 = sld [smem:[#allocation2 + $0x18]]
    %v717 = vstv %s716
    %v718 = vmul.f32 %v706, %v717
    %v719 = vmul.f32 %v707, %v717
    %v720 = vmul.f32 %v708, %v717
    %v721 = vmul.f32 %v709, %v717
    %v726 = vrot.slane %v718, 1
    %v727 = vrot.slane %v719, 1
    %v728 = vrot.slane %v720, 1
    %v729 = vrot.slane %v721, 1
    %v734 = vadd.f32 %v712, %v726
    %v735 = vadd.f32 %v713, %v727
    %v736 = vadd.f32 %v714, %v728
    %v737 = vadd.f32 %v715, %v729
    %s738 = sld [smem:[#allocation2 + $0x1c]]
    %v739 = vstv %s738
    %v740 = vmul.f32 %v706, %v739
    %v741 = vmul.f32 %v707, %v739
    %v742 = vmul.f32 %v708, %v739
    %v743 = vmul.f32 %v709, %v739
    %v748 = vrot.slane %v740, 2
    %v749 = vrot.slane %v741, 2
    %v750 = vrot.slane %v742, 2
    %v751 = vrot.slane %v743, 2
    %v756 = vadd.f32 %v734, %v748
    %v757 = vadd.f32 %v735, %v749
    %v758 = vadd.f32 %v736, %v750
    %v759 = vadd.f32 %v737, %v751
    %s760 = sld [smem:[#allocation2 + $0x20]]
    %v761 = vstv %s760
    %v762 = vmul.f32 %v706, %v761
    %v763 = vmul.f32 %v707, %v761
    %v764 = vmul.f32 %v708, %v761
    %v765 = vmul.f32 %v709, %v761
    %v770 = vrot.slane %v762, 3
    %v771 = vrot.slane %v763, 3
    %v772 = vrot.slane %v764, 3
    %v773 = vrot.slane %v765, 3
    %v778 = vadd.f32 %v756, %v770
    %v779 = vadd.f32 %v757, %v771
    %v780 = vadd.f32 %v758, %v772
    %v781 = vadd.f32 %v759, %v773
    %s782 = sld [smem:[#allocation2 + $0x24]]
    %v783 = vstv %s782
    %v784 = vadd.f32 %v778, %v783
    %v785 = vadd.f32 %v779, %v783
    %v786 = vadd.f32 %v780, %v783
    %v787 = vadd.f32 %v781, %v783
    %v788 = vlaneseq
    %v789 = vshrl.u32 %v788, 7
    %v790 = vsub.s32 0, %v789
    %v791 = vrot.slane %v784, %v790
    %v792 = vlaneseq
    %v793 = vshrl.u32 %v792, 7
    %v794 = vsub.s32 0, %v793
    %v795 = vrot.slane %v785, %v794
    %v796 = vlaneseq
    %v797 = vshrl.u32 %v796, 7
    %v798 = vsub.s32 0, %v797
    %v799 = vrot.slane %v786, %v798
    %v800 = vlaneseq
    %v801 = vshrl.u32 %v800, 7
    %v802 = vsub.s32 0, %v801
    %v803 = vrot.slane %v787, %v802
    %v804 = vsel %vm239, %v791, 0.0
    %v805 = vsel %vm239, %v795, 0.0
    %v806 = vsel %vm239, %v799, 0.0
    %v807 = vsel %vm239, %v803, 0.0
    %s808 = sld [smem:[#allocation2 + $0x15]]
    %v809 = vstv %s808
    %v810 = vmul.f32 %v706, %v809
    %v811 = vmul.f32 %v707, %v809
    %v812 = vmul.f32 %v708, %v809
    %v813 = vmul.f32 %v709, %v809
    %s814 = sld [smem:[#allocation2 + $0x19]]
    %v815 = vstv %s814
    %v816 = vmul.f32 %v706, %v815
    %v817 = vmul.f32 %v707, %v815
    %v818 = vmul.f32 %v708, %v815
    %v819 = vmul.f32 %v709, %v815
    %v824 = vrot.slane %v816, 1
    %v825 = vrot.slane %v817, 1
    %v826 = vrot.slane %v818, 1
    %v827 = vrot.slane %v819, 1
    %v832 = vadd.f32 %v810, %v824
    %v833 = vadd.f32 %v811, %v825
    %v834 = vadd.f32 %v812, %v826
    %v835 = vadd.f32 %v813, %v827
    %s836 = sld [smem:[#allocation2 + $0x1d]]
    %v837 = vstv %s836
    %v838 = vmul.f32 %v706, %v837
    %v839 = vmul.f32 %v707, %v837
    %v840 = vmul.f32 %v708, %v837
    %v841 = vmul.f32 %v709, %v837
    %v846 = vrot.slane %v838, 2
    %v847 = vrot.slane %v839, 2
    %v848 = vrot.slane %v840, 2
    %v849 = vrot.slane %v841, 2
    %v854 = vadd.f32 %v832, %v846
    %v855 = vadd.f32 %v833, %v847
    %v856 = vadd.f32 %v834, %v848
    %v857 = vadd.f32 %v835, %v849
    %s858 = sld [smem:[#allocation2 + $0x21]]
    %v859 = vstv %s858
    %v860 = vmul.f32 %v706, %v859
    %v861 = vmul.f32 %v707, %v859
    %v862 = vmul.f32 %v708, %v859
    %v863 = vmul.f32 %v709, %v859
    %v868 = vrot.slane %v860, 3
    %v869 = vrot.slane %v861, 3
    %v870 = vrot.slane %v862, 3
    %v871 = vrot.slane %v863, 3
    %v876 = vadd.f32 %v854, %v868
    %v877 = vadd.f32 %v855, %v869
    %v878 = vadd.f32 %v856, %v870
    %v879 = vadd.f32 %v857, %v871
    %s880 = sld [smem:[#allocation2 + $0x25]]
    %v881 = vstv %s880
    %v882 = vadd.f32 %v876, %v881
    %v883 = vadd.f32 %v877, %v881
    %v884 = vadd.f32 %v878, %v881
    %v885 = vadd.f32 %v879, %v881
    %v886 = vlaneseq
    %v887 = vshrl.u32 %v886, 7
    %v888 = vsub.s32 0, %v887
    %v889 = vrot.slane %v882, %v888
    %v890 = vlaneseq
    %v891 = vshrl.u32 %v890, 7
    %v892 = vsub.s32 0, %v891
    %v893 = vrot.slane %v883, %v892
    %v894 = vlaneseq
    %v895 = vshrl.u32 %v894, 7
    %v896 = vsub.s32 0, %v895
    %v897 = vrot.slane %v884, %v896
    %v898 = vlaneseq
    %v899 = vshrl.u32 %v898, 7
    %v900 = vsub.s32 0, %v899
    %v901 = vrot.slane %v885, %v900
    %v902 = vsel %vm306, %v889, 0.0
    %v903 = vsel %vm306, %v893, 0.0
    %v904 = vsel %vm306, %v897, 0.0
    %v905 = vsel %vm306, %v901, 0.0
    %v906 = vadd.f32 %v804, %v902
    %v907 = vadd.f32 %v805, %v903
    %v908 = vadd.f32 %v806, %v904
    %v909 = vadd.f32 %v807, %v905
    %s910 = sld [smem:[#allocation2 + $0x16]]
    %v911 = vstv %s910
    %v912 = vmul.f32 %v706, %v911
    %v913 = vmul.f32 %v707, %v911
    %v914 = vmul.f32 %v708, %v911
    %v915 = vmul.f32 %v709, %v911
    %s916 = sld [smem:[#allocation2 + $0x1a]]
    %v917 = vstv %s916
    %v918 = vmul.f32 %v706, %v917
    %v919 = vmul.f32 %v707, %v917
    %v920 = vmul.f32 %v708, %v917
    %v921 = vmul.f32 %v709, %v917
    %v926 = vrot.slane %v918, 1
    %v927 = vrot.slane %v919, 1
    %v928 = vrot.slane %v920, 1
    %v929 = vrot.slane %v921, 1
    %v934 = vadd.f32 %v912, %v926
    %v935 = vadd.f32 %v913, %v927
    %v936 = vadd.f32 %v914, %v928
    %v937 = vadd.f32 %v915, %v929
    %s938 = sld [smem:[#allocation2 + $0x1e]]
    %v939 = vstv %s938
    %v940 = vmul.f32 %v706, %v939
    %v941 = vmul.f32 %v707, %v939
    %v942 = vmul.f32 %v708, %v939
    %v943 = vmul.f32 %v709, %v939
    %v948 = vrot.slane %v940, 2
    %v949 = vrot.slane %v941, 2
    %v950 = vrot.slane %v942, 2
    %v951 = vrot.slane %v943, 2
    %v956 = vadd.f32 %v934, %v948
    %v957 = vadd.f32 %v935, %v949
    %v958 = vadd.f32 %v936, %v950
    %v959 = vadd.f32 %v937, %v951
    %s960 = sld [smem:[#allocation2 + $0x22]]
    %v961 = vstv %s960
    %v962 = vmul.f32 %v706, %v961
    %v963 = vmul.f32 %v707, %v961
    %v964 = vmul.f32 %v708, %v961
    %v965 = vmul.f32 %v709, %v961
    %v970 = vrot.slane %v962, 3
    %v971 = vrot.slane %v963, 3
    %v972 = vrot.slane %v964, 3
    %v973 = vrot.slane %v965, 3
    %v978 = vadd.f32 %v956, %v970
    %v979 = vadd.f32 %v957, %v971
    %v980 = vadd.f32 %v958, %v972
    %v981 = vadd.f32 %v959, %v973
    %s982 = sld [smem:[#allocation2 + $0x26]]
    %v983 = vstv %s982
    %v984 = vadd.f32 %v978, %v983
    %v985 = vadd.f32 %v979, %v983
    %v986 = vadd.f32 %v980, %v983
    %v987 = vadd.f32 %v981, %v983
    %v988 = vlaneseq
    %v989 = vshrl.u32 %v988, 7
    %v990 = vsub.s32 0, %v989
    %v991 = vrot.slane %v984, %v990
    %v992 = vlaneseq
    %v993 = vshrl.u32 %v992, 7
    %v994 = vsub.s32 0, %v993
    %v995 = vrot.slane %v985, %v994
    %v996 = vlaneseq
    %v997 = vshrl.u32 %v996, 7
    %v998 = vsub.s32 0, %v997
    %v999 = vrot.slane %v986, %v998
    %v1000 = vlaneseq
    %v1001 = vshrl.u32 %v1000, 7
    %v1002 = vsub.s32 0, %v1001
    %v1003 = vrot.slane %v987, %v1002
    %v1004 = vsel %vm377, %v991, 0.0
    %v1005 = vsel %vm377, %v995, 0.0
    %v1006 = vsel %vm377, %v999, 0.0
    %v1007 = vsel %vm377, %v1003, 0.0
    %v1008 = vadd.f32 %v906, %v1004
    %v1009 = vadd.f32 %v907, %v1005
    %v1010 = vadd.f32 %v908, %v1006
    %v1011 = vadd.f32 %v909, %v1007
    %s1012 = sld [smem:[#allocation2 + $0x17]]
    %v1013 = vstv %s1012
    %v1014 = vmul.f32 %v706, %v1013
    %v1015 = vmul.f32 %v707, %v1013
    %v1016 = vmul.f32 %v708, %v1013
    %v1017 = vmul.f32 %v709, %v1013
    %s1018 = sld [smem:[#allocation2 + $0x1b]]
    %v1019 = vstv %s1018
    %v1020 = vmul.f32 %v706, %v1019
    %v1021 = vmul.f32 %v707, %v1019
    %v1022 = vmul.f32 %v708, %v1019
    %v1023 = vmul.f32 %v709, %v1019
    %v1028 = vrot.slane %v1020, 1
    %v1029 = vrot.slane %v1021, 1
    %v1030 = vrot.slane %v1022, 1
    %v1031 = vrot.slane %v1023, 1
    %v1036 = vadd.f32 %v1014, %v1028
    %v1037 = vadd.f32 %v1015, %v1029
    %v1038 = vadd.f32 %v1016, %v1030
    %v1039 = vadd.f32 %v1017, %v1031
    %s1040 = sld [smem:[#allocation2 + $0x1f]]
    %v1041 = vstv %s1040
    %v1042 = vmul.f32 %v706, %v1041
    %v1043 = vmul.f32 %v707, %v1041
    %v1044 = vmul.f32 %v708, %v1041
    %v1045 = vmul.f32 %v709, %v1041
    %v1050 = vrot.slane %v1042, 2
    %v1051 = vrot.slane %v1043, 2
    %v1052 = vrot.slane %v1044, 2
    %v1053 = vrot.slane %v1045, 2
    %v1058 = vadd.f32 %v1036, %v1050
    %v1059 = vadd.f32 %v1037, %v1051
    %v1060 = vadd.f32 %v1038, %v1052
    %v1061 = vadd.f32 %v1039, %v1053
    %s1062 = sld [smem:[#allocation2 + $0x23]]
    %v1063 = vstv %s1062
    %v1064 = vmul.f32 %v706, %v1063
    %v1065 = vmul.f32 %v707, %v1063
    %v1066 = vmul.f32 %v708, %v1063
    %v1067 = vmul.f32 %v709, %v1063
    %v1072 = vrot.slane %v1064, 3
    %v1073 = vrot.slane %v1065, 3
    %v1074 = vrot.slane %v1066, 3
    %v1075 = vrot.slane %v1067, 3
    %v1080 = vadd.f32 %v1058, %v1072
    %v1081 = vadd.f32 %v1059, %v1073
    %v1082 = vadd.f32 %v1060, %v1074
    %v1083 = vadd.f32 %v1061, %v1075
    %s1084 = sld [smem:[#allocation2 + $0x27]]
    %v1085 = vstv %s1084
    %v1086 = vadd.f32 %v1080, %v1085
    %v1087 = vadd.f32 %v1081, %v1085
    %v1088 = vadd.f32 %v1082, %v1085
    %v1089 = vadd.f32 %v1083, %v1085
    %v1090 = vlaneseq
    %v1091 = vshrl.u32 %v1090, 7
    %v1092 = vsub.s32 0, %v1091
    %v1093 = vrot.slane %v1086, %v1092
    %v1094 = vlaneseq
    %v1095 = vshrl.u32 %v1094, 7
    %v1096 = vsub.s32 0, %v1095
    %v1097 = vrot.slane %v1087, %v1096
    %v1098 = vlaneseq
    %v1099 = vshrl.u32 %v1098, 7
    %v1100 = vsub.s32 0, %v1099
    %v1101 = vrot.slane %v1088, %v1100
    %v1102 = vlaneseq
    %v1103 = vshrl.u32 %v1102, 7
    %v1104 = vsub.s32 0, %v1103
    %v1105 = vrot.slane %v1089, %v1104
    %v1106 = vsel %vm448, %v1093, 0.0
    %v1107 = vsel %vm448, %v1097, 0.0
    %v1108 = vsel %vm448, %v1101, 0.0
    %v1109 = vsel %vm448, %v1105, 0.0
    %v1110 = vadd.f32 %v1008, %v1106
    %v1111 = vadd.f32 %v1009, %v1107
    %v1112 = vadd.f32 %v1010, %v1108
    %v1113 = vadd.f32 %v1011, %v1109
    %v1114 = vsel %vm495, %v1110, 0.0
    %v1115 = vsel %vm495, %v1111, 0.0
    %v1116 = vadd.f32 %v1114, %v1115
    %1117 = vadd.xlane.f32.xlu0 %v1116
    %v1118 = vpop.xlane.xlu0 %1117
    %v1119 = vsel %vm495, %v1112, 0.0
    %v1120 = vsel %vm495, %v1113, 0.0
    %v1121 = vadd.f32 %v1119, %v1120
    %1122 = vadd.xlane.f32.xlu0 %v1121
    %v1123 = vpop.xlane.xlu0 %1122
    %v1124 = vsel %vm495, %v1118, 0.0
    %v1125 = vrot.slane %v1124, 4
    %v1126 = vadd.f32 %v1124, %v1125
    %v1127 = vrot.slane %v1126, 2
    %v1128 = vadd.f32 %v1126, %v1127
    %v1129 = vrot.slane %v1128, 1
    %v1130 = vadd.f32 %v1128, %v1129
    %v1131 = vsel %vm495, %v1123, 0.0
    %v1132 = vrot.slane %v1131, 4
    %v1133 = vadd.f32 %v1131, %v1132
    %v1134 = vrot.slane %v1133, 2
    %v1135 = vadd.f32 %v1133, %v1134
    %v1136 = vrot.slane %v1135, 1
    %v1137 = vadd.f32 %v1135, %v1136
    %v1138 = vmul.f32 %v1130, %v520
    %v1139 = vmul.f32 %v1137, %v520
    %v1140 = vsub.f32 %v1110, %v1138
    %v1141 = vsub.f32 %v1111, %v1138
    %v1142 = vsub.f32 %v1112, %v1139
    %v1143 = vsub.f32 %v1113, %v1139
    %v1144 = vmul.f32 %v1140, %v1140
    %v1145 = vmul.f32 %v1141, %v1141
    %v1146 = vmul.f32 %v1142, %v1142
    %v1147 = vmul.f32 %v1143, %v1143
    %v1148 = vsel %vm495, %v1144, 0.0
    %v1149 = vsel %vm495, %v1145, 0.0
    %v1150 = vadd.f32 %v1148, %v1149
    %1151 = vadd.xlane.f32.xlu0 %v1150
    %v1152 = vpop.xlane.xlu0 %1151
    %v1153 = vsel %vm495, %v1146, 0.0
    %v1154 = vsel %vm495, %v1147, 0.0
    %v1155 = vadd.f32 %v1153, %v1154
    %1156 = vadd.xlane.f32.xlu0 %v1155
    %v1157 = vpop.xlane.xlu0 %1156
    %v1158 = vsel %vm495, %v1152, 0.0
    %v1159 = vrot.slane %v1158, 4
    %v1160 = vadd.f32 %v1158, %v1159
    %v1161 = vrot.slane %v1160, 2
    %v1162 = vadd.f32 %v1160, %v1161
    %v1163 = vrot.slane %v1162, 1
    %v1164 = vadd.f32 %v1162, %v1163
    %v1165 = vsel %vm495, %v1157, 0.0
    %v1166 = vrot.slane %v1165, 4
    %v1167 = vadd.f32 %v1165, %v1166
    %v1168 = vrot.slane %v1167, 2
    %v1169 = vadd.f32 %v1167, %v1168
    %v1170 = vrot.slane %v1169, 1
    %v1171 = vadd.f32 %v1169, %v1170
    %v1172 = vmul.f32 %v1164, %v520
    %v1173 = vmul.f32 %v1171, %v520
    %v1174 = vadd.f32 %v1172, 1e-05
    %v1175 = vadd.f32 %v1173, 1e-05
    %v1176 = vrsqrt.pop %v1174
    %v1177 = vrsqrt.pop %v1175
    %v1178 = vsel %vm565, %v1138, 0.0
    %v1179 = vsel %vm565, %v1139, 0.0
    %v1180 = vsel %vm565, %v1176, 0.0
    %v1181 = vsel %vm565, %v1177, 0.0
    %v1182 = vsel %vm570, %v1110, 0.0
    %v1183 = vsel %vm570, %v1111, 0.0
    %v1184 = vadd.f32 %v1182, %v1183
    %1185 = vadd.xlane.f32.xlu0 %v1184
    %v1186 = vpop.xlane.xlu0 %1185
    %v1187 = vsel %vm570, %v1112, 0.0
    %v1188 = vsel %vm570, %v1113, 0.0
    %v1189 = vadd.f32 %v1187, %v1188
    %1190 = vadd.xlane.f32.xlu0 %v1189
    %v1191 = vpop.xlane.xlu0 %1190
    %v1194 = vrot.slane %v1186, 2
    %v1195 = vrot.slane %v1191, 2
    %v1198 = vsel %vm495, %v1194, 0.0
    %v1199 = vrot.slane %v1198, 4
    %v1200 = vadd.f32 %v1198, %v1199
    %v1201 = vrot.slane %v1200, 2
    %v1202 = vadd.f32 %v1200, %v1201
    %v1203 = vrot.slane %v1202, 1
    %v1204 = vadd.f32 %v1202, %v1203
    %v1205 = vsel %vm495, %v1195, 0.0
    %v1206 = vrot.slane %v1205, 4
    %v1207 = vadd.f32 %v1205, %v1206
    %v1208 = vrot.slane %v1207, 2
    %v1209 = vadd.f32 %v1207, %v1208
    %v1210 = vrot.slane %v1209, 1
    %v1211 = vadd.f32 %v1209, %v1210
    %v1212 = vmul.f32 %v1204, %v520
    %v1213 = vmul.f32 %v1211, %v520
    %v1214 = vsub.f32 %v1110, %v1212
    %v1215 = vsub.f32 %v1111, %v1212
    %v1216 = vsub.f32 %v1112, %v1213
    %v1217 = vsub.f32 %v1113, %v1213
    %v1218 = vmul.f32 %v1214, %v1214
    %v1219 = vmul.f32 %v1215, %v1215
    %v1220 = vmul.f32 %v1216, %v1216
    %v1221 = vmul.f32 %v1217, %v1217
    %v1222 = vsel %vm570, %v1218, 0.0
    %v1223 = vsel %vm570, %v1219, 0.0
    %v1224 = vadd.f32 %v1222, %v1223
    %1225 = vadd.xlane.f32.xlu0 %v1224
    %v1226 = vpop.xlane.xlu0 %1225
    %v1227 = vsel %vm570, %v1220, 0.0
    %v1228 = vsel %vm570, %v1221, 0.0
    %v1229 = vadd.f32 %v1227, %v1228
    %1230 = vadd.xlane.f32.xlu0 %v1229
    %v1231 = vpop.xlane.xlu0 %1230
    %v1234 = vrot.slane %v1226, 2
    %v1235 = vrot.slane %v1231, 2
    %v1238 = vsel %vm495, %v1234, 0.0
    %v1239 = vrot.slane %v1238, 4
    %v1240 = vadd.f32 %v1238, %v1239
    %v1241 = vrot.slane %v1240, 2
    %v1242 = vadd.f32 %v1240, %v1241
    %v1243 = vrot.slane %v1242, 1
    %v1244 = vadd.f32 %v1242, %v1243
    %v1245 = vsel %vm495, %v1235, 0.0
    %v1246 = vrot.slane %v1245, 4
    %v1247 = vadd.f32 %v1245, %v1246
    %v1248 = vrot.slane %v1247, 2
    %v1249 = vadd.f32 %v1247, %v1248
    %v1250 = vrot.slane %v1249, 1
    %v1251 = vadd.f32 %v1249, %v1250
    %v1252 = vmul.f32 %v1244, %v520
    %v1253 = vmul.f32 %v1251, %v520
    %v1254 = vadd.f32 %v1252, 1e-05
    %v1255 = vadd.f32 %v1253, 1e-05
    %v1256 = vrsqrt.pop %v1254
    %v1257 = vrsqrt.pop %v1255
    %v1258 = vsel %vm651, %v1212, 0.0
    %v1259 = vsel %vm651, %v1213, 0.0
    %v1260 = vsel %vm651, %v1256, 0.0
    %v1261 = vsel %vm651, %v1257, 0.0
    %v1262 = vadd.f32 %v1178, %v1258
    %v1263 = vadd.f32 %v1179, %v1259
    %v1264 = vadd.f32 %v1180, %v1260
    %v1265 = vadd.f32 %v1181, %v1261
    %s1266 = sld [smem:[#allocation2 + $0x28]]
    %v1267 = vstv %s1266
    %v1268 = vsel %vm237, %v1267, 0.0
    %s1269 = sld [smem:[#allocation2 + $0x2c]]
    %v1270 = vstv %s1269
    %v1271 = vsel %vm237, %v1270, 0.0
    %s1272 = sld [smem:[#allocation2 + $0x29]]
    %v1273 = vstv %s1272
    %v1274 = vsel %vm304, %v1273, 0.0
    %s1275 = sld [smem:[#allocation2 + $0x2d]]
    %v1276 = vstv %s1275
    %v1277 = vsel %vm304, %v1276, 0.0
    %v1278 = vadd.f32 %v1268, %v1274
    %v1279 = vadd.f32 %v1271, %v1277
    %s1280 = sld [smem:[#allocation2 + $0x2a]]
    %v1281 = vstv %s1280
    %v1282 = vsel %vm375, %v1281, 0.0
    %s1283 = sld [smem:[#allocation2 + $0x2e]]
    %v1284 = vstv %s1283
    %v1285 = vsel %vm375, %v1284, 0.0
    %v1286 = vadd.f32 %v1278, %v1282
    %v1287 = vadd.f32 %v1279, %v1285
    %s1288 = sld [smem:[#allocation2 + $0x2b]]
    %v1289 = vstv %s1288
    %v1290 = vsel %vm446, %v1289, 0.0
    %s1291 = sld [smem:[#allocation2 + $0x2f]]
    %v1292 = vstv %s1291
    %v1293 = vsel %vm446, %v1292, 0.0
    %v1294 = vadd.f32 %v1286, %v1290
    %v1295 = vadd.f32 %v1287, %v1293
    %v1296 = vsub.f32 %v1110, %v1262
    %v1297 = vsub.f32 %v1111, %v1262
    %v1298 = vsub.f32 %v1112, %v1263
    %v1299 = vsub.f32 %v1113, %v1263
    %v1300 = vmul.f32 %v1296, %v1264
    %v1301 = vmul.f32 %v1297, %v1264
    %v1302 = vmul.f32 %v1298, %v1265
    %v1303 = vmul.f32 %v1299, %v1265
    %v1304 = vmul.f32 %v1300, %v1294
    %v1305 = vmul.f32 %v1301, %v1294
    %v1306 = vmul.f32 %v1302, %v1294
    %v1307 = vmul.f32 %v1303, %v1294
    %v1308 = vadd.f32 %v1304, %v1295
    %v1309 = vadd.f32 %v1305, %v1295
    %v1310 = vadd.f32 %v1306, %v1295
    %v1311 = vadd.f32 %v1307, %v1295
    %v1312 = vand.u32 %v31, 2
    %v1313 = vand.u32 %v32, 2
    %vm1314 = vcmp.eq.s32.totalorder %v1312, 0
    %vm1315 = vcmp.eq.s32.totalorder %v1313, 0
    %v1316 = vsel %vm1314, 1, 0
    %v1317 = vsel %vm1315, 1, 0
    %vm1318 = vcmp.eq.s32.totalorder %v1316, 1
    %vm1319 = vcmp.eq.s32.totalorder %v1317, 1
    %1324 = vrot.lane.b32.xlu0 %v1308, 126
    %v1325 = vpop.permute.xlu0 %1324
    %1326 = vrot.lane.b32.xlu0 %v1309, 126
    %v1327 = vpop.permute.xlu0 %1326
    %1328 = vrot.lane.b32.xlu0 %v1310, 126
    %v1329 = vpop.permute.xlu0 %1328
    %1330 = vrot.lane.b32.xlu0 %v1311, 126
    %v1331 = vpop.permute.xlu0 %1330
    %vm1332 = vcmask 1031168
    %v1333 = vsel %vm1332, %v1325, %v1327
    %v1334 = vsel %vm1332, %v1327, %v1325
    %v1335 = vsel %vm1332, %v1329, %v1331
    %v1336 = vsel %vm1332, %v1331, %v1329
    %1341 = vrot.lane.b32.xlu0 %v1309, 2
    %v1342 = vpop.permute.xlu0 %1341
    %1343 = vrot.lane.b32.xlu0 %v1308, 2
    %v1344 = vpop.permute.xlu0 %1343
    %1345 = vrot.lane.b32.xlu0 %v1311, 2
    %v1346 = vpop.permute.xlu0 %1345
    %1347 = vrot.lane.b32.xlu0 %v1310, 2
    %v1348 = vpop.permute.xlu0 %1347
    %vm1349 = vcmask 15360
    %v1350 = vsel %vm1349, %v1342, %v1344
    %v1351 = vsel %vm1349, %v1344, %v1342
    %v1352 = vsel %vm1349, %v1346, %v1348
    %v1353 = vsel %vm1349, %v1348, %v1346
    %v1358 = vsel %vm1318, %v1333, %v1350
    %v1359 = vsel %vm1319, %v1334, %v1351
    %v1360 = vsel %vm1318, %v1335, %v1352
    %v1361 = vsel %vm1319, %v1336, %v1353
    %v1362 = vadd.f32 %v1308, %v1358
    %v1363 = vadd.f32 %v1309, %v1359
    %v1364 = vadd.f32 %v1310, %v1360
    %v1365 = vadd.f32 %v1311, %v1361
    %v1366 = vmul.f32 %v1362, 0.5
    %v1367 = vmul.f32 %v1363, 0.5
    %v1368 = vmul.f32 %v1364, 0.5
    %v1369 = vmul.f32 %v1365, 0.5
    %v1370 = vand.u32 %v31, 32
    %v1371 = vand.u32 %v32, 32
    %vm1372 = vcmp.eq.s32.totalorder %v1370, 0
    %vm1373 = vcmp.eq.s32.totalorder %v1371, 0
    %v1374 = vsel %vm1372, 1, 0
    %v1375 = vsel %vm1373, 1, 0
    %vm1376 = vcmp.eq.s32.totalorder %v1374, 1
    %vm1377 = vcmp.eq.s32.totalorder %v1375, 1
    %1382 = vrot.lane.b32.xlu0 %v1366, 96
    %v1383 = vpop.permute.xlu0 %1382
    %1384 = vrot.lane.b32.xlu0 %v1367, 96
    %v1385 = vpop.permute.xlu0 %1384
    %1386 = vrot.lane.b32.xlu0 %v1368, 96
    %v1387 = vpop.permute.xlu0 %1386
    %1388 = vrot.lane.b32.xlu0 %v1369, 96
    %v1389 = vpop.permute.xlu0 %1388
    %vm1390 = vcmask 785408
    %v1391 = vsel %vm1390, %v1383, %v1385
    %v1392 = vsel %vm1390, %v1385, %v1383
    %v1393 = vsel %vm1390, %v1387, %v1389
    %v1394 = vsel %vm1390, %v1389, %v1387
    %1399 = vrot.lane.b32.xlu0 %v1367, 32
    %v1400 = vpop.permute.xlu0 %1399
    %1401 = vrot.lane.b32.xlu0 %v1366, 32
    %v1402 = vpop.permute.xlu0 %1401
    %1403 = vrot.lane.b32.xlu0 %v1369, 32
    %v1404 = vpop.permute.xlu0 %1403
    %1405 = vrot.lane.b32.xlu0 %v1368, 32
    %v1406 = vpop.permute.xlu0 %1405
    %vm1407 = vcmask 261120
    %v1408 = vsel %vm1407, %v1400, %v1402
    %v1409 = vsel %vm1407, %v1402, %v1400
    %v1410 = vsel %vm1407, %v1404, %v1406
    %v1411 = vsel %vm1407, %v1406, %v1404
    %v1416 = vsel %vm1376, %v1391, %v1408
    %v1417 = vsel %vm1377, %v1392, %v1409
    %v1418 = vsel %vm1376, %v1393, %v1410
    %v1419 = vsel %vm1377, %v1394, %v1411
    %v1420 = vadd.f32 %v1366, %v1416
    %v1421 = vadd.f32 %v1367, %v1417
    %v1422 = vadd.f32 %v1368, %v1418
    %v1423 = vadd.f32 %v1369, %v1419
    %v1424 = vmul.f32 %v1420, 0.5
    %v1425 = vmul.f32 %v1421, 0.5
    %v1426 = vmul.f32 %v1422, 0.5
    %v1427 = vmul.f32 %v1423, 0.5
    %s1428 = sld [smem:[#allocation2 + $0x30]]
    %v1429 = vstv %s1428
    %v1430 = vmul.f32 %v1424, %v1429
    %v1431 = vmul.f32 %v1425, %v1429
    %v1432 = vmul.f32 %v1426, %v1429
    %v1433 = vmul.f32 %v1427, %v1429
    %s1434 = sld [smem:[#allocation2 + $0x34]]
    %v1435 = vstv %s1434
    %v1436 = vmul.f32 %v1424, %v1435
    %v1437 = vmul.f32 %v1425, %v1435
    %v1438 = vmul.f32 %v1426, %v1435
    %v1439 = vmul.f32 %v1427, %v1435
    %v1444 = vrot.slane %v1436, 1
    %v1445 = vrot.slane %v1437, 1
    %v1446 = vrot.slane %v1438, 1
    %v1447 = vrot.slane %v1439, 1
    %v1452 = vadd.f32 %v1430, %v1444
    %v1453 = vadd.f32 %v1431, %v1445
    %v1454 = vadd.f32 %v1432, %v1446
    %v1455 = vadd.f32 %v1433, %v1447
    %s1456 = sld [smem:[#allocation2 + $0x38]]
    %v1457 = vstv %s1456
    %v1458 = vmul.f32 %v1424, %v1457
    %v1459 = vmul.f32 %v1425, %v1457
    %v1460 = vmul.f32 %v1426, %v1457
    %v1461 = vmul.f32 %v1427, %v1457
    %v1466 = vrot.slane %v1458, 2
    %v1467 = vrot.slane %v1459, 2
    %v1468 = vrot.slane %v1460, 2
    %v1469 = vrot.slane %v1461, 2
    %v1474 = vadd.f32 %v1452, %v1466
    %v1475 = vadd.f32 %v1453, %v1467
    %v1476 = vadd.f32 %v1454, %v1468
    %v1477 = vadd.f32 %v1455, %v1469
    %s1478 = sld [smem:[#allocation2 + $0x3c]]
    %v1479 = vstv %s1478
    %v1480 = vmul.f32 %v1424, %v1479
    %v1481 = vmul.f32 %v1425, %v1479
    %v1482 = vmul.f32 %v1426, %v1479
    %v1483 = vmul.f32 %v1427, %v1479
    %v1488 = vrot.slane %v1480, 3
    %v1489 = vrot.slane %v1481, 3
    %v1490 = vrot.slane %v1482, 3
    %v1491 = vrot.slane %v1483, 3
    %v1496 = vadd.f32 %v1474, %v1488
    %v1497 = vadd.f32 %v1475, %v1489
    %v1498 = vadd.f32 %v1476, %v1490
    %v1499 = vadd.f32 %v1477, %v1491
    %s1500 = sld [smem:[#allocation2 + $0x40]]
    %v1501 = vstv %s1500
    %v1502 = vadd.f32 %v1496, %v1501
    %v1503 = vadd.f32 %v1497, %v1501
    %v1504 = vadd.f32 %v1498, %v1501
    %v1505 = vadd.f32 %v1499, %v1501
    %v1506 = vlaneseq
    %v1507 = vshrl.u32 %v1506, 7
    %v1508 = vsub.s32 0, %v1507
    %v1509 = vrot.slane %v1502, %v1508
    %v1510 = vlaneseq
    %v1511 = vshrl.u32 %v1510, 7
    %v1512 = vsub.s32 0, %v1511
    %v1513 = vrot.slane %v1503, %v1512
    %v1514 = vlaneseq
    %v1515 = vshrl.u32 %v1514, 7
    %v1516 = vsub.s32 0, %v1515
    %v1517 = vrot.slane %v1504, %v1516
    %v1518 = vlaneseq
    %v1519 = vshrl.u32 %v1518, 7
    %v1520 = vsub.s32 0, %v1519
    %v1521 = vrot.slane %v1505, %v1520
    %v1522 = vsel %vm239, %v1509, 0.0
    %v1523 = vsel %vm239, %v1513, 0.0
    %v1524 = vsel %vm239, %v1517, 0.0
    %v1525 = vsel %vm239, %v1521, 0.0
    %s1526 = sld [smem:[#allocation2 + $0x31]]
    %v1527 = vstv %s1526
    %v1528 = vmul.f32 %v1424, %v1527
    %v1529 = vmul.f32 %v1425, %v1527
    %v1530 = vmul.f32 %v1426, %v1527
    %v1531 = vmul.f32 %v1427, %v1527
    %s1532 = sld [smem:[#allocation2 + $0x35]]
    %v1533 = vstv %s1532
    %v1534 = vmul.f32 %v1424, %v1533
    %v1535 = vmul.f32 %v1425, %v1533
    %v1536 = vmul.f32 %v1426, %v1533
    %v1537 = vmul.f32 %v1427, %v1533
    %v1542 = vrot.slane %v1534, 1
    %v1543 = vrot.slane %v1535, 1
    %v1544 = vrot.slane %v1536, 1
    %v1545 = vrot.slane %v1537, 1
    %v1550 = vadd.f32 %v1528, %v1542
    %v1551 = vadd.f32 %v1529, %v1543
    %v1552 = vadd.f32 %v1530, %v1544
    %v1553 = vadd.f32 %v1531, %v1545
    %s1554 = sld [smem:[#allocation2 + $0x39]]
    %v1555 = vstv %s1554
    %v1556 = vmul.f32 %v1424, %v1555
    %v1557 = vmul.f32 %v1425, %v1555
    %v1558 = vmul.f32 %v1426, %v1555
    %v1559 = vmul.f32 %v1427, %v1555
    %v1564 = vrot.slane %v1556, 2
    %v1565 = vrot.slane %v1557, 2
    %v1566 = vrot.slane %v1558, 2
    %v1567 = vrot.slane %v1559, 2
    %v1572 = vadd.f32 %v1550, %v1564
    %v1573 = vadd.f32 %v1551, %v1565
    %v1574 = vadd.f32 %v1552, %v1566
    %v1575 = vadd.f32 %v1553, %v1567
    %s1576 = sld [smem:[#allocation2 + $0x3d]]
    %v1577 = vstv %s1576
    %v1578 = vmul.f32 %v1424, %v1577
    %v1579 = vmul.f32 %v1425, %v1577
    %v1580 = vmul.f32 %v1426, %v1577
    %v1581 = vmul.f32 %v1427, %v1577
    %v1586 = vrot.slane %v1578, 3
    %v1587 = vrot.slane %v1579, 3
    %v1588 = vrot.slane %v1580, 3
    %v1589 = vrot.slane %v1581, 3
    %v1594 = vadd.f32 %v1572, %v1586
    %v1595 = vadd.f32 %v1573, %v1587
    %v1596 = vadd.f32 %v1574, %v1588
    %v1597 = vadd.f32 %v1575, %v1589
    %s1598 = sld [smem:[#allocation2 + $0x41]]
    %v1599 = vstv %s1598
    %v1600 = vadd.f32 %v1594, %v1599
    %v1601 = vadd.f32 %v1595, %v1599
    %v1602 = vadd.f32 %v1596, %v1599
    %v1603 = vadd.f32 %v1597, %v1599
    %v1604 = vlaneseq
    %v1605 = vshrl.u32 %v1604, 7
    %v1606 = vsub.s32 0, %v1605
    %v1607 = vrot.slane %v1600, %v1606
    %v1608 = vlaneseq
    %v1609 = vshrl.u32 %v1608, 7
    %v1610 = vsub.s32 0, %v1609
    %v1611 = vrot.slane %v1601, %v1610
    %v1612 = vlaneseq
    %v1613 = vshrl.u32 %v1612, 7
    %v1614 = vsub.s32 0, %v1613
    %v1615 = vrot.slane %v1602, %v1614
    %v1616 = vlaneseq
    %v1617 = vshrl.u32 %v1616, 7
    %v1618 = vsub.s32 0, %v1617
    %v1619 = vrot.slane %v1603, %v1618
    %v1620 = vsel %vm306, %v1607, 0.0
    %v1621 = vsel %vm306, %v1611, 0.0
    %v1622 = vsel %vm306, %v1615, 0.0
    %v1623 = vsel %vm306, %v1619, 0.0
    %v1624 = vadd.f32 %v1522, %v1620
    %v1625 = vadd.f32 %v1523, %v1621
    %v1626 = vadd.f32 %v1524, %v1622
    %v1627 = vadd.f32 %v1525, %v1623
    %s1628 = sld [smem:[#allocation2 + $0x32]]
    %v1629 = vstv %s1628
    %v1630 = vmul.f32 %v1424, %v1629
    %v1631 = vmul.f32 %v1425, %v1629
    %v1632 = vmul.f32 %v1426, %v1629
    %v1633 = vmul.f32 %v1427, %v1629
    %s1634 = sld [smem:[#allocation2 + $0x36]]
    %v1635 = vstv %s1634
    %v1636 = vmul.f32 %v1424, %v1635
    %v1637 = vmul.f32 %v1425, %v1635
    %v1638 = vmul.f32 %v1426, %v1635
    %v1639 = vmul.f32 %v1427, %v1635
    %v1644 = vrot.slane %v1636, 1
    %v1645 = vrot.slane %v1637, 1
    %v1646 = vrot.slane %v1638, 1
    %v1647 = vrot.slane %v1639, 1
    %v1652 = vadd.f32 %v1630, %v1644
    %v1653 = vadd.f32 %v1631, %v1645
    %v1654 = vadd.f32 %v1632, %v1646
    %v1655 = vadd.f32 %v1633, %v1647
    %s1656 = sld [smem:[#allocation2 + $0x3a]]
    %v1657 = vstv %s1656
    %v1658 = vmul.f32 %v1424, %v1657
    %v1659 = vmul.f32 %v1425, %v1657
    %v1660 = vmul.f32 %v1426, %v1657
    %v1661 = vmul.f32 %v1427, %v1657
    %v1666 = vrot.slane %v1658, 2
    %v1667 = vrot.slane %v1659, 2
    %v1668 = vrot.slane %v1660, 2
    %v1669 = vrot.slane %v1661, 2
    %v1674 = vadd.f32 %v1652, %v1666
    %v1675 = vadd.f32 %v1653, %v1667
    %v1676 = vadd.f32 %v1654, %v1668
    %v1677 = vadd.f32 %v1655, %v1669
    %s1678 = sld [smem:[#allocation2 + $0x3e]]
    %v1679 = vstv %s1678
    %v1680 = vmul.f32 %v1424, %v1679
    %v1681 = vmul.f32 %v1425, %v1679
    %v1682 = vmul.f32 %v1426, %v1679
    %v1683 = vmul.f32 %v1427, %v1679
    %v1688 = vrot.slane %v1680, 3
    %v1689 = vrot.slane %v1681, 3
    %v1690 = vrot.slane %v1682, 3
    %v1691 = vrot.slane %v1683, 3
    %v1696 = vadd.f32 %v1674, %v1688
    %v1697 = vadd.f32 %v1675, %v1689
    %v1698 = vadd.f32 %v1676, %v1690
    %v1699 = vadd.f32 %v1677, %v1691
    %s1700 = sld [smem:[#allocation2 + $0x42]]
    %v1701 = vstv %s1700
    %v1702 = vadd.f32 %v1696, %v1701
    %v1703 = vadd.f32 %v1697, %v1701
    %v1704 = vadd.f32 %v1698, %v1701
    %v1705 = vadd.f32 %v1699, %v1701
    %v1706 = vlaneseq
    %v1707 = vshrl.u32 %v1706, 7
    %v1708 = vsub.s32 0, %v1707
    %v1709 = vrot.slane %v1702, %v1708
    %v1710 = vlaneseq
    %v1711 = vshrl.u32 %v1710, 7
    %v1712 = vsub.s32 0, %v1711
    %v1713 = vrot.slane %v1703, %v1712
    %v1714 = vlaneseq
    %v1715 = vshrl.u32 %v1714, 7
    %v1716 = vsub.s32 0, %v1715
    %v1717 = vrot.slane %v1704, %v1716
    %v1718 = vlaneseq
    %v1719 = vshrl.u32 %v1718, 7
    %v1720 = vsub.s32 0, %v1719
    %v1721 = vrot.slane %v1705, %v1720
    %v1722 = vsel %vm377, %v1709, 0.0
    %v1723 = vsel %vm377, %v1713, 0.0
    %v1724 = vsel %vm377, %v1717, 0.0
    %v1725 = vsel %vm377, %v1721, 0.0
    %v1726 = vadd.f32 %v1624, %v1722
    %v1727 = vadd.f32 %v1625, %v1723
    %v1728 = vadd.f32 %v1626, %v1724
    %v1729 = vadd.f32 %v1627, %v1725
    %s1730 = sld [smem:[#allocation2 + $0x33]]
    %v1731 = vstv %s1730
    %v1732 = vmul.f32 %v1424, %v1731
    %v1733 = vmul.f32 %v1425, %v1731
    %v1734 = vmul.f32 %v1426, %v1731
    %v1735 = vmul.f32 %v1427, %v1731
    %s1736 = sld [smem:[#allocation2 + $0x37]]
    %v1737 = vstv %s1736
    %v1738 = vmul.f32 %v1424, %v1737
    %v1739 = vmul.f32 %v1425, %v1737
    %v1740 = vmul.f32 %v1426, %v1737
    %v1741 = vmul.f32 %v1427, %v1737
    %v1746 = vrot.slane %v1738, 1
    %v1747 = vrot.slane %v1739, 1
    %v1748 = vrot.slane %v1740, 1
    %v1749 = vrot.slane %v1741, 1
    %v1754 = vadd.f32 %v1732, %v1746
    %v1755 = vadd.f32 %v1733, %v1747
    %v1756 = vadd.f32 %v1734, %v1748
    %v1757 = vadd.f32 %v1735, %v1749
    %s1758 = sld [smem:[#allocation2 + $0x3b]]
    %v1759 = vstv %s1758
    %v1760 = vmul.f32 %v1424, %v1759
    %v1761 = vmul.f32 %v1425, %v1759
    %v1762 = vmul.f32 %v1426, %v1759
    %v1763 = vmul.f32 %v1427, %v1759
    %v1768 = vrot.slane %v1760, 2
    %v1769 = vrot.slane %v1761, 2
    %v1770 = vrot.slane %v1762, 2
    %v1771 = vrot.slane %v1763, 2
    %v1776 = vadd.f32 %v1754, %v1768
    %v1777 = vadd.f32 %v1755, %v1769
    %v1778 = vadd.f32 %v1756, %v1770
    %v1779 = vadd.f32 %v1757, %v1771
    %s1780 = sld [smem:[#allocation2 + $0x3f]]
    %v1781 = vstv %s1780
    %v1782 = vmul.f32 %v1424, %v1781
    %v1783 = vmul.f32 %v1425, %v1781
    %v1784 = vmul.f32 %v1426, %v1781
    %v1785 = vmul.f32 %v1427, %v1781
    %v1790 = vrot.slane %v1782, 3
    %v1791 = vrot.slane %v1783, 3
    %v1792 = vrot.slane %v1784, 3
    %v1793 = vrot.slane %v1785, 3
    %v1798 = vadd.f32 %v1776, %v1790
    %v1799 = vadd.f32 %v1777, %v1791
    %v1800 = vadd.f32 %v1778, %v1792
    %v1801 = vadd.f32 %v1779, %v1793
    %s1802 = sld [smem:[#allocation2 + $0x43]]
    %v1803 = vstv %s1802
    %v1804 = vadd.f32 %v1798, %v1803
    %v1805 = vadd.f32 %v1799, %v1803
    %v1806 = vadd.f32 %v1800, %v1803
    %v1807 = vadd.f32 %v1801, %v1803
    %v1808 = vlaneseq
    %v1809 = vshrl.u32 %v1808, 7
    %v1810 = vsub.s32 0, %v1809
    %v1811 = vrot.slane %v1804, %v1810
    %v1812 = vlaneseq
    %v1813 = vshrl.u32 %v1812, 7
    %v1814 = vsub.s32 0, %v1813
    %v1815 = vrot.slane %v1805, %v1814
    %v1816 = vlaneseq
    %v1817 = vshrl.u32 %v1816, 7
    %v1818 = vsub.s32 0, %v1817
    %v1819 = vrot.slane %v1806, %v1818
    %v1820 = vlaneseq
    %v1821 = vshrl.u32 %v1820, 7
    %v1822 = vsub.s32 0, %v1821
    %v1823 = vrot.slane %v1807, %v1822
    %v1824 = vsel %vm448, %v1811, 0.0
    %v1825 = vsel %vm448, %v1815, 0.0
    %v1826 = vsel %vm448, %v1819, 0.0
    %v1827 = vsel %vm448, %v1823, 0.0
    %v1828 = vadd.f32 %v1726, %v1824
    %v1829 = vadd.f32 %v1727, %v1825
    %v1830 = vadd.f32 %v1728, %v1826
    %v1831 = vadd.f32 %v1729, %v1827
    %v1832 = vsel %vm495, %v1828, 0.0
    %v1833 = vsel %vm495, %v1829, 0.0
    %v1834 = vadd.f32 %v1832, %v1833
    %1835 = vadd.xlane.f32.xlu0 %v1834
    %v1836 = vpop.xlane.xlu0 %1835
    %v1837 = vsel %vm495, %v1830, 0.0
    %v1838 = vsel %vm495, %v1831, 0.0
    %v1839 = vadd.f32 %v1837, %v1838
    %1840 = vadd.xlane.f32.xlu0 %v1839
    %v1841 = vpop.xlane.xlu0 %1840
    %v1842 = vsel %vm495, %v1836, 0.0
    %v1843 = vrot.slane %v1842, 4
    %v1844 = vadd.f32 %v1842, %v1843
    %v1845 = vrot.slane %v1844, 2
    %v1846 = vadd.f32 %v1844, %v1845
    %v1847 = vrot.slane %v1846, 1
    %v1848 = vadd.f32 %v1846, %v1847
    %v1849 = vsel %vm495, %v1841, 0.0
    %v1850 = vrot.slane %v1849, 4
    %v1851 = vadd.f32 %v1849, %v1850
    %v1852 = vrot.slane %v1851, 2
    %v1853 = vadd.f32 %v1851, %v1852
    %v1854 = vrot.slane %v1853, 1
    %v1855 = vadd.f32 %v1853, %v1854
    %v1856 = vmul.f32 %v1848, %v520
    %v1857 = vmul.f32 %v1855, %v520
    %v1858 = vsub.f32 %v1828, %v1856
    %v1859 = vsub.f32 %v1829, %v1856
    %v1860 = vsub.f32 %v1830, %v1857
    %v1861 = vsub.f32 %v1831, %v1857
    %v1862 = vmul.f32 %v1858, %v1858
    %v1863 = vmul.f32 %v1859, %v1859
    %v1864 = vmul.f32 %v1860, %v1860
    %v1865 = vmul.f32 %v1861, %v1861
    %v1866 = vsel %vm495, %v1862, 0.0
    %v1867 = vsel %vm495, %v1863, 0.0
    %v1868 = vadd.f32 %v1866, %v1867
    %1869 = vadd.xlane.f32.xlu0 %v1868
    %v1870 = vpop.xlane.xlu0 %1869
    %v1871 = vsel %vm495, %v1864, 0.0
    %v1872 = vsel %vm495, %v1865, 0.0
    %v1873 = vadd.f32 %v1871, %v1872
    %1874 = vadd.xlane.f32.xlu0 %v1873
    %v1875 = vpop.xlane.xlu0 %1874
    %v1876 = vsel %vm495, %v1870, 0.0
    %v1877 = vrot.slane %v1876, 4
    %v1878 = vadd.f32 %v1876, %v1877
    %v1879 = vrot.slane %v1878, 2
    %v1880 = vadd.f32 %v1878, %v1879
    %v1881 = vrot.slane %v1880, 1
    %v1882 = vadd.f32 %v1880, %v1881
    %v1883 = vsel %vm495, %v1875, 0.0
    %v1884 = vrot.slane %v1883, 4
    %v1885 = vadd.f32 %v1883, %v1884
    %v1886 = vrot.slane %v1885, 2
    %v1887 = vadd.f32 %v1885, %v1886
    %v1888 = vrot.slane %v1887, 1
    %v1889 = vadd.f32 %v1887, %v1888
    %v1890 = vmul.f32 %v1882, %v520
    %v1891 = vmul.f32 %v1889, %v520
    %v1892 = vadd.f32 %v1890, 1e-05
    %v1893 = vadd.f32 %v1891, 1e-05
    %v1894 = vrsqrt.pop %v1892
    %v1895 = vrsqrt.pop %v1893
    %v1896 = vsel %vm565, %v1856, 0.0
    %v1897 = vsel %vm565, %v1857, 0.0
    %v1898 = vsel %vm565, %v1894, 0.0
    %v1899 = vsel %vm565, %v1895, 0.0
    %v1900 = vsel %vm570, %v1828, 0.0
    %v1901 = vsel %vm570, %v1829, 0.0
    %v1902 = vadd.f32 %v1900, %v1901
    %1903 = vadd.xlane.f32.xlu0 %v1902
    %v1904 = vpop.xlane.xlu0 %1903
    %v1905 = vsel %vm570, %v1830, 0.0
    %v1906 = vsel %vm570, %v1831, 0.0
    %v1907 = vadd.f32 %v1905, %v1906
    %1908 = vadd.xlane.f32.xlu0 %v1907
    %v1909 = vpop.xlane.xlu0 %1908
    %v1912 = vrot.slane %v1904, 2
    %v1913 = vrot.slane %v1909, 2
    %v1916 = vsel %vm495, %v1912, 0.0
    %v1917 = vrot.slane %v1916, 4
    %v1918 = vadd.f32 %v1916, %v1917
    %v1919 = vrot.slane %v1918, 2
    %v1920 = vadd.f32 %v1918, %v1919
    %v1921 = vrot.slane %v1920, 1
    %v1922 = vadd.f32 %v1920, %v1921
    %v1923 = vsel %vm495, %v1913, 0.0
    %v1924 = vrot.slane %v1923, 4
    %v1925 = vadd.f32 %v1923, %v1924
    %v1926 = vrot.slane %v1925, 2
    %v1927 = vadd.f32 %v1925, %v1926
    %v1928 = vrot.slane %v1927, 1
    %v1929 = vadd.f32 %v1927, %v1928
    %v1930 = vmul.f32 %v1922, %v520
    %v1931 = vmul.f32 %v1929, %v520
    %v1932 = vsub.f32 %v1828, %v1930
    %v1933 = vsub.f32 %v1829, %v1930
    %v1934 = vsub.f32 %v1830, %v1931
    %v1935 = vsub.f32 %v1831, %v1931
    %v1936 = vmul.f32 %v1932, %v1932
    %v1937 = vmul.f32 %v1933, %v1933
    %v1938 = vmul.f32 %v1934, %v1934
    %v1939 = vmul.f32 %v1935, %v1935
    %v1940 = vsel %vm570, %v1936, 0.0
    %v1941 = vsel %vm570, %v1937, 0.0
    %v1942 = vadd.f32 %v1940, %v1941
    %1943 = vadd.xlane.f32.xlu0 %v1942
    %v1944 = vpop.xlane.xlu0 %1943
    %v1945 = vsel %vm570, %v1938, 0.0
    %v1946 = vsel %vm570, %v1939, 0.0
    %v1947 = vadd.f32 %v1945, %v1946
    %1948 = vadd.xlane.f32.xlu0 %v1947
    %v1949 = vpop.xlane.xlu0 %1948
    %v1952 = vrot.slane %v1944, 2
    %v1953 = vrot.slane %v1949, 2
    %v1956 = vsel %vm495, %v1952, 0.0
    %v1957 = vrot.slane %v1956, 4
    %v1958 = vadd.f32 %v1956, %v1957
    %v1959 = vrot.slane %v1958, 2
    %v1960 = vadd.f32 %v1958, %v1959
    %v1961 = vrot.slane %v1960, 1
    %v1962 = vadd.f32 %v1960, %v1961
    %v1963 = vsel %vm495, %v1953, 0.0
    %v1964 = vrot.slane %v1963, 4
    %v1965 = vadd.f32 %v1963, %v1964
    %v1966 = vrot.slane %v1965, 2
    %v1967 = vadd.f32 %v1965, %v1966
    %v1968 = vrot.slane %v1967, 1
    %v1969 = vadd.f32 %v1967, %v1968
    %v1970 = vmul.f32 %v1962, %v520
    %v1971 = vmul.f32 %v1969, %v520
    %v1972 = vadd.f32 %v1970, 1e-05
    %v1973 = vadd.f32 %v1971, 1e-05
    %v1974 = vrsqrt.pop %v1972
    %v1975 = vrsqrt.pop %v1973
    %v1976 = vsel %vm651, %v1930, 0.0
    %v1977 = vsel %vm651, %v1931, 0.0
    %v1978 = vsel %vm651, %v1974, 0.0
    %v1979 = vsel %vm651, %v1975, 0.0
    %v1980 = vadd.f32 %v1896, %v1976
    %v1981 = vadd.f32 %v1897, %v1977
    %v1982 = vadd.f32 %v1898, %v1978
    %v1983 = vadd.f32 %v1899, %v1979
    %s1984 = sld [smem:[#allocation2 + $0x44]]
    %v1985 = vstv %s1984
    %v1986 = vsel %vm237, %v1985, 0.0
    %s1987 = sld [smem:[#allocation2 + $0x48]]
    %v1988 = vstv %s1987
    %v1989 = vsel %vm237, %v1988, 0.0
    %s1990 = sld [smem:[#allocation2 + $0x45]]
    %v1991 = vstv %s1990
    %v1992 = vsel %vm304, %v1991, 0.0
    %s1993 = sld [smem:[#allocation2 + $0x49]]
    %v1994 = vstv %s1993
    %v1995 = vsel %vm304, %v1994, 0.0
    %v1996 = vadd.f32 %v1986, %v1992
    %v1997 = vadd.f32 %v1989, %v1995
    %s1998 = sld [smem:[#allocation2 + $0x46]]
    %v1999 = vstv %s1998
    %v2000 = vsel %vm375, %v1999, 0.0
    %s2001 = sld [smem:[#allocation2 + $0x4a]]
    %v2002 = vstv %s2001
    %v2003 = vsel %vm375, %v2002, 0.0
    %v2004 = vadd.f32 %v1996, %v2000
    %v2005 = vadd.f32 %v1997, %v2003
    %s2006 = sld [smem:[#allocation2 + $0x47]]
    %v2007 = vstv %s2006
    %v2008 = vsel %vm446, %v2007, 0.0
    %s2009 = sld [smem:[#allocation2 + $0x4b]]
    %v2010 = vstv %s2009
    %v2011 = vsel %vm446, %v2010, 0.0
    %v2012 = vadd.f32 %v2004, %v2008
    %v2013 = vadd.f32 %v2005, %v2011
    %v2014 = vsub.f32 %v1828, %v1980
    %v2015 = vsub.f32 %v1829, %v1980
    %v2016 = vsub.f32 %v1830, %v1981
    %v2017 = vsub.f32 %v1831, %v1981
    %v2018 = vmul.f32 %v2014, %v1982
    %v2019 = vmul.f32 %v2015, %v1982
    %v2020 = vmul.f32 %v2016, %v1983
    %v2021 = vmul.f32 %v2017, %v1983
    %v2022 = vmul.f32 %v2018, %v2012
    %v2023 = vmul.f32 %v2019, %v2012
    %v2024 = vmul.f32 %v2020, %v2012
    %v2025 = vmul.f32 %v2021, %v2012
    %v2026 = vadd.f32 %v2022, %v2013
    %v2027 = vadd.f32 %v2023, %v2013
    %v2028 = vadd.f32 %v2024, %v2013
    %v2029 = vadd.f32 %v2025, %v2013
    %v2030 = vmax.f32 %v2026, 0.0
    %v2031 = vmax.f32 %v2027, 0.0
    %v2032 = vmax.f32 %v2028, 0.0
    %v2033 = vmax.f32 %v2029, 0.0
    %2038 = vrot.lane.b32.xlu0 %v706, 126
    %v2039 = vpop.permute.xlu0 %2038
    %2040 = vrot.lane.b32.xlu0 %v707, 126
    %v2041 = vpop.permute.xlu0 %2040
    %2042 = vrot.lane.b32.xlu0 %v708, 126
    %v2043 = vpop.permute.xlu0 %2042
    %2044 = vrot.lane.b32.xlu0 %v709, 126
    %v2045 = vpop.permute.xlu0 %2044
    %v2046 = vsel %vm1332, %v2039, %v2041
    %v2047 = vsel %vm1332, %v2041, %v2039
    %v2048 = vsel %vm1332, %v2043, %v2045
    %v2049 = vsel %vm1332, %v2045, %v2043
    %2054 = vrot.lane.b32.xlu0 %v707, 2
    %v2055 = vpop.permute.xlu0 %2054
    %2056 = vrot.lane.b32.xlu0 %v706, 2
    %v2057 = vpop.permute.xlu0 %2056
    %2058 = vrot.lane.b32.xlu0 %v709, 2
    %v2059 = vpop.permute.xlu0 %2058
    %2060 = vrot.lane.b32.xlu0 %v708, 2
    %v2061 = vpop.permute.xlu0 %2060
    %v2062 = vsel %vm1349, %v2055, %v2057
    %v2063 = vsel %vm1349, %v2057, %v2055
    %v2064 = vsel %vm1349, %v2059, %v2061
    %v2065 = vsel %vm1349, %v2061, %v2059
    %v2070 = vsel %vm1318, %v2046, %v2062
    %v2071 = vsel %vm1319, %v2047, %v2063
    %v2072 = vsel %vm1318, %v2048, %v2064
    %v2073 = vsel %vm1319, %v2049, %v2065
    %v2074 = vadd.f32 %v706, %v2070
    %v2075 = vadd.f32 %v707, %v2071
    %v2076 = vadd.f32 %v708, %v2072
    %v2077 = vadd.f32 %v709, %v2073
    %v2078 = vmul.f32 %v2074, 0.5
    %v2079 = vmul.f32 %v2075, 0.5
    %v2080 = vmul.f32 %v2076, 0.5
    %v2081 = vmul.f32 %v2077, 0.5
    %2086 = vrot.lane.b32.xlu0 %v2078, 96
    %v2087 = vpop.permute.xlu0 %2086
    %2088 = vrot.lane.b32.xlu0 %v2079, 96
    %v2089 = vpop.permute.xlu0 %2088
    %2090 = vrot.lane.b32.xlu0 %v2080, 96
    %v2091 = vpop.permute.xlu0 %2090
    %2092 = vrot.lane.b32.xlu0 %v2081, 96
    %v2093 = vpop.permute.xlu0 %2092
    %v2094 = vsel %vm1390, %v2087, %v2089
    %v2095 = vsel %vm1390, %v2089, %v2087
    %v2096 = vsel %vm1390, %v2091, %v2093
    %v2097 = vsel %vm1390, %v2093, %v2091
    %2102 = vrot.lane.b32.xlu0 %v2079, 32
    %v2103 = vpop.permute.xlu0 %2102
    %2104 = vrot.lane.b32.xlu0 %v2078, 32
    %v2105 = vpop.permute.xlu0 %2104
    %2106 = vrot.lane.b32.xlu0 %v2081, 32
    %v2107 = vpop.permute.xlu0 %2106
    %2108 = vrot.lane.b32.xlu0 %v2080, 32
    %v2109 = vpop.permute.xlu0 %2108
    %v2110 = vsel %vm1407, %v2103, %v2105
    %v2111 = vsel %vm1407, %v2105, %v2103
    %v2112 = vsel %vm1407, %v2107, %v2109
    %v2113 = vsel %vm1407, %v2109, %v2107
    %v2118 = vsel %vm1376, %v2094, %v2110
    %v2119 = vsel %vm1377, %v2095, %v2111
    %v2120 = vsel %vm1376, %v2096, %v2112
    %v2121 = vsel %vm1377, %v2097, %v2113
    %v2122 = vadd.f32 %v2078, %v2118
    %v2123 = vadd.f32 %v2079, %v2119
    %v2124 = vadd.f32 %v2080, %v2120
    %v2125 = vadd.f32 %v2081, %v2121
    %v2126 = vmul.f32 %v2122, 0.5
    %v2127 = vmul.f32 %v2123, 0.5
    %v2128 = vmul.f32 %v2124, 0.5
    %v2129 = vmul.f32 %v2125, 0.5
    %s2130 = sld [smem:[#allocation2 + $0x4c]]
    %v2131 = vstv %s2130
    %v2132 = vmul.f32 %v2126, %v2131
    %v2133 = vmul.f32 %v2127, %v2131
    %v2134 = vmul.f32 %v2128, %v2131
    %v2135 = vmul.f32 %v2129, %v2131
    %s2136 = sld [smem:[#allocation2 + $0x50]]
    %v2137 = vstv %s2136
    %v2138 = vmul.f32 %v2126, %v2137
    %v2139 = vmul.f32 %v2127, %v2137
    %v2140 = vmul.f32 %v2128, %v2137
    %v2141 = vmul.f32 %v2129, %v2137
    %v2146 = vrot.slane %v2138, 1
    %v2147 = vrot.slane %v2139, 1
    %v2148 = vrot.slane %v2140, 1
    %v2149 = vrot.slane %v2141, 1
    %v2154 = vadd.f32 %v2132, %v2146
    %v2155 = vadd.f32 %v2133, %v2147
    %v2156 = vadd.f32 %v2134, %v2148
    %v2157 = vadd.f32 %v2135, %v2149
    %s2158 = sld [smem:[#allocation2 + $0x54]]
    %v2159 = vstv %s2158
    %v2160 = vmul.f32 %v2126, %v2159
    %v2161 = vmul.f32 %v2127, %v2159
    %v2162 = vmul.f32 %v2128, %v2159
    %v2163 = vmul.f32 %v2129, %v2159
    %v2168 = vrot.slane %v2160, 2
    %v2169 = vrot.slane %v2161, 2
    %v2170 = vrot.slane %v2162, 2
    %v2171 = vrot.slane %v2163, 2
    %v2176 = vadd.f32 %v2154, %v2168
    %v2177 = vadd.f32 %v2155, %v2169
    %v2178 = vadd.f32 %v2156, %v2170
    %v2179 = vadd.f32 %v2157, %v2171
    %s2180 = sld [smem:[#allocation2 + $0x58]]
    %v2181 = vstv %s2180
    %v2182 = vmul.f32 %v2126, %v2181
    %v2183 = vmul.f32 %v2127, %v2181
    %v2184 = vmul.f32 %v2128, %v2181
    %v2185 = vmul.f32 %v2129, %v2181
    %v2190 = vrot.slane %v2182, 3
    %v2191 = vrot.slane %v2183, 3
    %v2192 = vrot.slane %v2184, 3
    %v2193 = vrot.slane %v2185, 3
    %v2198 = vadd.f32 %v2176, %v2190
    %v2199 = vadd.f32 %v2177, %v2191
    %v2200 = vadd.f32 %v2178, %v2192
    %v2201 = vadd.f32 %v2179, %v2193
    %s2202 = sld [smem:[#allocation2 + $0x5c]]
    %v2203 = vstv %s2202
    %v2204 = vadd.f32 %v2198, %v2203
    %v2205 = vadd.f32 %v2199, %v2203
    %v2206 = vadd.f32 %v2200, %v2203
    %v2207 = vadd.f32 %v2201, %v2203
    %v2208 = vlaneseq
    %v2209 = vshrl.u32 %v2208, 7
    %v2210 = vsub.s32 0, %v2209
    %v2211 = vrot.slane %v2204, %v2210
    %v2212 = vlaneseq
    %v2213 = vshrl.u32 %v2212, 7
    %v2214 = vsub.s32 0, %v2213
    %v2215 = vrot.slane %v2205, %v2214
    %v2216 = vlaneseq
    %v2217 = vshrl.u32 %v2216, 7
    %v2218 = vsub.s32 0, %v2217
    %v2219 = vrot.slane %v2206, %v2218
    %v2220 = vlaneseq
    %v2221 = vshrl.u32 %v2220, 7
    %v2222 = vsub.s32 0, %v2221
    %v2223 = vrot.slane %v2207, %v2222
    %v2224 = vsel %vm239, %v2211, 0.0
    %v2225 = vsel %vm239, %v2215, 0.0
    %v2226 = vsel %vm239, %v2219, 0.0
    %v2227 = vsel %vm239, %v2223, 0.0
    %s2228 = sld [smem:[#allocation2 + $0x4d]]
    %v2229 = vstv %s2228
    %v2230 = vmul.f32 %v2126, %v2229
    %v2231 = vmul.f32 %v2127, %v2229
    %v2232 = vmul.f32 %v2128, %v2229
    %v2233 = vmul.f32 %v2129, %v2229
    %s2234 = sld [smem:[#allocation2 + $0x51]]
    %v2235 = vstv %s2234
    %v2236 = vmul.f32 %v2126, %v2235
    %v2237 = vmul.f32 %v2127, %v2235
    %v2238 = vmul.f32 %v2128, %v2235
    %v2239 = vmul.f32 %v2129, %v2235
    %v2244 = vrot.slane %v2236, 1
    %v2245 = vrot.slane %v2237, 1
    %v2246 = vrot.slane %v2238, 1
    %v2247 = vrot.slane %v2239, 1
    %v2252 = vadd.f32 %v2230, %v2244
    %v2253 = vadd.f32 %v2231, %v2245
    %v2254 = vadd.f32 %v2232, %v2246
    %v2255 = vadd.f32 %v2233, %v2247
    %s2256 = sld [smem:[#allocation2 + $0x55]]
    %v2257 = vstv %s2256
    %v2258 = vmul.f32 %v2126, %v2257
    %v2259 = vmul.f32 %v2127, %v2257
    %v2260 = vmul.f32 %v2128, %v2257
    %v2261 = vmul.f32 %v2129, %v2257
    %v2266 = vrot.slane %v2258, 2
    %v2267 = vrot.slane %v2259, 2
    %v2268 = vrot.slane %v2260, 2
    %v2269 = vrot.slane %v2261, 2
    %v2274 = vadd.f32 %v2252, %v2266
    %v2275 = vadd.f32 %v2253, %v2267
    %v2276 = vadd.f32 %v2254, %v2268
    %v2277 = vadd.f32 %v2255, %v2269
    %s2278 = sld [smem:[#allocation2 + $0x59]]
    %v2279 = vstv %s2278
    %v2280 = vmul.f32 %v2126, %v2279
    %v2281 = vmul.f32 %v2127, %v2279
    %v2282 = vmul.f32 %v2128, %v2279
    %v2283 = vmul.f32 %v2129, %v2279
    %v2288 = vrot.slane %v2280, 3
    %v2289 = vrot.slane %v2281, 3
    %v2290 = vrot.slane %v2282, 3
    %v2291 = vrot.slane %v2283, 3
    %v2296 = vadd.f32 %v2274, %v2288
    %v2297 = vadd.f32 %v2275, %v2289
    %v2298 = vadd.f32 %v2276, %v2290
    %v2299 = vadd.f32 %v2277, %v2291
    %s2300 = sld [smem:[#allocation2 + $0x5d]]
    %v2301 = vstv %s2300
    %v2302 = vadd.f32 %v2296, %v2301
    %v2303 = vadd.f32 %v2297, %v2301
    %v2304 = vadd.f32 %v2298, %v2301
    %v2305 = vadd.f32 %v2299, %v2301
    %v2306 = vlaneseq
    %v2307 = vshrl.u32 %v2306, 7
    %v2308 = vsub.s32 0, %v2307
    %v2309 = vrot.slane %v2302, %v2308
    %v2310 = vlaneseq
    %v2311 = vshrl.u32 %v2310, 7
    %v2312 = vsub.s32 0, %v2311
    %v2313 = vrot.slane %v2303, %v2312
    %v2314 = vlaneseq
    %v2315 = vshrl.u32 %v2314, 7
    %v2316 = vsub.s32 0, %v2315
    %v2317 = vrot.slane %v2304, %v2316
    %v2318 = vlaneseq
    %v2319 = vshrl.u32 %v2318, 7
    %v2320 = vsub.s32 0, %v2319
    %v2321 = vrot.slane %v2305, %v2320
    %v2322 = vsel %vm306, %v2309, 0.0
    %v2323 = vsel %vm306, %v2313, 0.0
    %v2324 = vsel %vm306, %v2317, 0.0
    %v2325 = vsel %vm306, %v2321, 0.0
    %v2326 = vadd.f32 %v2224, %v2322
    %v2327 = vadd.f32 %v2225, %v2323
    %v2328 = vadd.f32 %v2226, %v2324
    %v2329 = vadd.f32 %v2227, %v2325
    %s2330 = sld [smem:[#allocation2 + $0x4e]]
    %v2331 = vstv %s2330
    %v2332 = vmul.f32 %v2126, %v2331
    %v2333 = vmul.f32 %v2127, %v2331
    %v2334 = vmul.f32 %v2128, %v2331
    %v2335 = vmul.f32 %v2129, %v2331
    %s2336 = sld [smem:[#allocation2 + $0x52]]
    %v2337 = vstv %s2336
    %v2338 = vmul.f32 %v2126, %v2337
    %v2339 = vmul.f32 %v2127, %v2337
    %v2340 = vmul.f32 %v2128, %v2337
    %v2341 = vmul.f32 %v2129, %v2337
    %v2346 = vrot.slane %v2338, 1
    %v2347 = vrot.slane %v2339, 1
    %v2348 = vrot.slane %v2340, 1
    %v2349 = vrot.slane %v2341, 1
    %v2354 = vadd.f32 %v2332, %v2346
    %v2355 = vadd.f32 %v2333, %v2347
    %v2356 = vadd.f32 %v2334, %v2348
    %v2357 = vadd.f32 %v2335, %v2349
    %s2358 = sld [smem:[#allocation2 + $0x56]]
    %v2359 = vstv %s2358
    %v2360 = vmul.f32 %v2126, %v2359
    %v2361 = vmul.f32 %v2127, %v2359
    %v2362 = vmul.f32 %v2128, %v2359
    %v2363 = vmul.f32 %v2129, %v2359
    %v2368 = vrot.slane %v2360, 2
    %v2369 = vrot.slane %v2361, 2
    %v2370 = vrot.slane %v2362, 2
    %v2371 = vrot.slane %v2363, 2
    %v2376 = vadd.f32 %v2354, %v2368
    %v2377 = vadd.f32 %v2355, %v2369
    %v2378 = vadd.f32 %v2356, %v2370
    %v2379 = vadd.f32 %v2357, %v2371
    %s2380 = sld [smem:[#allocation2 + $0x5a]]
    %v2381 = vstv %s2380
    %v2382 = vmul.f32 %v2126, %v2381
    %v2383 = vmul.f32 %v2127, %v2381
    %v2384 = vmul.f32 %v2128, %v2381
    %v2385 = vmul.f32 %v2129, %v2381
    %v2390 = vrot.slane %v2382, 3
    %v2391 = vrot.slane %v2383, 3
    %v2392 = vrot.slane %v2384, 3
    %v2393 = vrot.slane %v2385, 3
    %v2398 = vadd.f32 %v2376, %v2390
    %v2399 = vadd.f32 %v2377, %v2391
    %v2400 = vadd.f32 %v2378, %v2392
    %v2401 = vadd.f32 %v2379, %v2393
    %s2402 = sld [smem:[#allocation2 + $0x5e]]
    %v2403 = vstv %s2402
    %v2404 = vadd.f32 %v2398, %v2403
    %v2405 = vadd.f32 %v2399, %v2403
    %v2406 = vadd.f32 %v2400, %v2403
    %v2407 = vadd.f32 %v2401, %v2403
    %v2408 = vlaneseq
    %v2409 = vshrl.u32 %v2408, 7
    %v2410 = vsub.s32 0, %v2409
    %v2411 = vrot.slane %v2404, %v2410
    %v2412 = vlaneseq
    %v2413 = vshrl.u32 %v2412, 7
    %v2414 = vsub.s32 0, %v2413
    %v2415 = vrot.slane %v2405, %v2414
    %v2416 = vlaneseq
    %v2417 = vshrl.u32 %v2416, 7
    %v2418 = vsub.s32 0, %v2417
    %v2419 = vrot.slane %v2406, %v2418
    %v2420 = vlaneseq
    %v2421 = vshrl.u32 %v2420, 7
    %v2422 = vsub.s32 0, %v2421
    %v2423 = vrot.slane %v2407, %v2422
    %v2424 = vsel %vm377, %v2411, 0.0
    %v2425 = vsel %vm377, %v2415, 0.0
    %v2426 = vsel %vm377, %v2419, 0.0
    %v2427 = vsel %vm377, %v2423, 0.0
    %v2428 = vadd.f32 %v2326, %v2424
    %v2429 = vadd.f32 %v2327, %v2425
    %v2430 = vadd.f32 %v2328, %v2426
    %v2431 = vadd.f32 %v2329, %v2427
    %s2432 = sld [smem:[#allocation2 + $0x4f]]
    %v2433 = vstv %s2432
    %v2434 = vmul.f32 %v2126, %v2433
    %v2435 = vmul.f32 %v2127, %v2433
    %v2436 = vmul.f32 %v2128, %v2433
    %v2437 = vmul.f32 %v2129, %v2433
    %s2438 = sld [smem:[#allocation2 + $0x53]]
    %v2439 = vstv %s2438
    %v2440 = vmul.f32 %v2126, %v2439
    %v2441 = vmul.f32 %v2127, %v2439
    %v2442 = vmul.f32 %v2128, %v2439
    %v2443 = vmul.f32 %v2129, %v2439
    %v2448 = vrot.slane %v2440, 1
    %v2449 = vrot.slane %v2441, 1
    %v2450 = vrot.slane %v2442, 1
    %v2451 = vrot.slane %v2443, 1
    %v2456 = vadd.f32 %v2434, %v2448
    %v2457 = vadd.f32 %v2435, %v2449
    %v2458 = vadd.f32 %v2436, %v2450
    %v2459 = vadd.f32 %v2437, %v2451
    %s2460 = sld [smem:[#allocation2 + $0x57]]
    %v2461 = vstv %s2460
    %v2462 = vmul.f32 %v2126, %v2461
    %v2463 = vmul.f32 %v2127, %v2461
    %v2464 = vmul.f32 %v2128, %v2461
    %v2465 = vmul.f32 %v2129, %v2461
    %v2470 = vrot.slane %v2462, 2
    %v2471 = vrot.slane %v2463, 2
    %v2472 = vrot.slane %v2464, 2
    %v2473 = vrot.slane %v2465, 2
    %v2478 = vadd.f32 %v2456, %v2470
    %v2479 = vadd.f32 %v2457, %v2471
    %v2480 = vadd.f32 %v2458, %v2472
    %v2481 = vadd.f32 %v2459, %v2473
    %s2482 = sld [smem:[#allocation2 + $0x5b]]
    %v2483 = vstv %s2482
    %v2484 = vmul.f32 %v2126, %v2483
    %v2485 = vmul.f32 %v2127, %v2483
    %v2486 = vmul.f32 %v2128, %v2483
    %v2487 = vmul.f32 %v2129, %v2483
    %v2492 = vrot.slane %v2484, 3
    %v2493 = vrot.slane %v2485, 3
    %v2494 = vrot.slane %v2486, 3
    %v2495 = vrot.slane %v2487, 3
    %v2500 = vadd.f32 %v2478, %v2492
    %v2501 = vadd.f32 %v2479, %v2493
    %v2502 = vadd.f32 %v2480, %v2494
    %v2503 = vadd.f32 %v2481, %v2495
    %s2504 = sld [smem:[#allocation2 + $0x5f]]
    %v2505 = vstv %s2504
    %v2506 = vadd.f32 %v2500, %v2505
    %v2507 = vadd.f32 %v2501, %v2505
    %v2508 = vadd.f32 %v2502, %v2505
    %v2509 = vadd.f32 %v2503, %v2505
    %v2510 = vlaneseq
    %v2511 = vshrl.u32 %v2510, 7
    %v2512 = vsub.s32 0, %v2511
    %v2513 = vrot.slane %v2506, %v2512
    %v2514 = vlaneseq
    %v2515 = vshrl.u32 %v2514, 7
    %v2516 = vsub.s32 0, %v2515
    %v2517 = vrot.slane %v2507, %v2516
    %v2518 = vlaneseq
    %v2519 = vshrl.u32 %v2518, 7
    %v2520 = vsub.s32 0, %v2519
    %v2521 = vrot.slane %v2508, %v2520
    %v2522 = vlaneseq
    %v2523 = vshrl.u32 %v2522, 7
    %v2524 = vsub.s32 0, %v2523
    %v2525 = vrot.slane %v2509, %v2524
    %v2526 = vsel %vm448, %v2513, 0.0
    %v2527 = vsel %vm448, %v2517, 0.0
    %v2528 = vsel %vm448, %v2521, 0.0
    %v2529 = vsel %vm448, %v2525, 0.0
    %v2530 = vadd.f32 %v2428, %v2526
    %v2531 = vadd.f32 %v2429, %v2527
    %v2532 = vadd.f32 %v2430, %v2528
    %v2533 = vadd.f32 %v2431, %v2529
    %vm2534 = vcmask 1040384
    %v2535 = vsel %vm2534, %v2530, 0.0
    %v2536 = vsel %vm2534, %v2531, 0.0
    %v2537 = vadd.f32 %v2535, %v2536
    %2538 = vadd.xlane.f32.xlu0 %v2537
    %v2539 = vpop.xlane.xlu0 %2538
    %v2540 = vsel %vm2534, %v2532, 0.0
    %v2541 = vsel %vm2534, %v2533, 0.0
    %v2542 = vadd.f32 %v2540, %v2541
    %2543 = vadd.xlane.f32.xlu0 %v2542
    %v2544 = vpop.xlane.xlu0 %2543
    %v2545 = vadd.f32 %v2539, 0.0
    %v2546 = vadd.f32 %v2544, 0.0
    %v2547 = vsel %vm2534, %v2545, 0.0
    %v2548 = vsel %vm2534, %v2546, 0.0
    %v2549 = vadd.f32 %v2547, %v2548
    %v2550 = vmul.f32 %v2549, %v520
    %v2551 = vsub.f32 %v2530, %v2550
    %v2552 = vsub.f32 %v2531, %v2550
    %v2553 = vsub.f32 %v2532, %v2550
    %v2554 = vsub.f32 %v2533, %v2550
    %v2555 = vmul.f32 %v2551, %v2551
    %v2556 = vmul.f32 %v2552, %v2552
    %v2557 = vmul.f32 %v2553, %v2553
    %v2558 = vmul.f32 %v2554, %v2554
    %v2559 = vsel %vm2534, %v2555, 0.0
    %v2560 = vsel %vm2534, %v2556, 0.0
    %v2561 = vadd.f32 %v2559, %v2560
    %2562 = vadd.xlane.f32.xlu0 %v2561
    %v2563 = vpop.xlane.xlu0 %2562
    %v2564 = vsel %vm2534, %v2557, 0.0
    %v2565 = vsel %vm2534, %v2558, 0.0
    %v2566 = vadd.f32 %v2564, %v2565
    %2567 = vadd.xlane.f32.xlu0 %v2566
    %v2568 = vpop.xlane.xlu0 %2567
    %v2569 = vadd.f32 %v2563, 0.0
    %v2570 = vadd.f32 %v2568, 0.0
    %v2571 = vsel %vm2534, %v2569, 0.0
    %v2572 = vsel %vm2534, %v2570, 0.0
    %v2573 = vadd.f32 %v2571, %v2572
    %v2574 = vmul.f32 %v2573, %v520
    %v2575 = vadd.f32 %v2574, 1e-05
    %v2576 = vrsqrt.pop %v2575
    %v2577 = vlaneseq
    %v2578 = vshrl.u32 %v2577, 7
    %v2579 = vsub.s32 0, %v2578
    %v2580 = vrot.slane %v2550, %v2579
    %v2581 = vsel %vm237, %v2580, 0.0
    %v2582 = vlaneseq
    %v2583 = vshrl.u32 %v2582, 7
    %v2584 = vsub.s32 0, %v2583
    %v2585 = vrot.slane %v2576, %v2584
    %v2586 = vsel %vm237, %v2585, 0.0
    %s2587 = sld [smem:[#allocation2 + $0x60]]
    %v2588 = vstv %s2587
    %v2589 = vsel %vm237, %v2588, 0.0
    %s2590 = sld [smem:[#allocation2 + $0x64]]
    %v2591 = vstv %s2590
    %v2592 = vsel %vm237, %v2591, 0.0
    %vm2593 = vcmask 1041409
    %v2594 = vsel %vm2593, %v2530, 0.0
    %v2595 = vsel %vm2593, %v2531, 0.0
    %v2596 = vadd.f32 %v2594, %v2595
    %2597 = vadd.xlane.f32.xlu0 %v2596
    %v2598 = vpop.xlane.xlu0 %2597
    %v2599 = vsel %vm2593, %v2532, 0.0
    %v2600 = vsel %vm2593, %v2533, 0.0
    %v2601 = vadd.f32 %v2599, %v2600
    %2602 = vadd.xlane.f32.xlu0 %v2601
    %v2603 = vpop.xlane.xlu0 %2602
    %v2604 = vadd.f32 %v2598, 0.0
    %v2605 = vadd.f32 %v2603, 0.0
    %v2606 = vsel %vm2593, %v2604, 0.0
    %v2607 = vsel %vm2593, %v2605, 0.0
    %v2608 = vadd.f32 %v2606, %v2607
    %v2609 = vmul.f32 %v2608, %v520
    %v2610 = vsub.f32 %v2530, %v2609
    %v2611 = vsub.f32 %v2531, %v2609
    %v2612 = vsub.f32 %v2532, %v2609
    %v2613 = vsub.f32 %v2533, %v2609
    %v2614 = vmul.f32 %v2610, %v2610
    %v2615 = vmul.f32 %v2611, %v2611
    %v2616 = vmul.f32 %v2612, %v2612
    %v2617 = vmul.f32 %v2613, %v2613
    %v2618 = vsel %vm2593, %v2614, 0.0
    %v2619 = vsel %vm2593, %v2615, 0.0
    %v2620 = vadd.f32 %v2618, %v2619
    %2621 = vadd.xlane.f32.xlu0 %v2620
    %v2622 = vpop.xlane.xlu0 %2621
    %v2623 = vsel %vm2593, %v2616, 0.0
    %v2624 = vsel %vm2593, %v2617, 0.0
    %v2625 = vadd.f32 %v2623, %v2624
    %2626 = vadd.xlane.f32.xlu0 %v2625
    %v2627 = vpop.xlane.xlu0 %2626
    %v2628 = vadd.f32 %v2622, 0.0
    %v2629 = vadd.f32 %v2627, 0.0
    %v2630 = vsel %vm2593, %v2628, 0.0
    %v2631 = vsel %vm2593, %v2629, 0.0
    %v2632 = vadd.f32 %v2630, %v2631
    %v2633 = vmul.f32 %v2632, %v520
    %v2634 = vadd.f32 %v2633, 1e-05
    %v2635 = vrsqrt.pop %v2634
    %v2636 = vlaneseq
    %v2637 = vshrl.u32 %v2636, 7
    %v2638 = vsub.s32 1, %v2637
    %v2639 = vrot.slane %v2609, %v2638
    %v2640 = vsel %vm304, %v2639, 0.0
    %v2641 = vlaneseq
    %v2642 = vshrl.u32 %v2641, 7
    %v2643 = vsub.s32 1, %v2642
    %v2644 = vrot.slane %v2635, %v2643
    %v2645 = vsel %vm304, %v2644, 0.0
    %s2646 = sld [smem:[#allocation2 + $0x61]]
    %v2647 = vstv %s2646
    %v2648 = vsel %vm304, %v2647, 0.0
    %s2649 = sld [smem:[#allocation2 + $0x65]]
    %v2650 = vstv %s2649
    %v2651 = vsel %vm304, %v2650, 0.0
    %v2652 = vadd.f32 %v2581, %v2640
    %v2653 = vadd.f32 %v2586, %v2645
    %v2654 = vadd.f32 %v2589, %v2648
    %v2655 = vadd.f32 %v2592, %v2651
    %vm2656 = vcmask 1042434
    %v2657 = vsel %vm2656, %v2530, 0.0
    %v2658 = vsel %vm2656, %v2531, 0.0
    %v2659 = vadd.f32 %v2657, %v2658
    %2660 = vadd.xlane.f32.xlu0 %v2659
    %v2661 = vpop.xlane.xlu0 %2660
    %v2662 = vsel %vm2656, %v2532, 0.0
    %v2663 = vsel %vm2656, %v2533, 0.0
    %v2664 = vadd.f32 %v2662, %v2663
    %2665 = vadd.xlane.f32.xlu0 %v2664
    %v2666 = vpop.xlane.xlu0 %2665
    %v2667 = vadd.f32 %v2661, 0.0
    %v2668 = vadd.f32 %v2666, 0.0
    %v2669 = vsel %vm2656, %v2667, 0.0
    %v2670 = vsel %vm2656, %v2668, 0.0
    %v2671 = vadd.f32 %v2669, %v2670
    %v2672 = vmul.f32 %v2671, %v520
    %v2673 = vsub.f32 %v2530, %v2672
    %v2674 = vsub.f32 %v2531, %v2672
    %v2675 = vsub.f32 %v2532, %v2672
    %v2676 = vsub.f32 %v2533, %v2672
    %v2677 = vmul.f32 %v2673, %v2673
    %v2678 = vmul.f32 %v2674, %v2674
    %v2679 = vmul.f32 %v2675, %v2675
    %v2680 = vmul.f32 %v2676, %v2676
    %v2681 = vsel %vm2656, %v2677, 0.0
    %v2682 = vsel %vm2656, %v2678, 0.0
    %v2683 = vadd.f32 %v2681, %v2682
    %2684 = vadd.xlane.f32.xlu0 %v2683
    %v2685 = vpop.xlane.xlu0 %2684
    %v2686 = vsel %vm2656, %v2679, 0.0
    %v2687 = vsel %vm2656, %v2680, 0.0
    %v2688 = vadd.f32 %v2686, %v2687
    %2689 = vadd.xlane.f32.xlu0 %v2688
    %v2690 = vpop.xlane.xlu0 %2689
    %v2691 = vadd.f32 %v2685, 0.0
    %v2692 = vadd.f32 %v2690, 0.0
    %v2693 = vsel %vm2656, %v2691, 0.0
    %v2694 = vsel %vm2656, %v2692, 0.0
    %v2695 = vadd.f32 %v2693, %v2694
    %v2696 = vmul.f32 %v2695, %v520
    %v2697 = vadd.f32 %v2696, 1e-05
    %v2698 = vrsqrt.pop %v2697
    %v2699 = vlaneseq
    %v2700 = vshrl.u32 %v2699, 7
    %v2701 = vsub.s32 2, %v2700
    %v2702 = vrot.slane %v2672, %v2701
    %v2703 = vsel %vm375, %v2702, 0.0
    %v2704 = vlaneseq
    %v2705 = vshrl.u32 %v2704, 7
    %v2706 = vsub.s32 2, %v2705
    %v2707 = vrot.slane %v2698, %v2706
    %v2708 = vsel %vm375, %v2707, 0.0
    %s2709 = sld [smem:[#allocation2 + $0x62]]
    %v2710 = vstv %s2709
    %v2711 = vsel %vm375, %v2710, 0.0
    %s2712 = sld [smem:[#allocation2 + $0x66]]
    %v2713 = vstv %s2712
    %v2714 = vsel %vm375, %v2713, 0.0
    %v2715 = vadd.f32 %v2652, %v2703
    %v2716 = vadd.f32 %v2653, %v2708
    %v2717 = vadd.f32 %v2654, %v2711
    %v2718 = vadd.f32 %v2655, %v2714
    %vm2719 = vcmask 1043459
    %v2720 = vsel %vm2719, %v2530, 0.0
    %v2721 = vsel %vm2719, %v2531, 0.0
    %v2722 = vadd.f32 %v2720, %v2721
    %2723 = vadd.xlane.f32.xlu0 %v2722
    %v2724 = vpop.xlane.xlu0 %2723
    %v2725 = vsel %vm2719, %v2532, 0.0
    %v2726 = vsel %vm2719, %v2533, 0.0
    %v2727 = vadd.f32 %v2725, %v2726
    %2728 = vadd.xlane.f32.xlu0 %v2727
    %v2729 = vpop.xlane.xlu0 %2728
    %v2730 = vadd.f32 %v2724, 0.0
    %v2731 = vadd.f32 %v2729, 0.0
    %v2732 = vsel %vm2719, %v2730, 0.0
    %v2733 = vsel %vm2719, %v2731, 0.0
    %v2734 = vadd.f32 %v2732, %v2733
    %v2735 = vmul.f32 %v2734, %v520
    %v2736 = vsub.f32 %v2530, %v2735
    %v2737 = vsub.f32 %v2531, %v2735
    %v2738 = vsub.f32 %v2532, %v2735
    %v2739 = vsub.f32 %v2533, %v2735
    %v2740 = vmul.f32 %v2736, %v2736
    %v2741 = vmul.f32 %v2737, %v2737
    %v2742 = vmul.f32 %v2738, %v2738
    %v2743 = vmul.f32 %v2739, %v2739
    %v2744 = vsel %vm2719, %v2740, 0.0
    %v2745 = vsel %vm2719, %v2741, 0.0
    %v2746 = vadd.f32 %v2744, %v2745
    %2747 = vadd.xlane.f32.xlu0 %v2746
    %v2748 = vpop.xlane.xlu0 %2747
    %v2749 = vsel %vm2719, %v2742, 0.0
    %v2750 = vsel %vm2719, %v2743, 0.0
    %v2751 = vadd.f32 %v2749, %v2750
    %2752 = vadd.xlane.f32.xlu0 %v2751
    %v2753 = vpop.xlane.xlu0 %2752
    %v2754 = vadd.f32 %v2748, 0.0
    %v2755 = vadd.f32 %v2753, 0.0
    %v2756 = vsel %vm2719, %v2754, 0.0
    %v2757 = vsel %vm2719, %v2755, 0.0
    %v2758 = vadd.f32 %v2756, %v2757
    %v2759 = vmul.f32 %v2758, %v520
    %v2760 = vadd.f32 %v2759, 1e-05
    %v2761 = vrsqrt.pop %v2760
    %v2762 = vlaneseq
    %v2763 = vshrl.u32 %v2762, 7
    %v2764 = vsub.s32 3, %v2763
    %v2765 = vrot.slane %v2735, %v2764
    %v2766 = vsel %vm446, %v2765, 0.0
    %v2767 = vlaneseq
    %v2768 = vshrl.u32 %v2767, 7
    %v2769 = vsub.s32 3, %v2768
    %v2770 = vrot.slane %v2761, %v2769
    %v2771 = vsel %vm446, %v2770, 0.0
    %s2772 = sld [smem:[#allocation2 + $0x63]]
    %v2773 = vstv %s2772
    %v2774 = vsel %vm446, %v2773, 0.0
    %s2775 = sld [smem:[#allocation2 + $0x67]]
    %v2776 = vstv %s2775
    %v2777 = vsel %vm446, %v2776, 0.0
    %v2778 = vadd.f32 %v2715, %v2766
    %v2779 = vadd.f32 %v2716, %v2771
    %v2780 = vadd.f32 %v2717, %v2774
    %v2781 = vadd.f32 %v2718, %v2777
    %v2782 = vsub.f32 %v2530, %v2778
    %v2783 = vsub.f32 %v2531, %v2778
    %v2784 = vsub.f32 %v2532, %v2778
    %v2785 = vsub.f32 %v2533, %v2778
    %v2786 = vmul.f32 %v2782, %v2779
    %v2787 = vmul.f32 %v2783, %v2779
    %v2788 = vmul.f32 %v2784, %v2779
    %v2789 = vmul.f32 %v2785, %v2779
    %v2790 = vmul.f32 %v2786, %v2780
    %v2791 = vmul.f32 %v2787, %v2780
    %v2792 = vmul.f32 %v2788, %v2780
    %v2793 = vmul.f32 %v2789, %v2780
    %v2794 = vadd.f32 %v2790, %v2781
    %v2795 = vadd.f32 %v2791, %v2781
    %v2796 = vadd.f32 %v2792, %v2781
    %v2797 = vadd.f32 %v2793, %v2781
    %v2798 = vadd.f32 %v2030, %v2794
    %v2799 = vadd.f32 %v2031, %v2795
    %v2800 = vadd.f32 %v2032, %v2796
    %v2801 = vadd.f32 %v2033, %v2797
    %v2802 = vmax.f32 %v2798, 0.0
    %v2803 = vmax.f32 %v2799, 0.0
    %v2804 = vmax.f32 %v2800, 0.0
    %v2805 = vmax.f32 %v2801, 0.0
    %v2806 = vld [vmem:[%s1] sm:$0x3]
    %v2808 = vlaneseq
    %v2809 = vshrl.u32 %v2808, 7
    %v2810 = vsub.s32 0, %v2809
    %v2811 = vrot.slane %v2806, %v2810
    %v2812 = vlaneseq
    %v2813 = vshrl.u32 %v2812, 7
    %v2814 = vsub.s32 1, %v2813
    %v2815 = vrot.slane %v2806, %v2814
    %v2818 = vmul.f32 %v2802, %v2811
    %v2819 = vmul.f32 %v2803, %v2815
    %v2820 = vmul.f32 %v2804, %v2811
    %v2821 = vmul.f32 %v2805, %v2815
    %vm2822 = vcmask 1043456
    %v2823 = vsel %vm2822, %v2818, 0.0
    %v2824 = vsel %vm2822, %v2819, 0.0
    %v2825 = vadd.f32 %v2823, %v2824
    %2826 = vadd.xlane.f32.xlu0 %v2825
    %v2827 = vpop.xlane.xlu0 %2826
    %v2828 = vsel %vm2822, %v2820, 0.0
    %v2829 = vsel %vm2822, %v2821, 0.0
    %v2830 = vadd.f32 %v2828, %v2829
    %2831 = vadd.xlane.f32.xlu0 %v2830
    %v2832 = vpop.xlane.xlu0 %2831
    %v2835 = vlaneseq
    %v2836 = vshrl.u32 %v2835, 7
    %v2837 = vsub.s32 %v31, %v2836
    %v2838 = vrot.slane %v2827, %v2837
    %v2839 = vlaneseq
    %v2840 = vshrl.u32 %v2839, 7
    %v2841 = vsub.s32 %v31, %v2840
    %v2842 = vrot.slane %v2832, %v2841
    %v2843 = vsel %vm2593, %v2842, %v2838
    %vm2845 = vcmask 25600
    %2846 = vst.msk [vmem:[#allocation5] sm:$0x3] %vm2845, %v2843
    // Predicated region
    $region18: #{encoder_forward.1} parent=1 // pred_check
      _
    $region19: #{encoder_forward.1} parent=1 // pred_check_branch
      %2848 = sbr.rel (0) target = $region21
    $region20: #{encoder_forward.1} parent=1 // pred_region
      %s2850 = ssub.s32 32, 32
      %2851 = vsyncadd [#allocation3], %s2850
      %s2853 = sshll.u32 [#allocation5], 4
      %s2854 = int_to_ptr.vmem [resolvable:$true] %s2853
      %2856 = dma.vmem_to_hbm [thread:$0]  %s2854, 32, %s3, [#allocation3]
    $region21: #{encoder_forward.1} parent=1 // pred_fallthru
      _
    // Predicated region
    $region22: #{encoder_forward.1} parent=1 // pred_check
      _
    $region23: #{encoder_forward.1} parent=1 // pred_check_branch
      %2858 = sbr.rel (0) target = $region25
    $region24: #{encoder_forward.1} parent=1 // pred_region
      %2859 = dma.done [#allocation3], 32
    $region25: #{encoder_forward.1} parent=1 // pred_fallthru
      _
    %2860 = vsyncpa [#allocation3], 1
    %2861 = vsyncpa [#allocation4], 1

</llo_original>
